<compile_context>
chip_gen: v5e
topology: v5e:2x2
jax: 0.10.0
libtpu: 0.0.40
codegen_flags: <defaults>
</compile_context>

<pallas_src>
import jax
import jax.numpy as jnp
from jax.experimental import pallas as pl
from jax.experimental.pallas import tpu as pltpu

MXU_DTYPE = jnp.bfloat16   # MXU input dtype; accumulation and epilogue stay float32.
_LANE = 128


def _round_up(x, m):
    return (x + m - 1) // m * m


def _conv3x3_matmul(buf_ref, w_ref, b_ref, H, W):
    """relu(conv3x3(buf) + b) as a single im2col matmul.

    buf_ref : VMEM ref (H+2, W+2, C) MXU_DTYPE, zero halo + zero channel padding in place
    w_ref   : (9*C, Cout_p) MXU_DTYPE, tap-major lane-dense packing
    b_ref   : (1, Cout_p) float32
    returns : (H*W, Cout_p) float32
    """
    C = buf_ref.shape[-1]
    # Build the 3 kw-shifted (sublane-shifted) copies once; kh shifts are free
    # leading-axis slices of those copies.
    cols = [buf_ref[:, kw:kw + W, :] for kw in range(3)]                 # (H+2, W, C)
    taps = [cols[kw][kh:kh + H] for kh in range(3) for kw in range(3)]   # 9 x (H, W, C)
    patches = jnp.concatenate(taps, axis=-1).reshape(H * W, 9 * C)       # lane-dense K
    acc = jnp.dot(patches, w_ref[...], preferred_element_type=jnp.float32)
    return jnp.maximum(acc + b_ref[...], 0.0)


def _decoder_block_kernel(up_ref, x_ref, skip_ref, w1_ref, b1_ref,
                          w2_ref, b2_ref, o_ref, buf1, buf2):
    H, W = skip_ref.shape[1], skip_ref.shape[2]
    cin, cskip = x_ref.shape[-1], skip_ref.shape[-1]
    cout_p = buf2.shape[-1]

    # ---- stage 0: nearest-upsample(x, 2) + concat(skip) + 1-px zero pad, all in VMEM ----
    buf1[...] = jnp.zeros_like(buf1)                       # zero halo + zero channel pad
    x_up = jnp.dot(up_ref[...], x_ref[0].astype(MXU_DTYPE),
                   preferred_element_type=jnp.float32)     # (H*W, cin) nearest upsample
    buf1[1:H + 1, 1:W + 1, 0:cin] = x_up.astype(MXU_DTYPE).reshape(H, W, cin)
    buf1[1:H + 1, 1:W + 1, cin:cin + cskip] = skip_ref[0].astype(MXU_DTYPE)
    # attention1 (attention_type=None) is identity.

    # ---- conv1: relu(3x3 conv + bias) as one im2col MXU matmul ----
    out1 = _conv3x3_matmul(buf1, w1_ref, b1_ref, H, W)     # (H*W, cout_p) f32
    buf2[...] = jnp.zeros_like(buf2)
    buf2[1:H + 1, 1:W + 1, :] = out1.astype(MXU_DTYPE).reshape(H, W, cout_p)

    # ---- conv2: reads the conv1 activation straight from VMEM (no HBM round trip) ----
    out2 = _conv3x3_matmul(buf2, w2_ref, b2_ref, H, W)     # (H*W, cout_p) f32
    # attention2 is identity.
    o_ref[...] = out2.reshape(H, W, cout_p).astype(o_ref.dtype)[None]


def decoder_block_forward(x_nchw, skip_nchw, params):
    """DecoderBlock.forward.  x: (N, Cin, h, w), skip: (N, Cskip, 2h, 2w); NCHW in/out."""
    if skip_nchw is None:
        # TODO(synk): skip=None path (no concat / attention1) is not wired into the fused kernel.
        raise NotImplementedError("fused DecoderBlock kernel requires a skip tensor")

    N, cin, h_in, w_in = x_nchw.shape
    _, cskip, H, W = skip_nchw.shape
    assert (H, W) == (2 * h_in, 2 * w_in)
    w1, b1, w2, b2 = params["w1"], params["b1"], params["w2"], params["b2"]
    cout = w1.shape[-1]
    ctot = cin + cskip
    cp_in = _round_up(ctot, _LANE)     # conv1 input channels, lane-padded
    cp_out = _round_up(cout, _LANE)    # conv1/conv2 output channels, lane-padded

    # Layout plumbing on the small pre-upsample tensors (cheap): NCHW -> NHWC / flattened.
    x_flat = jnp.transpose(x_nchw, (0, 2, 3, 1)).reshape(N, h_in * w_in, cin)
    skip_nhwc = jnp.transpose(skip_nchw, (0, 2, 3, 1))

    # Nearest-upsample as a constant 0/1 matrix, applied on the MXU inside the kernel.
    r = jnp.arange(H * W)
    src = (r // W // 2) * w_in + (r % W) // 2
    up = (src[:, None] == jnp.arange(h_in * w_in)[None, :]).astype(MXU_DTYPE)

    # Lane-dense, tap-major packed weights: (3,3,Ci,Co) -> (9*Cp_in, Cp_out), zero padded.
    w1p = (jnp.zeros((3, 3, cp_in, cp_out), MXU_DTYPE)
           .at[:, :, :ctot, :cout].set(w1.astype(MXU_DTYPE))
           .reshape(9 * cp_in, cp_out))
    w2p = (jnp.zeros((3, 3, cp_out, cp_out), MXU_DTYPE)
           .at[:, :, :cout, :cout].set(w2.astype(MXU_DTYPE))
           .reshape(9 * cp_out, cp_out))
    b1p = jnp.zeros((1, cp_out), jnp.float32).at[0, :cout].set(b1.astype(jnp.float32))
    b2p = jnp.zeros((1, cp_out), jnp.float32).at[0, :cout].set(b2.astype(jnp.float32))

    out_padded = pl.pallas_call(
        _decoder_block_kernel,
        out_shape=jax.ShapeDtypeStruct((N, H, W, cp_out), jnp.float32),
        grid=(N,),
        in_specs=[
            pl.BlockSpec((H * W, h_in * w_in), lambda n: (0, 0)),    # upsample matrix (resident)
            pl.BlockSpec((1, h_in * w_in, cin), lambda n: (n, 0, 0)),  # x, flattened NHWC
            pl.BlockSpec((1, H, W, cskip), lambda n: (n, 0, 0, 0)),  # skip, NHWC
            pl.BlockSpec((9 * cp_in, cp_out), lambda n: (0, 0)),     # w1 (resident)
            pl.BlockSpec((1, cp_out), lambda n: (0, 0)),             # b1 (resident)
            pl.BlockSpec((9 * cp_out, cp_out), lambda n: (0, 0)),    # w2 (resident)
            pl.BlockSpec((1, cp_out), lambda n: (0, 0)),             # b2 (resident)
        ],
        out_specs=pl.BlockSpec((1, H, W, cp_out), lambda n: (n, 0, 0, 0)),
        scratch_shapes=[
            pltpu.VMEM((H + 2, W + 2, cp_in), MXU_DTYPE),    # padded concat(up(x), skip)
            pltpu.VMEM((H + 2, W + 2, cp_out), MXU_DTYPE),   # padded conv1 activation
        ],
        compiler_params=pltpu.CompilerParams(
            dimension_semantics=("parallel",),
            vmem_limit_bytes=32 * 1024 * 1024),
    )(up, x_flat, skip_nhwc, w1p, b1p, w2p, b2p)

    # Drop the lane padding, back to NCHW (PyTorch convention).
    return jnp.transpose(out_padded[..., :cout], (0, 3, 1, 2))


def _reference_forward(x_nchw, skip_nchw, params, mxu_dtype=jnp.float32):
    """Pure-JAX (lax conv) reference; mxu_dtype emulates the kernel's MXU input rounding."""
    xu = jnp.repeat(jnp.repeat(x_nchw, 2, axis=2), 2, axis=3)
    act = jnp.transpose(jnp.concatenate([xu, skip_nchw], axis=1), (0, 2, 3, 1))
    act = act.astype(mxu_dtype)
    for wk, bk in (("w1", "b1"), ("w2", "b2")):
        y = jax.lax.conv_general_dilated(
            act, params[wk].astype(mxu_dtype), window_strides=(1, 1), padding="SAME",
            dimension_numbers=("NHWC", "HWIO", "NHWC"),
            preferred_element_type=jnp.float32)
        y = jnp.maximum(y + params[bk].astype(jnp.float32), 0.0)
        act = y.astype(mxu_dtype)
    return jnp.transpose(y, (0, 3, 1, 2))


if __name__ == "__main__":
    # in_channels=4, skip_channels=4, out_channels=8, input spatial 8x8 (-> 16x16), batch=2.
    N, Cin, Cskip, Cout = 2, 4, 4, 8
    h = w = 8

    key = jax.random.PRNGKey(0)
    kx, ks, kw1, kb1, kw2, kb2 = jax.random.split(key, 6)

    x = jax.random.normal(kx, (N, Cin, h, w), dtype=jnp.float32)
    skip = jax.random.normal(ks, (N, Cskip, 2 * h, 2 * w), dtype=jnp.float32)
    params = {
        "w1": 0.1 * jax.random.normal(kw1, (3, 3, Cin + Cskip, Cout), jnp.float32),
        "b1": 0.1 * jax.random.normal(kb1, (Cout,), jnp.float32),
        "w2": 0.1 * jax.random.normal(kw2, (3, 3, Cout, Cout), jnp.float32),
        "b2": 0.1 * jax.random.normal(kb2, (Cout,), jnp.float32),
    }

    out = jax.block_until_ready(jax.jit(decoder_block_forward)(x, skip, params))
    assert out.shape == (N, Cout, 2 * h, 2 * w), out.shape

    # Tight check vs. a reference that applies the same bf16 MXU rounding.
    ref_bf16 = jax.block_until_ready(_reference_forward(x, skip, params, MXU_DTYPE))
    assert jnp.allclose(out, ref_bf16, atol=1e-2, rtol=1e-2), \
        float(jnp.max(jnp.abs(out - ref_bf16)))

    # Loose sanity check vs. the full-f32 reference (bf16 MXU inputs by design).
    ref_f32 = jax.block_until_ready(_reference_forward(x, skip, params, jnp.float32))
    assert jnp.allclose(out, ref_f32, atol=5e-2, rtol=5e-2), \
        float(jnp.max(jnp.abs(out - ref_f32)))

    print("KERNEL_OK")
</pallas_src>

<mosaic_0001>
module attributes {stable_mosaic.version = 11 : i64} {
  func.func @_decoder_block_kernel(%arg0: i32, %arg1: memref<256x64xbf16, #tpu.memory_space<vmem>>, %arg2: memref<1x64x4xf32, #tpu.memory_space<vmem>>, %arg3: memref<1x16x16x4xf32, #tpu.memory_space<vmem>>, %arg4: memref<1152x128xbf16, #tpu.memory_space<vmem>>, %arg5: memref<1x128xf32, #tpu.memory_space<vmem>>, %arg6: memref<1152x128xbf16, #tpu.memory_space<vmem>>, %arg7: memref<1x128xf32, #tpu.memory_space<vmem>>, %arg8: memref<1x16x16x128xf32, #tpu.memory_space<vmem>>, %arg9: memref<18x18x128xbf16, #tpu.memory_space<vmem>>, %arg10: memref<18x18x128xbf16, #tpu.memory_space<vmem>>) attributes {dimension_semantics = [#tpu.dimension_semantics<parallel>], iteration_bounds = array<i64: 2>, scalar_prefetch = 0 : i64, scratch_operands = 2 : i64, tpu.core_type = #tpu.core_type<tc>, window_params = [{pipeline_mode = #tpu.pipeline_mode<synchronous>, transform_indices = @transform_0, window_bounds = array<i64: 256, 64>}, {transform_indices = @transform_1, window_bounds = array<i64: 1, 64, 4>}, {transform_indices = @transform_2, window_bounds = array<i64: 1, 16, 16, 4>}, {pipeline_mode = #tpu.pipeline_mode<synchronous>, transform_indices = @transform_3, window_bounds = array<i64: 1152, 128>}, {pipeline_mode = #tpu.pipeline_mode<synchronous>, transform_indices = @transform_4, window_bounds = array<i64: 1, 128>}, {pipeline_mode = #tpu.pipeline_mode<synchronous>, transform_indices = @transform_5, window_bounds = array<i64: 1152, 128>}, {pipeline_mode = #tpu.pipeline_mode<synchronous>, transform_indices = @transform_6, window_bounds = array<i64: 1, 128>}, {transform_indices = @transform_7, window_bounds = array<i64: 1, 16, 16, 128>}]} {
    %cst = arith.constant 0.000000e+00 : bf16
    %0 = vector.broadcast %cst : bf16 to vector<18x18x128xbf16>
    %c0 = arith.constant 0 : index
    %c0_0 = arith.constant 0 : index
    %c0_1 = arith.constant 0 : index
    %1 = vector.load %arg9[%c0, %c0_0, %c0_1] : memref<18x18x128xbf16, #tpu.memory_space<vmem>>, vector<18x18x128xbf16>
    tpu.vector_store %arg9[%c0, %c0_0, %c0_1], %0 {strides = array<i32>} : memref<18x18x128xbf16, #tpu.memory_space<vmem>>, vector<18x18x128xbf16>,
    %c0_2 = arith.constant 0 : index
    %c0_3 = arith.constant 0 : index
    %2 = vector.load %arg1[%c0_2, %c0_3] : memref<256x64xbf16, #tpu.memory_space<vmem>>, vector<256x64xbf16>
    %c0_4 = arith.constant 0 : index
    %c0_5 = arith.constant 0 : index
    %c0_6 = arith.constant 0 : index
    %3 = vector.load %arg2[%c0_4, %c0_5, %c0_6] : memref<1x64x4xf32, #tpu.memory_space<vmem>>, vector<1x64x4xf32>
    %4 = vector.shape_cast %3 : vector<1x64x4xf32> to vector<64x4xf32>
    %5 = arith.truncf %4 : vector<64x4xf32> to vector<64x4xbf16>
    %cst_7 = arith.constant dense<0.000000e+00> : vector<256x4xf32>
    %6 = tpu.matmul %2, %5, %cst_7 {dimension_numbers = #tpu.dot_dimension_numbers<[1], [0], [0], [1], [0, 0, 1, 1], [], []>} : vector<256x64xbf16>, vector<64x4xbf16>, vector<256x4xf32> -> vector<256x4xf32>
    %7 = arith.truncf %6 : vector<256x4xf32> to vector<256x4xbf16>
    %8 = vector.shape_cast %7 : vector<256x4xbf16> to vector<16x16x4xbf16>
    %c1 = arith.constant 1 : index
    %c1_8 = arith.constant 1 : index
    %c0_9 = arith.constant 0 : index
    %9 = vector.load %arg9[%c1, %c1_8, %c0_9] : memref<18x18x128xbf16, #tpu.memory_space<vmem>>, vector<16x16x4xbf16>
    tpu.vector_store %arg9[%c1, %c1_8, %c0_9], %8 {strides = array<i32>} : memref<18x18x128xbf16, #tpu.memory_space<vmem>>, vector<16x16x4xbf16>,
    %c0_10 = arith.constant 0 : index
    %c0_11 = arith.constant 0 : index
    %c0_12 = arith.constant 0 : index
    %c0_13 = arith.constant 0 : index
    %10 = vector.load %arg3[%c0_10, %c0_11, %c0_12, %c0_13] : memref<1x16x16x4xf32, #tpu.memory_space<vmem>>, vector<1x16x16x4xf32>
    %11 = vector.shape_cast %10 : vector<1x16x16x4xf32> to vector<16x16x4xf32>
    %12 = arith.truncf %11 : vector<16x16x4xf32> to vector<16x16x4xbf16>
    %c1_14 = arith.constant 1 : index
    %c1_15 = arith.constant 1 : index
    %c4 = arith.constant 4 : index
    %13 = vector.load %arg9[%c1_14, %c1_15, %c4] : memref<18x18x128xbf16, #tpu.memory_space<vmem>>, vector<16x16x4xbf16>
    tpu.vector_store %arg9[%c1_14, %c1_15, %c4], %12 {strides = array<i32>} : memref<18x18x128xbf16, #tpu.memory_space<vmem>>, vector<16x16x4xbf16>,
    %c0_16 = arith.constant 0 : index
    %c0_17 = arith.constant 0 : index
    %c0_18 = arith.constant 0 : index
    %14 = vector.load %arg9[%c0_16, %c0_17, %c0_18] : memref<18x18x128xbf16, #tpu.memory_space<vmem>>, vector<18x16x128xbf16>
    %c0_19 = arith.constant 0 : index
    %c1_20 = arith.constant 1 : index
    %c0_21 = arith.constant 0 : index
    %15 = vector.load %arg9[%c0_19, %c1_20, %c0_21] : memref<18x18x128xbf16, #tpu.memory_space<vmem>>, vector<18x16x128xbf16>
    %c0_22 = arith.constant 0 : index
    %c2 = arith.constant 2 : index
    %c0_23 = arith.constant 0 : index
    %16 = vector.load %arg9[%c0_22, %c2, %c0_23] : memref<18x18x128xbf16, #tpu.memory_space<vmem>>, vector<18x16x128xbf16>
    %17 = vector.extract_strided_slice %14 {offsets = [0, 0, 0], sizes = [16, 16, 128], strides = [1, 1, 1]} : vector<18x16x128xbf16> to vector<16x16x128xbf16>
    %18 = vector.extract_strided_slice %15 {offsets = [0, 0, 0], sizes = [16, 16, 128], strides = [1, 1, 1]} : vector<18x16x128xbf16> to vector<16x16x128xbf16>
    %19 = vector.extract_strided_slice %16 {offsets = [0, 0, 0], sizes = [16, 16, 128], strides = [1, 1, 1]} : vector<18x16x128xbf16> to vector<16x16x128xbf16>
    %20 = vector.extract_strided_slice %14 {offsets = [1, 0, 0], sizes = [16, 16, 128], strides = [1, 1, 1]} : vector<18x16x128xbf16> to vector<16x16x128xbf16>
    %21 = vector.extract_strided_slice %15 {offsets = [1, 0, 0], sizes = [16, 16, 128], strides = [1, 1, 1]} : vector<18x16x128xbf16> to vector<16x16x128xbf16>
    %22 = vector.extract_strided_slice %16 {offsets = [1, 0, 0], sizes = [16, 16, 128], strides = [1, 1, 1]} : vector<18x16x128xbf16> to vector<16x16x128xbf16>
    %23 = vector.extract_strided_slice %14 {offsets = [2, 0, 0], sizes = [16, 16, 128], strides = [1, 1, 1]} : vector<18x16x128xbf16> to vector<16x16x128xbf16>
    %24 = vector.extract_strided_slice %15 {offsets = [2, 0, 0], sizes = [16, 16, 128], strides = [1, 1, 1]} : vector<18x16x128xbf16> to vector<16x16x128xbf16>
    %25 = vector.extract_strided_slice %16 {offsets = [2, 0, 0], sizes = [16, 16, 128], strides = [1, 1, 1]} : vector<18x16x128xbf16> to vector<16x16x128xbf16>
    %26 = tpu.concatenate %17, %18, %19, %20, %21, %22, %23, %24, %25 in 2 : vector<16x16x128xbf16>, vector<16x16x128xbf16>, vector<16x16x128xbf16>, vector<16x16x128xbf16>, vector<16x16x128xbf16>, vector<16x16x128xbf16>, vector<16x16x128xbf16>, vector<16x16x128xbf16>, vector<16x16x128xbf16> -> vector<16x16x1152xbf16>
    %27 = vector.shape_cast %26 : vector<16x16x1152xbf16> to vector<256x1152xbf16>
    %c0_24 = arith.constant 0 : index
    %c0_25 = arith.constant 0 : index
    %28 = vector.load %arg4[%c0_24, %c0_25] : memref<1152x128xbf16, #tpu.memory_space<vmem>>, vector<1152x128xbf16>
    %cst_26 = arith.constant dense<0.000000e+00> : vector<256x128xf32>
    %29 = tpu.matmul %27, %28, %cst_26 {dimension_numbers = #tpu.dot_dimension_numbers<[1], [0], [0], [1], [0, 0, 1, 1], [], []>} : vector<256x1152xbf16>, vector<1152x128xbf16>, vector<256x128xf32> -> vector<256x128xf32>
    %c0_27 = arith.constant 0 : index
    %c0_28 = arith.constant 0 : index
    %30 = vector.load %arg5[%c0_27, %c0_28] : memref<1x128xf32, #tpu.memory_space<vmem>>, vector<1x128xf32>
    %31 = vector.broadcast %30 : vector<1x128xf32> to vector<256x128xf32>
    %32 = arith.addf %29, %31 : vector<256x128xf32>
    %cst_29 = arith.constant 0.000000e+00 : f32
    %33 = vector.broadcast %cst_29 : f32 to vector<256x128xf32>
    %34 = arith.maximumf %32, %33 : vector<256x128xf32>
    %cst_30 = arith.constant 0.000000e+00 : bf16
    %35 = vector.broadcast %cst_30 : bf16 to vector<18x18x128xbf16>
    %c0_31 = arith.constant 0 : index
    %c0_32 = arith.constant 0 : index
    %c0_33 = arith.constant 0 : index
    %36 = vector.load %arg10[%c0_31, %c0_32, %c0_33] : memref<18x18x128xbf16, #tpu.memory_space<vmem>>, vector<18x18x128xbf16>
    tpu.vector_store %arg10[%c0_31, %c0_32, %c0_33], %35 {strides = array<i32>} : memref<18x18x128xbf16, #tpu.memory_space<vmem>>, vector<18x18x128xbf16>,
    %37 = arith.truncf %34 : vector<256x128xf32> to vector<256x128xbf16>
    %38 = vector.shape_cast %37 : vector<256x128xbf16> to vector<16x16x128xbf16>
    %c1_34 = arith.constant 1 : index
    %c1_35 = arith.constant 1 : index
    %c0_36 = arith.constant 0 : index
    %39 = vector.load %arg10[%c1_34, %c1_35, %c0_36] : memref<18x18x128xbf16, #tpu.memory_space<vmem>>, vector<16x16x128xbf16>
    tpu.vector_store %arg10[%c1_34, %c1_35, %c0_36], %38 {strides = array<i32>} : memref<18x18x128xbf16, #tpu.memory_space<vmem>>, vector<16x16x128xbf16>,
    %c0_37 = arith.constant 0 : index
    %c0_38 = arith.constant 0 : index
    %c0_39 = arith.constant 0 : index
    %40 = vector.load %arg10[%c0_37, %c0_38, %c0_39] : memref<18x18x128xbf16, #tpu.memory_space<vmem>>, vector<18x16x128xbf16>
    %c0_40 = arith.constant 0 : index
    %c1_41 = arith.constant 1 : index
    %c0_42 = arith.constant 0 : index
    %41 = vector.load %arg10[%c0_40, %c1_41, %c0_42] : memref<18x18x128xbf16, #tpu.memory_space<vmem>>, vector<18x16x128xbf16>
    %c0_43 = arith.constant 0 : index
    %c2_44 = arith.constant 2 : index
    %c0_45 = arith.constant 0 : index
    %42 = vector.load %arg10[%c0_43, %c2_44, %c0_45] : memref<18x18x128xbf16, #tpu.memory_space<vmem>>, vector<18x16x128xbf16>
    %43 = vector.extract_strided_slice %40 {offsets = [0, 0, 0], sizes = [16, 16, 128], strides = [1, 1, 1]} : vector<18x16x128xbf16> to vector<16x16x128xbf16>
    %44 = vector.extract_strided_slice %41 {offsets = [0, 0, 0], sizes = [16, 16, 128], strides = [1, 1, 1]} : vector<18x16x128xbf16> to vector<16x16x128xbf16>
    %45 = vector.extract_strided_slice %42 {offsets = [0, 0, 0], sizes = [16, 16, 128], strides = [1, 1, 1]} : vector<18x16x128xbf16> to vector<16x16x128xbf16>
    %46 = vector.extract_strided_slice %40 {offsets = [1, 0, 0], sizes = [16, 16, 128], strides = [1, 1, 1]} : vector<18x16x128xbf16> to vector<16x16x128xbf16>
    %47 = vector.extract_strided_slice %41 {offsets = [1, 0, 0], sizes = [16, 16, 128], strides = [1, 1, 1]} : vector<18x16x128xbf16> to vector<16x16x128xbf16>
    %48 = vector.extract_strided_slice %42 {offsets = [1, 0, 0], sizes = [16, 16, 128], strides = [1, 1, 1]} : vector<18x16x128xbf16> to vector<16x16x128xbf16>
    %49 = vector.extract_strided_slice %40 {offsets = [2, 0, 0], sizes = [16, 16, 128], strides = [1, 1, 1]} : vector<18x16x128xbf16> to vector<16x16x128xbf16>
    %50 = vector.extract_strided_slice %41 {offsets = [2, 0, 0], sizes = [16, 16, 128], strides = [1, 1, 1]} : vector<18x16x128xbf16> to vector<16x16x128xbf16>
    %51 = vector.extract_strided_slice %42 {offsets = [2, 0, 0], sizes = [16, 16, 128], strides = [1, 1, 1]} : vector<18x16x128xbf16> to vector<16x16x128xbf16>
    %52 = tpu.concatenate %43, %44, %45, %46, %47, %48, %49, %50, %51 in 2 : vector<16x16x128xbf16>, vector<16x16x128xbf16>, vector<16x16x128xbf16>, vector<16x16x128xbf16>, vector<16x16x128xbf16>, vector<16x16x128xbf16>, vector<16x16x128xbf16>, vector<16x16x128xbf16>, vector<16x16x128xbf16> -> vector<16x16x1152xbf16>
    %53 = vector.shape_cast %52 : vector<16x16x1152xbf16> to vector<256x1152xbf16>
    %c0_46 = arith.constant 0 : index
    %c0_47 = arith.constant 0 : index
    %54 = vector.load %arg6[%c0_46, %c0_47] : memref<1152x128xbf16, #tpu.memory_space<vmem>>, vector<1152x128xbf16>
    %cst_48 = arith.constant dense<0.000000e+00> : vector<256x128xf32>
    %55 = tpu.matmul %53, %54, %cst_48 {dimension_numbers = #tpu.dot_dimension_numbers<[1], [0], [0], [1], [0, 0, 1, 1], [], []>} : vector<256x1152xbf16>, vector<1152x128xbf16>, vector<256x128xf32> -> vector<256x128xf32>
    %c0_49 = arith.constant 0 : index
    %c0_50 = arith.constant 0 : index
    %56 = vector.load %arg7[%c0_49, %c0_50] : memref<1x128xf32, #tpu.memory_space<vmem>>, vector<1x128xf32>
    %57 = vector.broadcast %56 : vector<1x128xf32> to vector<256x128xf32>
    %58 = arith.addf %55, %57 : vector<256x128xf32>
    %cst_51 = arith.constant 0.000000e+00 : f32
    %59 = vector.broadcast %cst_51 : f32 to vector<256x128xf32>
    %60 = arith.maximumf %58, %59 : vector<256x128xf32>
    %61 = vector.shape_cast %60 : vector<256x128xf32> to vector<16x16x128xf32>
    %62 = vector.shape_cast %61 : vector<16x16x128xf32> to vector<1x16x16x128xf32>
    %c0_52 = arith.constant 0 : index
    %c0_53 = arith.constant 0 : index
    %c0_54 = arith.constant 0 : index
    %c0_55 = arith.constant 0 : index
    %63 = vector.load %arg8[%c0_52, %c0_53, %c0_54, %c0_55] : memref<1x16x16x128xf32, #tpu.memory_space<vmem>>, vector<1x16x16x128xf32>
    tpu.vector_store %arg8[%c0_52, %c0_53, %c0_54, %c0_55], %62 {strides = array<i32>} : memref<1x16x16x128xf32, #tpu.memory_space<vmem>>, vector<1x16x16x128xf32>,
    return
  }
  func.func @transform_0(%arg0: i32) -> (i32, i32) {
    %c0_i32 = arith.constant 0 : i32
    %c0_i32_0 = arith.constant 0 : i32
    %c0_i32_1 = arith.constant 0 : i32
    return %c0_i32, %c0_i32_0 : i32, i32
  }
  func.func @transform_1(%arg0: i32) -> (i32, i32, i32) {
    %c0_i32 = arith.constant 0 : i32
    %c0_i32_0 = arith.constant 0 : i32
    %c0_i32_1 = arith.constant 0 : i32
    return %arg0, %c0_i32, %c0_i32_0 : i32, i32, i32
  }
  func.func @transform_2(%arg0: i32) -> (i32, i32, i32, i32) {
    %c0_i32 = arith.constant 0 : i32
    %c0_i32_0 = arith.constant 0 : i32
    %c0_i32_1 = arith.constant 0 : i32
    %c0_i32_2 = arith.constant 0 : i32
    return %arg0, %c0_i32, %c0_i32_0, %c0_i32_1 : i32, i32, i32, i32
  }
  func.func @transform_3(%arg0: i32) -> (i32, i32) {
    %c0_i32 = arith.constant 0 : i32
    %c0_i32_0 = arith.constant 0 : i32
    %c0_i32_1 = arith.constant 0 : i32
    return %c0_i32, %c0_i32_0 : i32, i32
  }
  func.func @transform_4(%arg0: i32) -> (i32, i32) {
    %c0_i32 = arith.constant 0 : i32
    %c0_i32_0 = arith.constant 0 : i32
    %c0_i32_1 = arith.constant 0 : i32
    return %c0_i32, %c0_i32_0 : i32, i32
  }
  func.func @transform_5(%arg0: i32) -> (i32, i32) {
    %c0_i32 = arith.constant 0 : i32
    %c0_i32_0 = arith.constant 0 : i32
    %c0_i32_1 = arith.constant 0 : i32
    return %c0_i32, %c0_i32_0 : i32, i32
  }
  func.func @transform_6(%arg0: i32) -> (i32, i32) {
    %c0_i32 = arith.constant 0 : i32
    %c0_i32_0 = arith.constant 0 : i32
    %c0_i32_1 = arith.constant 0 : i32
    return %c0_i32, %c0_i32_0 : i32, i32
  }
  func.func @transform_7(%arg0: i32) -> (i32, i32, i32, i32) {
    %c0_i32 = arith.constant 0 : i32
    %c0_i32_0 = arith.constant 0 : i32
    %c0_i32_1 = arith.constant 0 : i32
    %c0_i32_2 = arith.constant 0 : i32
    return %arg0, %c0_i32, %c0_i32_0, %c0_i32_1 : i32, i32, i32, i32
  }
}

</mosaic_0001>

<llo_original>
// kernel: decoder_block_forward.1
$region0: #{decoder_block_forward.1}
  #allocation0 [shape = 'u32[]', space=smem, size = 0x4, offset = 0x4, fixed_abs, tag = 'smem constant byte address 0x4 - core index']
  #allocation1 [shape = 'u32[72,128]{1,0:T(1,128)}', space=vmem, size = 0x9000, scoped, tag = 'internal scratch']
  #allocation2 [shape = 'bf16[18,18,128]{2,1,0:T(8,128)(2,1)}', space=vmem, size = 0x1b000, scoped, tag = 'scratch operand']
  #allocation3 [shape = 'bf16[18,18,128]{2,1,0:T(8,128)(2,1)}', space=vmem, size = 0x1b000, scoped, tag = 'scratch operand']
  %s0 = inlined_call_operand.vmem [shape: bf16[256,64], index: 0, kind: input, shape index: {}]
  %s1 = inlined_call_operand.vmem [shape: f32[2,64,4], index: 1, kind: input, shape index: {}]
  %s2 = inlined_call_operand.vmem [shape: f32[2,16,16,4], index: 2, kind: input, shape index: {}]
  %s3 = inlined_call_operand.vmem [shape: bf16[1152,128], index: 3, kind: input, shape index: {}]
  %s4 = inlined_call_operand.vmem [shape: f32[1,128], index: 4, kind: input, shape index: {}]
  %s5 = inlined_call_operand.vmem [shape: bf16[1152,128], index: 5, kind: input, shape index: {}]
  %s6 = inlined_call_operand.vmem [shape: f32[1,128], index: 6, kind: input, shape index: {}]
  %s7 = inlined_call_operand.vmem [shape: f32[2,16,16,128], index: 7, kind: output, shape index: {}]
  %s8 = sld [smem:[#allocation0]]
  $region61: #{decoder_block_forward.1} parent=0
    _
  %s10 = ssub.s32 1, %s8
  %s11 = scalar_select 0, %s10, %s8
  loop: start=0, step=1, limit=4
  $region2: #{decoder_block_forward.1} parent=0 // loop_pre_header
    _
  $region3: #{decoder_block_forward.1} parent=0 // loop_header
    %s13 = sphi 0, %s17
    %p14 = scmp.ge.s32.totalorder %s13, 4
    %s21 = sphi 0, %s21
    %s23 = sphi 0, %s21
    %s24 = sphi 0, %s23
    %s38 = sphi 0, %s24
    %s44 = sphi 0, %s46
    %s47 = sphi 0, %s44
    %s48 = sphi 0, %s47
    %s64 = sphi 0, %s48
    %s70 = sphi 0, %s72
    %s73 = sphi 0, %s70
    %s74 = sphi 0, %s73
    %s90 = sphi 0, %s74
    %s94 = sphi 0, %s94
    %s96 = sphi 0, %s94
    %s97 = sphi 0, %s96
    %s111 = sphi 0, %s97
    %s115 = sphi 0, %s115
    %s117 = sphi 0, %s115
    %s118 = sphi 0, %s117
    %s132 = sphi 0, %s118
    %s136 = sphi 0, %s136
    %s138 = sphi 0, %s136
    %s139 = sphi 0, %s138
    %s153 = sphi 0, %s139
    %s157 = sphi 0, %s157
    %s159 = sphi 0, %s157
    %s160 = sphi 0, %s159
    %s174 = sphi 0, %s160
    %s180 = sphi 0, %s182
    %s183 = sphi 0, %s180
    %s184 = sphi 0, %s183
    %s200 = sphi 0, %s184
  $region4: #{decoder_block_forward.1} parent=0 // loop_header_branch
    %16 = sbr.rel (%p14) target = $region8
  $region5: #{decoder_block_forward.1} parent=0 // loop_body
    %s18 = ssub.s32 %s13, 1
    %s19 = ssub.s32 %s13, 2
    %s20 = sadd.s32 %s13, 1
    %s22 = sadd.s32 %s21, 1
    %p25 = scmp.eq.s32.totalorder %s13, 1
    %p26 = scmp.ne.s32.totalorder %s21, %s23
    %p27 = scmp.eq.s32.totalorder %s13, 0
    %p28 = por %p26, %p27
    %p29 = scmp.ne.s32.totalorder %s21, %s23
    %p30 = scmp.eq.s32.totalorder %s18, 1
    %p31 = por %p29, %p30
    %p32 = scmp.ne.s32.totalorder %s23, %s24
    %p33 = scmp.eq.s32.totalorder %s18, 0
    %p34 = por %p32, %p33
    %p35 = scmp.ne.s32.totalorder %s23, %s24
    %p36 = scmp.eq.s32.totalorder %s19, 1
    %p37 = por %p35, %p36
    %p39 = scmp.ne.s32.totalorder %s24, %s38
    %p40 = scmp.eq.s32.totalorder %s19, 0
    %p41 = por %p39, %p40
    %s42 = ssub.s32 %s13, %s20
    %p43 = scmp.eq.s32.totalorder %s42, 0
    %s45 = sadd.s32 %s44, 1
    %s46 = scalar_select %p43, %s44, %s45
    %p49 = pneg %p43
    %p50 = scmp.eq.s32.totalorder %s13, 1
    %p51 = por %p49, %p50
    %p52 = scmp.ne.s32.totalorder %s44, %s47
    %p53 = scmp.eq.s32.totalorder %s13, 0
    %p54 = por %p52, %p53
    %p55 = scmp.ne.s32.totalorder %s44, %s47
    %p56 = scmp.eq.s32.totalorder %s18, 1
    %p57 = por %p55, %p56
    %p58 = scmp.ne.s32.totalorder %s47, %s48
    %p59 = scmp.eq.s32.totalorder %s18, 0
    %p60 = por %p58, %p59
    %p61 = scmp.ne.s32.totalorder %s47, %s48
    %p62 = scmp.eq.s32.totalorder %s19, 1
    %p63 = por %p61, %p62
    %p65 = scmp.ne.s32.totalorder %s48, %s64
    %p66 = scmp.eq.s32.totalorder %s19, 0
    %p67 = por %p65, %p66
    %s68 = ssub.s32 %s13, %s20
    %p69 = scmp.eq.s32.totalorder %s68, 0
    %s71 = sadd.s32 %s70, 1
    %s72 = scalar_select %p69, %s70, %s71
    %p75 = pneg %p69
    %p76 = scmp.eq.s32.totalorder %s13, 1
    %p77 = por %p75, %p76
    %p78 = scmp.ne.s32.totalorder %s70, %s73
    %p79 = scmp.eq.s32.totalorder %s13, 0
    %p80 = por %p78, %p79
    %p81 = scmp.ne.s32.totalorder %s70, %s73
    %p82 = scmp.eq.s32.totalorder %s18, 1
    %p83 = por %p81, %p82
    %p84 = scmp.ne.s32.totalorder %s73, %s74
    %p85 = scmp.eq.s32.totalorder %s18, 0
    %p86 = por %p84, %p85
    %p87 = scmp.ne.s32.totalorder %s73, %s74
    %p88 = scmp.eq.s32.totalorder %s19, 1
    %p89 = por %p87, %p88
    %p91 = scmp.ne.s32.totalorder %s74, %s90
    %p92 = scmp.eq.s32.totalorder %s19, 0
    %p93 = por %p91, %p92
    %s95 = sadd.s32 %s94, 1
    %p98 = scmp.eq.s32.totalorder %s13, 1
    %p99 = scmp.ne.s32.totalorder %s94, %s96
    %p100 = scmp.eq.s32.totalorder %s13, 0
    %p101 = por %p99, %p100
    %p102 = scmp.ne.s32.totalorder %s94, %s96
    %p103 = scmp.eq.s32.totalorder %s18, 1
    %p104 = por %p102, %p103
    %p105 = scmp.ne.s32.totalorder %s96, %s97
    %p106 = scmp.eq.s32.totalorder %s18, 0
    %p107 = por %p105, %p106
    %p108 = scmp.ne.s32.totalorder %s96, %s97
    %p109 = scmp.eq.s32.totalorder %s19, 1
    %p110 = por %p108, %p109
    %p112 = scmp.ne.s32.totalorder %s97, %s111
    %p113 = scmp.eq.s32.totalorder %s19, 0
    %p114 = por %p112, %p113
    %s116 = sadd.s32 %s115, 1
    %p119 = scmp.eq.s32.totalorder %s13, 1
    %p120 = scmp.ne.s32.totalorder %s115, %s117
    %p121 = scmp.eq.s32.totalorder %s13, 0
    %p122 = por %p120, %p121
    %p123 = scmp.ne.s32.totalorder %s115, %s117
    %p124 = scmp.eq.s32.totalorder %s18, 1
    %p125 = por %p123, %p124
    %p126 = scmp.ne.s32.totalorder %s117, %s118
    %p127 = scmp.eq.s32.totalorder %s18, 0
    %p128 = por %p126, %p127
    %p129 = scmp.ne.s32.totalorder %s117, %s118
    %p130 = scmp.eq.s32.totalorder %s19, 1
    %p131 = por %p129, %p130
    %p133 = scmp.ne.s32.totalorder %s118, %s132
    %p134 = scmp.eq.s32.totalorder %s19, 0
    %p135 = por %p133, %p134
    %s137 = sadd.s32 %s136, 1
    %p140 = scmp.eq.s32.totalorder %s13, 1
    %p141 = scmp.ne.s32.totalorder %s136, %s138
    %p142 = scmp.eq.s32.totalorder %s13, 0
    %p143 = por %p141, %p142
    %p144 = scmp.ne.s32.totalorder %s136, %s138
    %p145 = scmp.eq.s32.totalorder %s18, 1
    %p146 = por %p144, %p145
    %p147 = scmp.ne.s32.totalorder %s138, %s139
    %p148 = scmp.eq.s32.totalorder %s18, 0
    %p149 = por %p147, %p148
    %p150 = scmp.ne.s32.totalorder %s138, %s139
    %p151 = scmp.eq.s32.totalorder %s19, 1
    %p152 = por %p150, %p151
    %p154 = scmp.ne.s32.totalorder %s139, %s153
    %p155 = scmp.eq.s32.totalorder %s19, 0
    %p156 = por %p154, %p155
    %s158 = sadd.s32 %s157, 1
    %p161 = scmp.eq.s32.totalorder %s13, 1
    %p162 = scmp.ne.s32.totalorder %s157, %s159
    %p163 = scmp.eq.s32.totalorder %s13, 0
    %p164 = por %p162, %p163
    %p165 = scmp.ne.s32.totalorder %s157, %s159
    %p166 = scmp.eq.s32.totalorder %s18, 1
    %p167 = por %p165, %p166
    %p168 = scmp.ne.s32.totalorder %s159, %s160
    %p169 = scmp.eq.s32.totalorder %s18, 0
    %p170 = por %p168, %p169
    %p171 = scmp.ne.s32.totalorder %s159, %s160
    %p172 = scmp.eq.s32.totalorder %s19, 1
    %p173 = por %p171, %p172
    %p175 = scmp.ne.s32.totalorder %s160, %s174
    %p176 = scmp.eq.s32.totalorder %s19, 0
    %p177 = por %p175, %p176
    %s178 = ssub.s32 %s13, %s20
    %p179 = scmp.eq.s32.totalorder %s178, 0
    %s181 = sadd.s32 %s180, 1
    %s182 = scalar_select %p179, %s180, %s181
    %p185 = pneg %p179
    %p186 = scmp.eq.s32.totalorder %s13, 1
    %p187 = por %p185, %p186
    %p188 = scmp.ne.s32.totalorder %s180, %s183
    %p189 = scmp.eq.s32.totalorder %s13, 0
    %p190 = por %p188, %p189
    %p191 = scmp.ne.s32.totalorder %s180, %s183
    %p192 = scmp.eq.s32.totalorder %s18, 1
    %p193 = por %p191, %p192
    %p194 = scmp.ne.s32.totalorder %s183, %s184
    %p195 = scmp.eq.s32.totalorder %s18, 0
    %p196 = por %p194, %p195
    %p197 = scmp.ne.s32.totalorder %s183, %s184
    %p198 = scmp.eq.s32.totalorder %s19, 1
    %p199 = por %p197, %p198
    %p201 = scmp.ne.s32.totalorder %s184, %s200
    %p202 = scmp.eq.s32.totalorder %s19, 0
    %p203 = por %p201, %p202
    %p204 = scmp.le.s32.totalorder 1, %s13
    %p205 = scmp.lt.s32.totalorder %s13, 3
    %p206 = pnand %p204, %p205
    %p207 = pneg %p206
    // Predicated region
    $region9: #{decoder_block_forward.1} parent=5 // pred_check
      _
    $region10: #{decoder_block_forward.1} parent=5 // pred_check_branch
      %209 = sbr.rel (%p206) target = $region12
    $region11: #{decoder_block_forward.1} parent=5 // pred_region
      %s210 = ssub.s32 %s13, 1
      // Predicated region
      $region13: #{decoder_block_forward.1} parent=11 // pred_check
        %p211 = pneg %p34
      $region14: #{decoder_block_forward.1} parent=11 // pred_check_branch
        %213 = sbr.rel (%p211) target = $region16
      $region15: #{decoder_block_forward.1} parent=11 // pred_region
        _
      $region16: #{decoder_block_forward.1} parent=11 // pred_fallthru
        _
      // Predicated region
      $region17: #{decoder_block_forward.1} parent=11 // pred_check
        %p214 = pneg %p107
      $region18: #{decoder_block_forward.1} parent=11 // pred_check_branch
        %216 = sbr.rel (%p214) target = $region20
      $region19: #{decoder_block_forward.1} parent=11 // pred_region
        _
      $region20: #{decoder_block_forward.1} parent=11 // pred_fallthru
        _
      // Predicated region
      $region21: #{decoder_block_forward.1} parent=11 // pred_check
        %p217 = pneg %p128
      $region22: #{decoder_block_forward.1} parent=11 // pred_check_branch
        %219 = sbr.rel (%p217) target = $region24
      $region23: #{decoder_block_forward.1} parent=11 // pred_region
        _
      $region24: #{decoder_block_forward.1} parent=11 // pred_fallthru
        _
      // Predicated region
      $region25: #{decoder_block_forward.1} parent=11 // pred_check
        %p220 = pneg %p149
      $region26: #{decoder_block_forward.1} parent=11 // pred_check_branch
        %222 = sbr.rel (%p220) target = $region28
      $region27: #{decoder_block_forward.1} parent=11 // pred_region
        _
      $region28: #{decoder_block_forward.1} parent=11 // pred_fallthru
        _
      // Predicated region
      $region29: #{decoder_block_forward.1} parent=11 // pred_check
        %p223 = pneg %p170
      $region30: #{decoder_block_forward.1} parent=11 // pred_check_branch
        %225 = sbr.rel (%p223) target = $region32
      $region31: #{decoder_block_forward.1} parent=11 // pred_region
        _
      $region32: #{decoder_block_forward.1} parent=11 // pred_fallthru
        _
    $region12: #{decoder_block_forward.1} parent=5 // pred_fallthru
      _
    %p226 = scmp.lt.s32.totalorder %s13, 2
    // Predicated region
    $region33: #{decoder_block_forward.1} parent=5 // pred_check
      %p227 = pneg %p226
    $region34: #{decoder_block_forward.1} parent=5 // pred_check_branch
      %229 = sbr.rel (%p227) target = $region36
    $region35: #{decoder_block_forward.1} parent=5 // pred_region
      // Predicated region
      $region37: #{decoder_block_forward.1} parent=35 // pred_check
        %p230 = pneg %p54
      $region38: #{decoder_block_forward.1} parent=35 // pred_check_branch
        %232 = sbr.rel (%p230) target = $region40
      $region39: #{decoder_block_forward.1} parent=35 // pred_region
        %p233 = scmp.lt.s32.totalorder %s13, 1
        %s234 = scalar_select %p233, %s13, 1
        %s235 = smul.addr %s234, 8
        %s236 = smul.addr %s235, 8
        %s237 = scalar_lea.vmem %s1, %s236
      $region40: #{decoder_block_forward.1} parent=35 // pred_fallthru
        _
      // Predicated region
      $region41: #{decoder_block_forward.1} parent=35 // pred_check
        %p238 = pneg %p80
      $region42: #{decoder_block_forward.1} parent=35 // pred_check_branch
        %240 = sbr.rel (%p238) target = $region44
      $region43: #{decoder_block_forward.1} parent=35 // pred_region
        %p241 = scmp.lt.s32.totalorder %s13, 1
        %s242 = scalar_select %p241, %s13, 1
        %s243 = smul.addr %s242, 32
        %s244 = smul.addr %s243, 8
        %s245 = scalar_lea.vmem %s2, %s244
      $region44: #{decoder_block_forward.1} parent=35 // pred_fallthru
        _
    $region36: #{decoder_block_forward.1} parent=5 // pred_fallthru
      _
    %p246 = scmp.le.s32.totalorder 1, %s13
    %p247 = scmp.lt.s32.totalorder %s13, 3
    %p248 = pnand %p246, %p247
    %p249 = pneg %p248
    // Predicated region
    $region45: #{decoder_block_forward.1} parent=5 // pred_check
      _
    $region46: #{decoder_block_forward.1} parent=5 // pred_check_branch
      %251 = sbr.rel (%p248) target = $region48
    $region47: #{decoder_block_forward.1} parent=5 // pred_region
      %s252 = ssub.s32 %s13, 1
      %p253 = pneg %p34
      %p254 = pneg %p31
      %p255 = scmp.lt.s32.totalorder %s18, 1
      %s256 = scalar_select %p255, %s18, 1
      %s257 = smul.addr %s256, 8
      %s258 = smul.addr %s257, 8
      %s259 = scalar_lea.vmem %s1, %s258
      %p260 = pneg %p60
      %p261 = pneg %p57
      %p262 = scmp.lt.s32.totalorder %s18, 1
      %s263 = scalar_select %p262, %s18, 1
      %s264 = smul.addr %s263, 32
      %s265 = smul.addr %s264, 8
      %s266 = scalar_lea.vmem %s2, %s265
      %p267 = pneg %p86
      %p268 = pneg %p83
      %p269 = pneg %p107
      %p270 = pneg %p104
      %p271 = pneg %p128
      %p272 = pneg %p125
      %p273 = pneg %p149
      %p274 = pneg %p146
      %p275 = pneg %p170
      %p276 = pneg %p167
      %p277 = pneg %p196
      %p278 = pneg %p193
      %p279 = scmp.lt.s32.totalorder %s18, 1
      %s280 = scalar_select %p279, %s18, 1
      %s281 = smul.addr %s280, 32
      %s282 = smul.addr %s281, 8
      %s283 = scalar_lea.vmem %s7, %s282
      %p284 = scmp.lt.s32.totalorder %s18, 1
      %s285 = scalar_select %p284, %s18, 1
      %s286 = smul.addr %s285, 8
      %s287 = smul.addr %s286, 8
      %s288 = scalar_lea.vmem %s1, %s287
      %p289 = scmp.lt.s32.totalorder %s18, 1
      %s290 = scalar_select %p289, %s18, 1
      %s291 = smul.addr %s290, 32
      %s292 = smul.addr %s291, 8
      %s293 = scalar_lea.vmem %s2, %s292
      %p294 = scmp.lt.s32.totalorder %s18, 1
      %s295 = scalar_select %p294, %s18, 1
      %s296 = smul.addr %s295, 32
      %s297 = smul.addr %s296, 8
      %s298 = scalar_lea.vmem %s7, %s297
      %300 = vst [vmem:[#allocation2] sm:$0xf] 0
      %301 = vst [vmem:[#allocation2 + $0x4] sm:$0xf] 0
      %302 = vst [vmem:[#allocation2 + $0x8] sm:$0x1] 0
      %303 = vst [vmem:[#allocation2 + $0xc] sm:$0xf] 0
      %304 = vst [vmem:[#allocation2 + $0x10] sm:$0xf] 0
      %305 = vst [vmem:[#allocation2 + $0x14] sm:$0x1] 0
      %306 = vst [vmem:[#allocation2 + $0x18] sm:$0xf] 0
      %307 = vst [vmem:[#allocation2 + $0x1c] sm:$0xf] 0
      %308 = vst [vmem:[#allocation2 + $0x20] sm:$0x1] 0
      %309 = vst [vmem:[#allocation2 + $0x24] sm:$0xf] 0
      %310 = vst [vmem:[#allocation2 + $0x28] sm:$0xf] 0
      %311 = vst [vmem:[#allocation2 + $0x2c] sm:$0x1] 0
      %312 = vst [vmem:[#allocation2 + $0x30] sm:$0xf] 0
      %313 = vst [vmem:[#allocation2 + $0x34] sm:$0xf] 0
      %314 = vst [vmem:[#allocation2 + $0x38] sm:$0x1] 0
      %315 = vst [vmem:[#allocation2 + $0x3c] sm:$0xf] 0
      %316 = vst [vmem:[#allocation2 + $0x40] sm:$0xf] 0
      %317 = vst [vmem:[#allocation2 + $0x44] sm:$0x1] 0
      %318 = vst [vmem:[#allocation2 + $0x48] sm:$0xf] 0
      %319 = vst [vmem:[#allocation2 + $0x4c] sm:$0xf] 0
      %320 = vst [vmem:[#allocation2 + $0x50] sm:$0x1] 0
      %321 = vst [vmem:[#allocation2 + $0x54] sm:$0xf] 0
      %322 = vst [vmem:[#allocation2 + $0x58] sm:$0xf] 0
      %323 = vst [vmem:[#allocation2 + $0x5c] sm:$0x1] 0
      %324 = vst [vmem:[#allocation2 + $0x60] sm:$0xf] 0
      %325 = vst [vmem:[#allocation2 + $0x64] sm:$0xf] 0
      %326 = vst [vmem:[#allocation2 + $0x68] sm:$0x1] 0
      %327 = vst [vmem:[#allocation2 + $0x6c] sm:$0xf] 0
      %328 = vst [vmem:[#allocation2 + $0x70] sm:$0xf] 0
      %329 = vst [vmem:[#allocation2 + $0x74] sm:$0x1] 0
      %330 = vst [vmem:[#allocation2 + $0x78] sm:$0xf] 0
      %331 = vst [vmem:[#allocation2 + $0x7c] sm:$0xf] 0
      %332 = vst [vmem:[#allocation2 + $0x80] sm:$0x1] 0
      %333 = vst [vmem:[#allocation2 + $0x84] sm:$0xf] 0
      %334 = vst [vmem:[#allocation2 + $0x88] sm:$0xf] 0
      %335 = vst [vmem:[#allocation2 + $0x8c] sm:$0x1] 0
      %336 = vst [vmem:[#allocation2 + $0x90] sm:$0xf] 0
      %337 = vst [vmem:[#allocation2 + $0x94] sm:$0xf] 0
      %338 = vst [vmem:[#allocation2 + $0x98] sm:$0x1] 0
      %339 = vst [vmem:[#allocation2 + $0x9c] sm:$0xf] 0
      %340 = vst [vmem:[#allocation2 + $0xa0] sm:$0xf] 0
      %341 = vst [vmem:[#allocation2 + $0xa4] sm:$0x1] 0
      %342 = vst [vmem:[#allocation2 + $0xa8] sm:$0xf] 0
      %343 = vst [vmem:[#allocation2 + $0xac] sm:$0xf] 0
      %344 = vst [vmem:[#allocation2 + $0xb0] sm:$0x1] 0
      %345 = vst [vmem:[#allocation2 + $0xb4] sm:$0xf] 0
      %346 = vst [vmem:[#allocation2 + $0xb8] sm:$0xf] 0
      %347 = vst [vmem:[#allocation2 + $0xbc] sm:$0x1] 0
      %348 = vst [vmem:[#allocation2 + $0xc0] sm:$0xf] 0
      %349 = vst [vmem:[#allocation2 + $0xc4] sm:$0xf] 0
      %350 = vst [vmem:[#allocation2 + $0xc8] sm:$0x1] 0
      %351 = vst [vmem:[#allocation2 + $0xcc] sm:$0xf] 0
      %352 = vst [vmem:[#allocation2 + $0xd0] sm:$0xf] 0
      %353 = vst [vmem:[#allocation2 + $0xd4] sm:$0x1] 0
      %v354 = vld [vmem:[%s0] sm:$0xf]
      %v355 = vld [vmem:[%s0 + $0x4] sm:$0xf]
      %v356 = vld [vmem:[%s0 + $0x8] sm:$0xf]
      %v357 = vld [vmem:[%s0 + $0xc] sm:$0xf]
      %v358 = vld [vmem:[%s0 + $0x10] sm:$0xf]
      %v359 = vld [vmem:[%s0 + $0x14] sm:$0xf]
      %v360 = vld [vmem:[%s0 + $0x18] sm:$0xf]
      %v361 = vld [vmem:[%s0 + $0x1c] sm:$0xf]
      %v362 = vld [vmem:[%s0 + $0x20] sm:$0xf]
      %v363 = vld [vmem:[%s0 + $0x24] sm:$0xf]
      %v364 = vld [vmem:[%s0 + $0x28] sm:$0xf]
      %v365 = vld [vmem:[%s0 + $0x2c] sm:$0xf]
      %v366 = vld [vmem:[%s0 + $0x30] sm:$0xf]
      %v367 = vld [vmem:[%s0 + $0x34] sm:$0xf]
      %v368 = vld [vmem:[%s0 + $0x38] sm:$0xf]
      %v369 = vld [vmem:[%s0 + $0x3c] sm:$0xf]
      %v370 = vld [vmem:[%s0 + $0x40] sm:$0xf]
      %v371 = vld [vmem:[%s0 + $0x44] sm:$0xf]
      %v372 = vld [vmem:[%s0 + $0x48] sm:$0xf]
      %v373 = vld [vmem:[%s0 + $0x4c] sm:$0xf]
      %v374 = vld [vmem:[%s0 + $0x50] sm:$0xf]
      %v375 = vld [vmem:[%s0 + $0x54] sm:$0xf]
      %v376 = vld [vmem:[%s0 + $0x58] sm:$0xf]
      %v377 = vld [vmem:[%s0 + $0x5c] sm:$0xf]
      %v378 = vld [vmem:[%s0 + $0x60] sm:$0xf]
      %v379 = vld [vmem:[%s0 + $0x64] sm:$0xf]
      %v380 = vld [vmem:[%s0 + $0x68] sm:$0xf]
      %v381 = vld [vmem:[%s0 + $0x6c] sm:$0xf]
      %v382 = vld [vmem:[%s0 + $0x70] sm:$0xf]
      %v383 = vld [vmem:[%s0 + $0x74] sm:$0xf]
      %v384 = vld [vmem:[%s0 + $0x78] sm:$0xf]
      %v385 = vld [vmem:[%s0 + $0x7c] sm:$0xf]
      %v386 = vld [vmem:[%s288] sm:$0xff]
      %v387 = vld [vmem:[%s288 + $0x8] sm:$0xff]
      %v388 = vld [vmem:[%s288 + $0x10] sm:$0xff]
      %v389 = vld [vmem:[%s288 + $0x18] sm:$0xff]
      %v390 = vld [vmem:[%s288 + $0x20] sm:$0xff]
      %v391 = vld [vmem:[%s288 + $0x28] sm:$0xff]
      %v392 = vld [vmem:[%s288 + $0x30] sm:$0xff]
      %v393 = vld [vmem:[%s288 + $0x38] sm:$0xff]
      %v394 = vpack.c.bf16 %v387, %v386
      %v395 = vpack.c.bf16 %v389, %v388
      %v396 = vpack.c.bf16 %v391, %v390
      %v397 = vpack.c.bf16 %v393, %v392
      %v430 = vunpack.c.l.b16 %v354
      %v431 = vunpack.c.l.b16 %v355
      %v432 = vunpack.c.l.b16 %v356
      %v433 = vunpack.c.l.b16 %v357
      %v434 = vunpack.c.l.b16 %v358
      %v435 = vunpack.c.l.b16 %v359
      %v436 = vunpack.c.l.b16 %v360
      %v437 = vunpack.c.l.b16 %v361
      %v438 = vunpack.c.l.b16 %v362
      %v439 = vunpack.c.l.b16 %v363
      %v440 = vunpack.c.l.b16 %v364
      %v441 = vunpack.c.l.b16 %v365
      %v442 = vunpack.c.l.b16 %v366
      %v443 = vunpack.c.l.b16 %v367
      %v444 = vunpack.c.l.b16 %v368
      %v445 = vunpack.c.l.b16 %v369
      %v446 = vunpack.c.l.b16 %v370
      %v447 = vunpack.c.l.b16 %v371
      %v448 = vunpack.c.l.b16 %v372
      %v449 = vunpack.c.l.b16 %v373
      %v450 = vunpack.c.l.b16 %v374
      %v451 = vunpack.c.l.b16 %v375
      %v452 = vunpack.c.l.b16 %v376
      %v453 = vunpack.c.l.b16 %v377
      %v454 = vunpack.c.l.b16 %v378
      %v455 = vunpack.c.l.b16 %v379
      %v456 = vunpack.c.l.b16 %v380
      %v457 = vunpack.c.l.b16 %v381
      %v458 = vunpack.c.l.b16 %v382
      %v459 = vunpack.c.l.b16 %v383
      %v460 = vunpack.c.l.b16 %v384
      %v461 = vunpack.c.l.b16 %v385
      %v462 = vpack.c.b16 %v431, %v430
      %v463 = vpack.c.b16 %v433, %v432
      %v464 = vpack.c.b16 %v435, %v434
      %v465 = vpack.c.b16 %v437, %v436
      %v466 = vpack.c.b16 %v439, %v438
      %v467 = vpack.c.b16 %v441, %v440
      %v468 = vpack.c.b16 %v443, %v442
      %v469 = vpack.c.b16 %v445, %v444
      %v470 = vpack.c.b16 %v447, %v446
      %v471 = vpack.c.b16 %v449, %v448
      %v472 = vpack.c.b16 %v451, %v450
      %v473 = vpack.c.b16 %v453, %v452
      %v474 = vpack.c.b16 %v455, %v454
      %v475 = vpack.c.b16 %v457, %v456
      %v476 = vpack.c.b16 %v459, %v458
      %v477 = vpack.c.b16 %v461, %v460
      %vm478 = vcmask 523264
      %v480 = vsel %vm478, %v462, 0
      %v483 = vsel %vm478, %v463, 0
      %v486 = vsel %vm478, %v464, 0
      %v489 = vsel %vm478, %v465, 0
      %v492 = vsel %vm478, %v466, 0
      %v495 = vsel %vm478, %v467, 0
      %v498 = vsel %vm478, %v468, 0
      %v501 = vsel %vm478, %v469, 0
      %v504 = vsel %vm478, %v470, 0
      %v507 = vsel %vm478, %v471, 0
      %v510 = vsel %vm478, %v472, 0
      %v513 = vsel %vm478, %v473, 0
      %v516 = vsel %vm478, %v474, 0
      %v519 = vsel %vm478, %v475, 0
      %v522 = vsel %vm478, %v476, 0
      %v525 = vsel %vm478, %v477, 0
      %527 = vmatpush.bf16.msra.mxu0 0
      %528 = vmatpush.bf16.msra.mxu0 0
      %529 = vmatpush.bf16.msra.mxu0 0
      %530 = vmatpush.bf16.msra.mxu0 0
      %531 = vmatpush.bf16.msra.mxu0 %v397
      %532 = vmatpush.bf16.msra.mxu0 %v396
      %533 = vmatpush.bf16.msra.mxu0 %v395
      %534 = vmatpush.bf16.msra.mxu0 %v394
      %535 = vmatmul.bf16.gmra.mxu0 %v480
      %v536 = vpop.f32.mrf.mxu0
      %v537 = vadd.f32 0.0, %v536
      %v538 = vpop.f32.mrf.mxu0
      %v539 = vadd.f32 0.0, %v538
      %540 = vmatmul.bf16.gmra.mxu0 %v483
      %v541 = vpop.f32.mrf.mxu0
      %v542 = vadd.f32 0.0, %v541
      %v543 = vpop.f32.mrf.mxu0
      %v544 = vadd.f32 0.0, %v543
      %545 = vmatmul.bf16.gmra.mxu0 %v486
      %v546 = vpop.f32.mrf.mxu0
      %v547 = vadd.f32 0.0, %v546
      %v548 = vpop.f32.mrf.mxu0
      %v549 = vadd.f32 0.0, %v548
      %550 = vmatmul.bf16.gmra.mxu0 %v489
      %v551 = vpop.f32.mrf.mxu0
      %v552 = vadd.f32 0.0, %v551
      %v553 = vpop.f32.mrf.mxu0
      %v554 = vadd.f32 0.0, %v553
      %555 = vmatmul.bf16.gmra.mxu0 %v492
      %v556 = vpop.f32.mrf.mxu0
      %v557 = vadd.f32 0.0, %v556
      %v558 = vpop.f32.mrf.mxu0
      %v559 = vadd.f32 0.0, %v558
      %560 = vmatmul.bf16.gmra.mxu0 %v495
      %v561 = vpop.f32.mrf.mxu0
      %v562 = vadd.f32 0.0, %v561
      %v563 = vpop.f32.mrf.mxu0
      %v564 = vadd.f32 0.0, %v563
      %565 = vmatmul.bf16.gmra.mxu0 %v498
      %v566 = vpop.f32.mrf.mxu0
      %v567 = vadd.f32 0.0, %v566
      %v568 = vpop.f32.mrf.mxu0
      %v569 = vadd.f32 0.0, %v568
      %570 = vmatmul.bf16.gmra.mxu0 %v501
      %v571 = vpop.f32.mrf.mxu0
      %v572 = vadd.f32 0.0, %v571
      %v573 = vpop.f32.mrf.mxu0
      %v574 = vadd.f32 0.0, %v573
      %575 = vmatmul.bf16.gmra.mxu0 %v504
      %v576 = vpop.f32.mrf.mxu0
      %v577 = vadd.f32 0.0, %v576
      %v578 = vpop.f32.mrf.mxu0
      %v579 = vadd.f32 0.0, %v578
      %580 = vmatmul.bf16.gmra.mxu0 %v507
      %v581 = vpop.f32.mrf.mxu0
      %v582 = vadd.f32 0.0, %v581
      %v583 = vpop.f32.mrf.mxu0
      %v584 = vadd.f32 0.0, %v583
      %585 = vmatmul.bf16.gmra.mxu0 %v510
      %v586 = vpop.f32.mrf.mxu0
      %v587 = vadd.f32 0.0, %v586
      %v588 = vpop.f32.mrf.mxu0
      %v589 = vadd.f32 0.0, %v588
      %590 = vmatmul.bf16.gmra.mxu0 %v513
      %v591 = vpop.f32.mrf.mxu0
      %v592 = vadd.f32 0.0, %v591
      %v593 = vpop.f32.mrf.mxu0
      %v594 = vadd.f32 0.0, %v593
      %595 = vmatmul.bf16.gmra.mxu0 %v516
      %v596 = vpop.f32.mrf.mxu0
      %v597 = vadd.f32 0.0, %v596
      %v598 = vpop.f32.mrf.mxu0
      %v599 = vadd.f32 0.0, %v598
      %600 = vmatmul.bf16.gmra.mxu0 %v519
      %v601 = vpop.f32.mrf.mxu0
      %v602 = vadd.f32 0.0, %v601
      %v603 = vpop.f32.mrf.mxu0
      %v604 = vadd.f32 0.0, %v603
      %605 = vmatmul.bf16.gmra.mxu0 %v522
      %v606 = vpop.f32.mrf.mxu0
      %v607 = vadd.f32 0.0, %v606
      %v608 = vpop.f32.mrf.mxu0
      %v609 = vadd.f32 0.0, %v608
      %610 = vmatmul.bf16.gmra.mxu0 %v525
      %v611 = vpop.f32.mrf.mxu0
      %v612 = vadd.f32 0.0, %v611
      %v613 = vpop.f32.mrf.mxu0
      %v614 = vadd.f32 0.0, %v613
      %615 = vdwg.mxu0
      %v616 = vpack.c.bf16 %v537, %v537
      %v617 = vpack.c.bf16 %v539, %v539
      %v618 = vpack.c.bf16 %v542, %v542
      %v619 = vpack.c.bf16 %v544, %v544
      %v620 = vpack.c.bf16 %v547, %v547
      %v621 = vpack.c.bf16 %v549, %v549
      %v622 = vpack.c.bf16 %v552, %v552
      %v623 = vpack.c.bf16 %v554, %v554
      %v624 = vpack.c.bf16 %v557, %v557
      %v625 = vpack.c.bf16 %v559, %v559
      %v626 = vpack.c.bf16 %v562, %v562
      %v627 = vpack.c.bf16 %v564, %v564
      %v628 = vpack.c.bf16 %v567, %v567
      %v629 = vpack.c.bf16 %v569, %v569
      %v630 = vpack.c.bf16 %v572, %v572
      %v631 = vpack.c.bf16 %v574, %v574
      %v632 = vpack.c.bf16 %v577, %v577
      %v633 = vpack.c.bf16 %v579, %v579
      %v634 = vpack.c.bf16 %v582, %v582
      %v635 = vpack.c.bf16 %v584, %v584
      %v636 = vpack.c.bf16 %v587, %v587
      %v637 = vpack.c.bf16 %v589, %v589
      %v638 = vpack.c.bf16 %v592, %v592
      %v639 = vpack.c.bf16 %v594, %v594
      %v640 = vpack.c.bf16 %v597, %v597
      %v641 = vpack.c.bf16 %v599, %v599
      %v642 = vpack.c.bf16 %v602, %v602
      %v643 = vpack.c.bf16 %v604, %v604
      %v644 = vpack.c.bf16 %v607, %v607
      %v645 = vpack.c.bf16 %v609, %v609
      %v646 = vpack.c.bf16 %v612, %v612
      %v647 = vpack.c.bf16 %v614, %v614
      %vm648 = vsmask.f32 256
      %vm649 = vsmask.f32 4368
      %vm650 = vmor %vm648, %vm649
      %v652 = vshrl.u32 %v616, 16
      %v654 = vrot.slane %v652, 7
      %v655 = vshll.u32 %v616, 16
      %v657 = vor.u32 %v654, %v655
      %v658 = vrot.slane %v654, 4
      %v660 = vshrl.u32 %v617, 16
      %v662 = vrot.slane %v660, 7
      %v663 = vshll.u32 %v617, 16
      %v665 = vor.u32 %v662, %v663
      %v666 = vsel %vm650, %v658, %v665
      %v667 = vrot.slane %v662, 4
      %v669 = vshrl.u32 %v618, 16
      %v671 = vrot.slane %v669, 7
      %v672 = vshll.u32 %v618, 16
      %v674 = vor.u32 %v671, %v672
      %v675 = vrot.slane %v671, 4
      %v677 = vshrl.u32 %v619, 16
      %v679 = vrot.slane %v677, 7
      %v680 = vshll.u32 %v619, 16
      %v682 = vor.u32 %v679, %v680
      %v683 = vsel %vm650, %v675, %v682
      %v684 = vrot.slane %v679, 4
      %v686 = vshrl.u32 %v620, 16
      %v688 = vrot.slane %v686, 7
      %v689 = vshll.u32 %v620, 16
      %v691 = vor.u32 %v688, %v689
      %v692 = vrot.slane %v688, 4
      %v694 = vshrl.u32 %v621, 16
      %v696 = vrot.slane %v694, 7
      %v697 = vshll.u32 %v621, 16
      %v699 = vor.u32 %v696, %v697
      %v700 = vsel %vm650, %v692, %v699
      %v701 = vrot.slane %v696, 4
      %v703 = vshrl.u32 %v622, 16
      %v705 = vrot.slane %v703, 7
      %v706 = vshll.u32 %v622, 16
      %v708 = vor.u32 %v705, %v706
      %v709 = vrot.slane %v705, 4
      %v711 = vshrl.u32 %v623, 16
      %v713 = vrot.slane %v711, 7
      %v714 = vshll.u32 %v623, 16
      %v716 = vor.u32 %v713, %v714
      %v717 = vsel %vm650, %v709, %v716
      %v718 = vrot.slane %v713, 4
      %v720 = vshrl.u32 %v624, 16
      %v722 = vrot.slane %v720, 7
      %v723 = vshll.u32 %v624, 16
      %v725 = vor.u32 %v722, %v723
      %v726 = vrot.slane %v722, 4
      %v728 = vshrl.u32 %v625, 16
      %v730 = vrot.slane %v728, 7
      %v731 = vshll.u32 %v625, 16
      %v733 = vor.u32 %v730, %v731
      %v734 = vsel %vm650, %v726, %v733
      %v735 = vrot.slane %v730, 4
      %v737 = vshrl.u32 %v626, 16
      %v739 = vrot.slane %v737, 7
      %v740 = vshll.u32 %v626, 16
      %v742 = vor.u32 %v739, %v740
      %v743 = vrot.slane %v739, 4
      %v745 = vshrl.u32 %v627, 16
      %v747 = vrot.slane %v745, 7
      %v748 = vshll.u32 %v627, 16
      %v750 = vor.u32 %v747, %v748
      %v751 = vsel %vm650, %v743, %v750
      %v752 = vrot.slane %v747, 4
      %v754 = vshrl.u32 %v628, 16
      %v756 = vrot.slane %v754, 7
      %v757 = vshll.u32 %v628, 16
      %v759 = vor.u32 %v756, %v757
      %v760 = vrot.slane %v756, 4
      %v762 = vshrl.u32 %v629, 16
      %v764 = vrot.slane %v762, 7
      %v765 = vshll.u32 %v629, 16
      %v767 = vor.u32 %v764, %v765
      %v768 = vsel %vm650, %v760, %v767
      %v769 = vrot.slane %v764, 4
      %v771 = vshrl.u32 %v630, 16
      %v773 = vrot.slane %v771, 7
      %v774 = vshll.u32 %v630, 16
      %v776 = vor.u32 %v773, %v774
      %v777 = vrot.slane %v773, 4
      %v779 = vshrl.u32 %v631, 16
      %v781 = vrot.slane %v779, 7
      %v782 = vshll.u32 %v631, 16
      %v784 = vor.u32 %v781, %v782
      %v785 = vsel %vm650, %v777, %v784
      %v786 = vrot.slane %v781, 4
      %v788 = vshrl.u32 %v632, 16
      %v790 = vrot.slane %v788, 7
      %v791 = vshll.u32 %v632, 16
      %v793 = vor.u32 %v790, %v791
      %v794 = vrot.slane %v790, 4
      %v796 = vshrl.u32 %v633, 16
      %v798 = vrot.slane %v796, 7
      %v799 = vshll.u32 %v633, 16
      %v801 = vor.u32 %v798, %v799
      %v802 = vsel %vm650, %v794, %v801
      %v803 = vrot.slane %v798, 4
      %v805 = vshrl.u32 %v634, 16
      %v807 = vrot.slane %v805, 7
      %v808 = vshll.u32 %v634, 16
      %v810 = vor.u32 %v807, %v808
      %v811 = vrot.slane %v807, 4
      %v813 = vshrl.u32 %v635, 16
      %v815 = vrot.slane %v813, 7
      %v816 = vshll.u32 %v635, 16
      %v818 = vor.u32 %v815, %v816
      %v819 = vsel %vm650, %v811, %v818
      %v820 = vrot.slane %v815, 4
      %v822 = vshrl.u32 %v636, 16
      %v824 = vrot.slane %v822, 7
      %v825 = vshll.u32 %v636, 16
      %v827 = vor.u32 %v824, %v825
      %v828 = vrot.slane %v824, 4
      %v830 = vshrl.u32 %v637, 16
      %v832 = vrot.slane %v830, 7
      %v833 = vshll.u32 %v637, 16
      %v835 = vor.u32 %v832, %v833
      %v836 = vsel %vm650, %v828, %v835
      %v837 = vrot.slane %v832, 4
      %v839 = vshrl.u32 %v638, 16
      %v841 = vrot.slane %v839, 7
      %v842 = vshll.u32 %v638, 16
      %v844 = vor.u32 %v841, %v842
      %v845 = vrot.slane %v841, 4
      %v847 = vshrl.u32 %v639, 16
      %v849 = vrot.slane %v847, 7
      %v850 = vshll.u32 %v639, 16
      %v852 = vor.u32 %v849, %v850
      %v853 = vsel %vm650, %v845, %v852
      %v854 = vrot.slane %v849, 4
      %v856 = vshrl.u32 %v640, 16
      %v858 = vrot.slane %v856, 7
      %v859 = vshll.u32 %v640, 16
      %v861 = vor.u32 %v858, %v859
      %v862 = vrot.slane %v858, 4
      %v864 = vshrl.u32 %v641, 16
      %v866 = vrot.slane %v864, 7
      %v867 = vshll.u32 %v641, 16
      %v869 = vor.u32 %v866, %v867
      %v870 = vsel %vm650, %v862, %v869
      %v871 = vrot.slane %v866, 4
      %v873 = vshrl.u32 %v642, 16
      %v875 = vrot.slane %v873, 7
      %v876 = vshll.u32 %v642, 16
      %v878 = vor.u32 %v875, %v876
      %v879 = vrot.slane %v875, 4
      %v881 = vshrl.u32 %v643, 16
      %v883 = vrot.slane %v881, 7
      %v884 = vshll.u32 %v643, 16
      %v886 = vor.u32 %v883, %v884
      %v887 = vsel %vm650, %v879, %v886
      %v888 = vrot.slane %v883, 4
      %v890 = vshrl.u32 %v644, 16
      %v892 = vrot.slane %v890, 7
      %v893 = vshll.u32 %v644, 16
      %v895 = vor.u32 %v892, %v893
      %v896 = vrot.slane %v892, 4
      %v898 = vshrl.u32 %v645, 16
      %v900 = vrot.slane %v898, 7
      %v901 = vshll.u32 %v645, 16
      %v903 = vor.u32 %v900, %v901
      %v904 = vsel %vm650, %v896, %v903
      %v905 = vrot.slane %v900, 4
      %v907 = vshrl.u32 %v646, 16
      %v909 = vrot.slane %v907, 7
      %v910 = vshll.u32 %v646, 16
      %v912 = vor.u32 %v909, %v910
      %v913 = vrot.slane %v909, 4
      %v915 = vshrl.u32 %v647, 16
      %v917 = vrot.slane %v915, 7
      %v918 = vshll.u32 %v647, 16
      %v920 = vor.u32 %v917, %v918
      %v921 = vsel %vm650, %v913, %v920
      %v922 = vrot.slane %v917, 4
      %s971 = scalar_lea.vmem [#allocation2], 12
      %vm972 = vcmask 27648
      %vm973 = vsmask.f32 7938
      %vm974 = vmand %vm972, %vm973
      %v975 = vld [vmem:[%s971] sm:$0xf]
      %v976 = vsel %vm974, %v657, %v975
      %977 = vst [vmem:[%s971] sm:$0xf] %v976
      %vm978 = vcmask 27648
      %979 = vst.msk [vmem:[%s971 + $0x4] sm:$0xf] %vm978, %v666
      %vm980 = vcmask 24576
      %vm981 = vmand %vm980, %vm648
      %v982 = vld [vmem:[%s971 + $0x8] sm:$0x1]
      %v983 = vsel %vm981, %v667, %v982
      %984 = vst [vmem:[%s971 + $0x8] sm:$0x1] %v983
      %v985 = vld [vmem:[%s971 + $0xc] sm:$0xf]
      %v986 = vsel %vm974, %v674, %v985
      %987 = vst [vmem:[%s971 + $0xc] sm:$0xf] %v986
      %988 = vst.msk [vmem:[%s971 + $0x10] sm:$0xf] %vm978, %v683
      %v989 = vld [vmem:[%s971 + $0x14] sm:$0x1]
      %v990 = vsel %vm981, %v684, %v989
      %991 = vst [vmem:[%s971 + $0x14] sm:$0x1] %v990
      %v992 = vld [vmem:[%s971 + $0x18] sm:$0xf]
      %v993 = vsel %vm974, %v691, %v992
      %994 = vst [vmem:[%s971 + $0x18] sm:$0xf] %v993
      %995 = vst.msk [vmem:[%s971 + $0x1c] sm:$0xf] %vm978, %v700
      %v996 = vld [vmem:[%s971 + $0x20] sm:$0x1]
      %v997 = vsel %vm981, %v701, %v996
      %998 = vst [vmem:[%s971 + $0x20] sm:$0x1] %v997
      %v999 = vld [vmem:[%s971 + $0x24] sm:$0xf]
      %v1000 = vsel %vm974, %v708, %v999
      %1001 = vst [vmem:[%s971 + $0x24] sm:$0xf] %v1000
      %1002 = vst.msk [vmem:[%s971 + $0x28] sm:$0xf] %vm978, %v717
      %v1003 = vld [vmem:[%s971 + $0x2c] sm:$0x1]
      %v1004 = vsel %vm981, %v718, %v1003
      %1005 = vst [vmem:[%s971 + $0x2c] sm:$0x1] %v1004
      %v1006 = vld [vmem:[%s971 + $0x30] sm:$0xf]
      %v1007 = vsel %vm974, %v725, %v1006
      %1008 = vst [vmem:[%s971 + $0x30] sm:$0xf] %v1007
      %1009 = vst.msk [vmem:[%s971 + $0x34] sm:$0xf] %vm978, %v734
      %v1010 = vld [vmem:[%s971 + $0x38] sm:$0x1]
      %v1011 = vsel %vm981, %v735, %v1010
      %1012 = vst [vmem:[%s971 + $0x38] sm:$0x1] %v1011
      %v1013 = vld [vmem:[%s971 + $0x3c] sm:$0xf]
      %v1014 = vsel %vm974, %v742, %v1013
      %1015 = vst [vmem:[%s971 + $0x3c] sm:$0xf] %v1014
      %1016 = vst.msk [vmem:[%s971 + $0x40] sm:$0xf] %vm978, %v751
      %v1017 = vld [vmem:[%s971 + $0x44] sm:$0x1]
      %v1018 = vsel %vm981, %v752, %v1017
      %1019 = vst [vmem:[%s971 + $0x44] sm:$0x1] %v1018
      %v1020 = vld [vmem:[%s971 + $0x48] sm:$0xf]
      %v1021 = vsel %vm974, %v759, %v1020
      %1022 = vst [vmem:[%s971 + $0x48] sm:$0xf] %v1021
      %1023 = vst.msk [vmem:[%s971 + $0x4c] sm:$0xf] %vm978, %v768
      %v1024 = vld [vmem:[%s971 + $0x50] sm:$0x1]
      %v1025 = vsel %vm981, %v769, %v1024
      %1026 = vst [vmem:[%s971 + $0x50] sm:$0x1] %v1025
      %v1027 = vld [vmem:[%s971 + $0x54] sm:$0xf]
      %v1028 = vsel %vm974, %v776, %v1027
      %1029 = vst [vmem:[%s971 + $0x54] sm:$0xf] %v1028
      %1030 = vst.msk [vmem:[%s971 + $0x58] sm:$0xf] %vm978, %v785
      %v1031 = vld [vmem:[%s971 + $0x5c] sm:$0x1]
      %v1032 = vsel %vm981, %v786, %v1031
      %1033 = vst [vmem:[%s971 + $0x5c] sm:$0x1] %v1032
      %v1034 = vld [vmem:[%s971 + $0x60] sm:$0xf]
      %v1035 = vsel %vm974, %v793, %v1034
      %1036 = vst [vmem:[%s971 + $0x60] sm:$0xf] %v1035
      %1037 = vst.msk [vmem:[%s971 + $0x64] sm:$0xf] %vm978, %v802
      %v1038 = vld [vmem:[%s971 + $0x68] sm:$0x1]
      %v1039 = vsel %vm981, %v803, %v1038
      %1040 = vst [vmem:[%s971 + $0x68] sm:$0x1] %v1039
      %v1041 = vld [vmem:[%s971 + $0x6c] sm:$0xf]
      %v1042 = vsel %vm974, %v810, %v1041
      %1043 = vst [vmem:[%s971 + $0x6c] sm:$0xf] %v1042
      %1044 = vst.msk [vmem:[%s971 + $0x70] sm:$0xf] %vm978, %v819
      %v1045 = vld [vmem:[%s971 + $0x74] sm:$0x1]
      %v1046 = vsel %vm981, %v820, %v1045
      %1047 = vst [vmem:[%s971 + $0x74] sm:$0x1] %v1046
      %v1048 = vld [vmem:[%s971 + $0x78] sm:$0xf]
      %v1049 = vsel %vm974, %v827, %v1048
      %1050 = vst [vmem:[%s971 + $0x78] sm:$0xf] %v1049
      %1051 = vst.msk [vmem:[%s971 + $0x7c] sm:$0xf] %vm978, %v836
      %v1052 = vld [vmem:[%s971 + $0x80] sm:$0x1]
      %v1053 = vsel %vm981, %v837, %v1052
      %1054 = vst [vmem:[%s971 + $0x80] sm:$0x1] %v1053
      %v1055 = vld [vmem:[%s971 + $0x84] sm:$0xf]
      %v1056 = vsel %vm974, %v844, %v1055
      %1057 = vst [vmem:[%s971 + $0x84] sm:$0xf] %v1056
      %1058 = vst.msk [vmem:[%s971 + $0x88] sm:$0xf] %vm978, %v853
      %v1059 = vld [vmem:[%s971 + $0x8c] sm:$0x1]
      %v1060 = vsel %vm981, %v854, %v1059
      %1061 = vst [vmem:[%s971 + $0x8c] sm:$0x1] %v1060
      %v1062 = vld [vmem:[%s971 + $0x90] sm:$0xf]
      %v1063 = vsel %vm974, %v861, %v1062
      %1064 = vst [vmem:[%s971 + $0x90] sm:$0xf] %v1063
      %1065 = vst.msk [vmem:[%s971 + $0x94] sm:$0xf] %vm978, %v870
      %v1066 = vld [vmem:[%s971 + $0x98] sm:$0x1]
      %v1067 = vsel %vm981, %v871, %v1066
      %1068 = vst [vmem:[%s971 + $0x98] sm:$0x1] %v1067
      %v1069 = vld [vmem:[%s971 + $0x9c] sm:$0xf]
      %v1070 = vsel %vm974, %v878, %v1069
      %1071 = vst [vmem:[%s971 + $0x9c] sm:$0xf] %v1070
      %1072 = vst.msk [vmem:[%s971 + $0xa0] sm:$0xf] %vm978, %v887
      %v1073 = vld [vmem:[%s971 + $0xa4] sm:$0x1]
      %v1074 = vsel %vm981, %v888, %v1073
      %1075 = vst [vmem:[%s971 + $0xa4] sm:$0x1] %v1074
      %v1076 = vld [vmem:[%s971 + $0xa8] sm:$0xf]
      %v1077 = vsel %vm974, %v895, %v1076
      %1078 = vst [vmem:[%s971 + $0xa8] sm:$0xf] %v1077
      %1079 = vst.msk [vmem:[%s971 + $0xac] sm:$0xf] %vm978, %v904
      %v1080 = vld [vmem:[%s971 + $0xb0] sm:$0x1]
      %v1081 = vsel %vm981, %v905, %v1080
      %1082 = vst [vmem:[%s971 + $0xb0] sm:$0x1] %v1081
      %v1083 = vld [vmem:[%s971 + $0xb4] sm:$0xf]
      %v1084 = vsel %vm974, %v912, %v1083
      %1085 = vst [vmem:[%s971 + $0xb4] sm:$0xf] %v1084
      %1086 = vst.msk [vmem:[%s971 + $0xb8] sm:$0xf] %vm978, %v921
      %v1087 = vld [vmem:[%s971 + $0xbc] sm:$0x1]
      %v1088 = vsel %vm981, %v922, %v1087
      %1089 = vst [vmem:[%s971 + $0xbc] sm:$0x1] %v1088
      %v1090 = vld [vmem:[%s293] sm:$0xff]
      %v1091 = vld [vmem:[%s293 + $0x8] sm:$0xff]
      %v1092 = vld [vmem:[%s293 + $0x10] sm:$0xff]
      %v1093 = vld [vmem:[%s293 + $0x18] sm:$0xff]
      %v1094 = vld [vmem:[%s293 + $0x20] sm:$0xff]
      %v1095 = vld [vmem:[%s293 + $0x28] sm:$0xff]
      %v1096 = vld [vmem:[%s293 + $0x30] sm:$0xff]
      %v1097 = vld [vmem:[%s293 + $0x38] sm:$0xff]
      %v1098 = vld [vmem:[%s293 + $0x40] sm:$0xff]
      %v1099 = vld [vmem:[%s293 + $0x48] sm:$0xff]
      %v1100 = vld [vmem:[%s293 + $0x50] sm:$0xff]
      %v1101 = vld [vmem:[%s293 + $0x58] sm:$0xff]
      %v1102 = vld [vmem:[%s293 + $0x60] sm:$0xff]
      %v1103 = vld [vmem:[%s293 + $0x68] sm:$0xff]
      %v1104 = vld [vmem:[%s293 + $0x70] sm:$0xff]
      %v1105 = vld [vmem:[%s293 + $0x78] sm:$0xff]
      %v1106 = vld [vmem:[%s293 + $0x80] sm:$0xff]
      %v1107 = vld [vmem:[%s293 + $0x88] sm:$0xff]
      %v1108 = vld [vmem:[%s293 + $0x90] sm:$0xff]
      %v1109 = vld [vmem:[%s293 + $0x98] sm:$0xff]
      %v1110 = vld [vmem:[%s293 + $0xa0] sm:$0xff]
      %v1111 = vld [vmem:[%s293 + $0xa8] sm:$0xff]
      %v1112 = vld [vmem:[%s293 + $0xb0] sm:$0xff]
      %v1113 = vld [vmem:[%s293 + $0xb8] sm:$0xff]
      %v1114 = vld [vmem:[%s293 + $0xc0] sm:$0xff]
      %v1115 = vld [vmem:[%s293 + $0xc8] sm:$0xff]
      %v1116 = vld [vmem:[%s293 + $0xd0] sm:$0xff]
      %v1117 = vld [vmem:[%s293 + $0xd8] sm:$0xff]
      %v1118 = vld [vmem:[%s293 + $0xe0] sm:$0xff]
      %v1119 = vld [vmem:[%s293 + $0xe8] sm:$0xff]
      %v1120 = vld [vmem:[%s293 + $0xf0] sm:$0xff]
      %v1121 = vld [vmem:[%s293 + $0xf8] sm:$0xff]
      %v1122 = vpack.c.bf16 %v1090, %v1090
      %v1123 = vpack.c.bf16 %v1091, %v1091
      %v1124 = vpack.c.bf16 %v1092, %v1092
      %v1125 = vpack.c.bf16 %v1093, %v1093
      %v1126 = vpack.c.bf16 %v1094, %v1094
      %v1127 = vpack.c.bf16 %v1095, %v1095
      %v1128 = vpack.c.bf16 %v1096, %v1096
      %v1129 = vpack.c.bf16 %v1097, %v1097
      %v1130 = vpack.c.bf16 %v1098, %v1098
      %v1131 = vpack.c.bf16 %v1099, %v1099
      %v1132 = vpack.c.bf16 %v1100, %v1100
      %v1133 = vpack.c.bf16 %v1101, %v1101
      %v1134 = vpack.c.bf16 %v1102, %v1102
      %v1135 = vpack.c.bf16 %v1103, %v1103
      %v1136 = vpack.c.bf16 %v1104, %v1104
      %v1137 = vpack.c.bf16 %v1105, %v1105
      %v1138 = vpack.c.bf16 %v1106, %v1106
      %v1139 = vpack.c.bf16 %v1107, %v1107
      %v1140 = vpack.c.bf16 %v1108, %v1108
      %v1141 = vpack.c.bf16 %v1109, %v1109
      %v1142 = vpack.c.bf16 %v1110, %v1110
      %v1143 = vpack.c.bf16 %v1111, %v1111
      %v1144 = vpack.c.bf16 %v1112, %v1112
      %v1145 = vpack.c.bf16 %v1113, %v1113
      %v1146 = vpack.c.bf16 %v1114, %v1114
      %v1147 = vpack.c.bf16 %v1115, %v1115
      %v1148 = vpack.c.bf16 %v1116, %v1116
      %v1149 = vpack.c.bf16 %v1117, %v1117
      %v1150 = vpack.c.bf16 %v1118, %v1118
      %v1151 = vpack.c.bf16 %v1119, %v1119
      %v1152 = vpack.c.bf16 %v1120, %v1120
      %v1153 = vpack.c.bf16 %v1121, %v1121
      %v1155 = vshrl.u32 %v1122, 16
      %v1157 = vrot.slane %v1155, 7
      %v1158 = vshll.u32 %v1122, 16
      %v1160 = vor.u32 %v1157, %v1158
      %v1161 = vrot.slane %v1157, 4
      %v1163 = vshrl.u32 %v1123, 16
      %v1165 = vrot.slane %v1163, 7
      %v1166 = vshll.u32 %v1123, 16
      %v1168 = vor.u32 %v1165, %v1166
      %v1169 = vsel %vm650, %v1161, %v1168
      %v1170 = vrot.slane %v1165, 4
      %v1172 = vshrl.u32 %v1124, 16
      %v1174 = vrot.slane %v1172, 7
      %v1175 = vshll.u32 %v1124, 16
      %v1177 = vor.u32 %v1174, %v1175
      %v1178 = vrot.slane %v1174, 4
      %v1180 = vshrl.u32 %v1125, 16
      %v1182 = vrot.slane %v1180, 7
      %v1183 = vshll.u32 %v1125, 16
      %v1185 = vor.u32 %v1182, %v1183
      %v1186 = vsel %vm650, %v1178, %v1185
      %v1187 = vrot.slane %v1182, 4
      %v1189 = vshrl.u32 %v1126, 16
      %v1191 = vrot.slane %v1189, 7
      %v1192 = vshll.u32 %v1126, 16
      %v1194 = vor.u32 %v1191, %v1192
      %v1195 = vrot.slane %v1191, 4
      %v1197 = vshrl.u32 %v1127, 16
      %v1199 = vrot.slane %v1197, 7
      %v1200 = vshll.u32 %v1127, 16
      %v1202 = vor.u32 %v1199, %v1200
      %v1203 = vsel %vm650, %v1195, %v1202
      %v1204 = vrot.slane %v1199, 4
      %v1206 = vshrl.u32 %v1128, 16
      %v1208 = vrot.slane %v1206, 7
      %v1209 = vshll.u32 %v1128, 16
      %v1211 = vor.u32 %v1208, %v1209
      %v1212 = vrot.slane %v1208, 4
      %v1214 = vshrl.u32 %v1129, 16
      %v1216 = vrot.slane %v1214, 7
      %v1217 = vshll.u32 %v1129, 16
      %v1219 = vor.u32 %v1216, %v1217
      %v1220 = vsel %vm650, %v1212, %v1219
      %v1221 = vrot.slane %v1216, 4
      %v1223 = vshrl.u32 %v1130, 16
      %v1225 = vrot.slane %v1223, 7
      %v1226 = vshll.u32 %v1130, 16
      %v1228 = vor.u32 %v1225, %v1226
      %v1229 = vrot.slane %v1225, 4
      %v1231 = vshrl.u32 %v1131, 16
      %v1233 = vrot.slane %v1231, 7
      %v1234 = vshll.u32 %v1131, 16
      %v1236 = vor.u32 %v1233, %v1234
      %v1237 = vsel %vm650, %v1229, %v1236
      %v1238 = vrot.slane %v1233, 4
      %v1240 = vshrl.u32 %v1132, 16
      %v1242 = vrot.slane %v1240, 7
      %v1243 = vshll.u32 %v1132, 16
      %v1245 = vor.u32 %v1242, %v1243
      %v1246 = vrot.slane %v1242, 4
      %v1248 = vshrl.u32 %v1133, 16
      %v1250 = vrot.slane %v1248, 7
      %v1251 = vshll.u32 %v1133, 16
      %v1253 = vor.u32 %v1250, %v1251
      %v1254 = vsel %vm650, %v1246, %v1253
      %v1255 = vrot.slane %v1250, 4
      %v1257 = vshrl.u32 %v1134, 16
      %v1259 = vrot.slane %v1257, 7
      %v1260 = vshll.u32 %v1134, 16
      %v1262 = vor.u32 %v1259, %v1260
      %v1263 = vrot.slane %v1259, 4
      %v1265 = vshrl.u32 %v1135, 16
      %v1267 = vrot.slane %v1265, 7
      %v1268 = vshll.u32 %v1135, 16
      %v1270 = vor.u32 %v1267, %v1268
      %v1271 = vsel %vm650, %v1263, %v1270
      %v1272 = vrot.slane %v1267, 4
      %v1274 = vshrl.u32 %v1136, 16
      %v1276 = vrot.slane %v1274, 7
      %v1277 = vshll.u32 %v1136, 16
      %v1279 = vor.u32 %v1276, %v1277
      %v1280 = vrot.slane %v1276, 4
      %v1282 = vshrl.u32 %v1137, 16
      %v1284 = vrot.slane %v1282, 7
      %v1285 = vshll.u32 %v1137, 16
      %v1287 = vor.u32 %v1284, %v1285
      %v1288 = vsel %vm650, %v1280, %v1287
      %v1289 = vrot.slane %v1284, 4
      %v1291 = vshrl.u32 %v1138, 16
      %v1293 = vrot.slane %v1291, 7
      %v1294 = vshll.u32 %v1138, 16
      %v1296 = vor.u32 %v1293, %v1294
      %v1297 = vrot.slane %v1293, 4
      %v1299 = vshrl.u32 %v1139, 16
      %v1301 = vrot.slane %v1299, 7
      %v1302 = vshll.u32 %v1139, 16
      %v1304 = vor.u32 %v1301, %v1302
      %v1305 = vsel %vm650, %v1297, %v1304
      %v1306 = vrot.slane %v1301, 4
      %v1308 = vshrl.u32 %v1140, 16
      %v1310 = vrot.slane %v1308, 7
      %v1311 = vshll.u32 %v1140, 16
      %v1313 = vor.u32 %v1310, %v1311
      %v1314 = vrot.slane %v1310, 4
      %v1316 = vshrl.u32 %v1141, 16
      %v1318 = vrot.slane %v1316, 7
      %v1319 = vshll.u32 %v1141, 16
      %v1321 = vor.u32 %v1318, %v1319
      %v1322 = vsel %vm650, %v1314, %v1321
      %v1323 = vrot.slane %v1318, 4
      %v1325 = vshrl.u32 %v1142, 16
      %v1327 = vrot.slane %v1325, 7
      %v1328 = vshll.u32 %v1142, 16
      %v1330 = vor.u32 %v1327, %v1328
      %v1331 = vrot.slane %v1327, 4
      %v1333 = vshrl.u32 %v1143, 16
      %v1335 = vrot.slane %v1333, 7
      %v1336 = vshll.u32 %v1143, 16
      %v1338 = vor.u32 %v1335, %v1336
      %v1339 = vsel %vm650, %v1331, %v1338
      %v1340 = vrot.slane %v1335, 4
      %v1342 = vshrl.u32 %v1144, 16
      %v1344 = vrot.slane %v1342, 7
      %v1345 = vshll.u32 %v1144, 16
      %v1347 = vor.u32 %v1344, %v1345
      %v1348 = vrot.slane %v1344, 4
      %v1350 = vshrl.u32 %v1145, 16
      %v1352 = vrot.slane %v1350, 7
      %v1353 = vshll.u32 %v1145, 16
      %v1355 = vor.u32 %v1352, %v1353
      %v1356 = vsel %vm650, %v1348, %v1355
      %v1357 = vrot.slane %v1352, 4
      %v1359 = vshrl.u32 %v1146, 16
      %v1361 = vrot.slane %v1359, 7
      %v1362 = vshll.u32 %v1146, 16
      %v1364 = vor.u32 %v1361, %v1362
      %v1365 = vrot.slane %v1361, 4
      %v1367 = vshrl.u32 %v1147, 16
      %v1369 = vrot.slane %v1367, 7
      %v1370 = vshll.u32 %v1147, 16
      %v1372 = vor.u32 %v1369, %v1370
      %v1373 = vsel %vm650, %v1365, %v1372
      %v1374 = vrot.slane %v1369, 4
      %v1376 = vshrl.u32 %v1148, 16
      %v1378 = vrot.slane %v1376, 7
      %v1379 = vshll.u32 %v1148, 16
      %v1381 = vor.u32 %v1378, %v1379
      %v1382 = vrot.slane %v1378, 4
      %v1384 = vshrl.u32 %v1149, 16
      %v1386 = vrot.slane %v1384, 7
      %v1387 = vshll.u32 %v1149, 16
      %v1389 = vor.u32 %v1386, %v1387
      %v1390 = vsel %vm650, %v1382, %v1389
      %v1391 = vrot.slane %v1386, 4
      %v1393 = vshrl.u32 %v1150, 16
      %v1395 = vrot.slane %v1393, 7
      %v1396 = vshll.u32 %v1150, 16
      %v1398 = vor.u32 %v1395, %v1396
      %v1399 = vrot.slane %v1395, 4
      %v1401 = vshrl.u32 %v1151, 16
      %v1403 = vrot.slane %v1401, 7
      %v1404 = vshll.u32 %v1151, 16
      %v1406 = vor.u32 %v1403, %v1404
      %v1407 = vsel %vm650, %v1399, %v1406
      %v1408 = vrot.slane %v1403, 4
      %v1410 = vshrl.u32 %v1152, 16
      %v1412 = vrot.slane %v1410, 7
      %v1413 = vshll.u32 %v1152, 16
      %v1415 = vor.u32 %v1412, %v1413
      %v1416 = vrot.slane %v1412, 4
      %v1418 = vshrl.u32 %v1153, 16
      %v1420 = vrot.slane %v1418, 7
      %v1421 = vshll.u32 %v1153, 16
      %v1423 = vor.u32 %v1420, %v1421
      %v1424 = vsel %vm650, %v1416, %v1423
      %v1425 = vrot.slane %v1420, 4
      %1426 = vrot.lane.b32.xlu0 %v1160, 4
      %v1427 = vpop.permute.xlu0 %1426
      %1428 = vrot.lane.b32.xlu0 %v1169, 4
      %v1429 = vpop.permute.xlu0 %1428
      %1430 = vrot.lane.b32.xlu0 %v1170, 4
      %v1431 = vpop.permute.xlu0 %1430
      %1432 = vrot.lane.b32.xlu0 %v1177, 4
      %v1433 = vpop.permute.xlu0 %1432
      %1434 = vrot.lane.b32.xlu0 %v1186, 4
      %v1435 = vpop.permute.xlu0 %1434
      %1436 = vrot.lane.b32.xlu0 %v1187, 4
      %v1437 = vpop.permute.xlu0 %1436
      %1438 = vrot.lane.b32.xlu0 %v1194, 4
      %v1439 = vpop.permute.xlu0 %1438
      %1440 = vrot.lane.b32.xlu0 %v1203, 4
      %v1441 = vpop.permute.xlu0 %1440
      %1442 = vrot.lane.b32.xlu0 %v1204, 4
      %v1443 = vpop.permute.xlu0 %1442
      %1444 = vrot.lane.b32.xlu0 %v1211, 4
      %v1445 = vpop.permute.xlu0 %1444
      %1446 = vrot.lane.b32.xlu0 %v1220, 4
      %v1447 = vpop.permute.xlu0 %1446
      %1448 = vrot.lane.b32.xlu0 %v1221, 4
      %v1449 = vpop.permute.xlu0 %1448
      %1450 = vrot.lane.b32.xlu0 %v1228, 4
      %v1451 = vpop.permute.xlu0 %1450
      %1452 = vrot.lane.b32.xlu0 %v1237, 4
      %v1453 = vpop.permute.xlu0 %1452
      %1454 = vrot.lane.b32.xlu0 %v1238, 4
      %v1455 = vpop.permute.xlu0 %1454
      %1456 = vrot.lane.b32.xlu0 %v1245, 4
      %v1457 = vpop.permute.xlu0 %1456
      %1458 = vrot.lane.b32.xlu0 %v1254, 4
      %v1459 = vpop.permute.xlu0 %1458
      %1460 = vrot.lane.b32.xlu0 %v1255, 4
      %v1461 = vpop.permute.xlu0 %1460
      %1462 = vrot.lane.b32.xlu0 %v1262, 4
      %v1463 = vpop.permute.xlu0 %1462
      %1464 = vrot.lane.b32.xlu0 %v1271, 4
      %v1465 = vpop.permute.xlu0 %1464
      %1466 = vrot.lane.b32.xlu0 %v1272, 4
      %v1467 = vpop.permute.xlu0 %1466
      %1468 = vrot.lane.b32.xlu0 %v1279, 4
      %v1469 = vpop.permute.xlu0 %1468
      %1470 = vrot.lane.b32.xlu0 %v1288, 4
      %v1471 = vpop.permute.xlu0 %1470
      %1472 = vrot.lane.b32.xlu0 %v1289, 4
      %v1473 = vpop.permute.xlu0 %1472
      %1474 = vrot.lane.b32.xlu0 %v1296, 4
      %v1475 = vpop.permute.xlu0 %1474
      %1476 = vrot.lane.b32.xlu0 %v1305, 4
      %v1477 = vpop.permute.xlu0 %1476
      %1478 = vrot.lane.b32.xlu0 %v1306, 4
      %v1479 = vpop.permute.xlu0 %1478
      %1480 = vrot.lane.b32.xlu0 %v1313, 4
      %v1481 = vpop.permute.xlu0 %1480
      %1482 = vrot.lane.b32.xlu0 %v1322, 4
      %v1483 = vpop.permute.xlu0 %1482
      %1484 = vrot.lane.b32.xlu0 %v1323, 4
      %v1485 = vpop.permute.xlu0 %1484
      %1486 = vrot.lane.b32.xlu0 %v1330, 4
      %v1487 = vpop.permute.xlu0 %1486
      %1488 = vrot.lane.b32.xlu0 %v1339, 4
      %v1489 = vpop.permute.xlu0 %1488
      %1490 = vrot.lane.b32.xlu0 %v1340, 4
      %v1491 = vpop.permute.xlu0 %1490
      %1492 = vrot.lane.b32.xlu0 %v1347, 4
      %v1493 = vpop.permute.xlu0 %1492
      %1494 = vrot.lane.b32.xlu0 %v1356, 4
      %v1495 = vpop.permute.xlu0 %1494
      %1496 = vrot.lane.b32.xlu0 %v1357, 4
      %v1497 = vpop.permute.xlu0 %1496
      %1498 = vrot.lane.b32.xlu0 %v1364, 4
      %v1499 = vpop.permute.xlu0 %1498
      %1500 = vrot.lane.b32.xlu0 %v1373, 4
      %v1501 = vpop.permute.xlu0 %1500
      %1502 = vrot.lane.b32.xlu0 %v1374, 4
      %v1503 = vpop.permute.xlu0 %1502
      %1504 = vrot.lane.b32.xlu0 %v1381, 4
      %v1505 = vpop.permute.xlu0 %1504
      %1506 = vrot.lane.b32.xlu0 %v1390, 4
      %v1507 = vpop.permute.xlu0 %1506
      %1508 = vrot.lane.b32.xlu0 %v1391, 4
      %v1509 = vpop.permute.xlu0 %1508
      %1510 = vrot.lane.b32.xlu0 %v1398, 4
      %v1511 = vpop.permute.xlu0 %1510
      %1512 = vrot.lane.b32.xlu0 %v1407, 4
      %v1513 = vpop.permute.xlu0 %1512
      %1514 = vrot.lane.b32.xlu0 %v1408, 4
      %v1515 = vpop.permute.xlu0 %1514
      %1516 = vrot.lane.b32.xlu0 %v1415, 4
      %v1517 = vpop.permute.xlu0 %1516
      %1518 = vrot.lane.b32.xlu0 %v1424, 4
      %v1519 = vpop.permute.xlu0 %1518
      %1520 = vrot.lane.b32.xlu0 %v1425, 4
      %v1521 = vpop.permute.xlu0 %1520
      %vm1570 = vcmask 60448
      %vm1571 = vmand %vm1570, %vm973
      %v1572 = vld [vmem:[%s971] sm:$0xf]
      %v1573 = vsel %vm1571, %v1427, %v1572
      %1574 = vst [vmem:[%s971] sm:$0xf] %v1573
      %vm1575 = vcmask 60448
      %1576 = vst.msk [vmem:[%s971 + $0x4] sm:$0xf] %vm1575, %v1429
      %vm1577 = vcmask 57376
      %vm1578 = vmand %vm1577, %vm648
      %v1579 = vld [vmem:[%s971 + $0x8] sm:$0x1]
      %v1580 = vsel %vm1578, %v1431, %v1579
      %1581 = vst [vmem:[%s971 + $0x8] sm:$0x1] %v1580
      %v1582 = vld [vmem:[%s971 + $0xc] sm:$0xf]
      %v1583 = vsel %vm1571, %v1433, %v1582
      %1584 = vst [vmem:[%s971 + $0xc] sm:$0xf] %v1583
      %1585 = vst.msk [vmem:[%s971 + $0x10] sm:$0xf] %vm1575, %v1435
      %v1586 = vld [vmem:[%s971 + $0x14] sm:$0x1]
      %v1587 = vsel %vm1578, %v1437, %v1586
      %1588 = vst [vmem:[%s971 + $0x14] sm:$0x1] %v1587
      %v1589 = vld [vmem:[%s971 + $0x18] sm:$0xf]
      %v1590 = vsel %vm1571, %v1439, %v1589
      %1591 = vst [vmem:[%s971 + $0x18] sm:$0xf] %v1590
      %1592 = vst.msk [vmem:[%s971 + $0x1c] sm:$0xf] %vm1575, %v1441
      %v1593 = vld [vmem:[%s971 + $0x20] sm:$0x1]
      %v1594 = vsel %vm1578, %v1443, %v1593
      %1595 = vst [vmem:[%s971 + $0x20] sm:$0x1] %v1594
      %v1596 = vld [vmem:[%s971 + $0x24] sm:$0xf]
      %v1597 = vsel %vm1571, %v1445, %v1596
      %1598 = vst [vmem:[%s971 + $0x24] sm:$0xf] %v1597
      %1599 = vst.msk [vmem:[%s971 + $0x28] sm:$0xf] %vm1575, %v1447
      %v1600 = vld [vmem:[%s971 + $0x2c] sm:$0x1]
      %v1601 = vsel %vm1578, %v1449, %v1600
      %1602 = vst [vmem:[%s971 + $0x2c] sm:$0x1] %v1601
      %v1603 = vld [vmem:[%s971 + $0x30] sm:$0xf]
      %v1604 = vsel %vm1571, %v1451, %v1603
      %1605 = vst [vmem:[%s971 + $0x30] sm:$0xf] %v1604
      %1606 = vst.msk [vmem:[%s971 + $0x34] sm:$0xf] %vm1575, %v1453
      %v1607 = vld [vmem:[%s971 + $0x38] sm:$0x1]
      %v1608 = vsel %vm1578, %v1455, %v1607
      %1609 = vst [vmem:[%s971 + $0x38] sm:$0x1] %v1608
      %v1610 = vld [vmem:[%s971 + $0x3c] sm:$0xf]
      %v1611 = vsel %vm1571, %v1457, %v1610
      %1612 = vst [vmem:[%s971 + $0x3c] sm:$0xf] %v1611
      %1613 = vst.msk [vmem:[%s971 + $0x40] sm:$0xf] %vm1575, %v1459
      %v1614 = vld [vmem:[%s971 + $0x44] sm:$0x1]
      %v1615 = vsel %vm1578, %v1461, %v1614
      %1616 = vst [vmem:[%s971 + $0x44] sm:$0x1] %v1615
      %v1617 = vld [vmem:[%s971 + $0x48] sm:$0xf]
      %v1618 = vsel %vm1571, %v1463, %v1617
      %1619 = vst [vmem:[%s971 + $0x48] sm:$0xf] %v1618
      %1620 = vst.msk [vmem:[%s971 + $0x4c] sm:$0xf] %vm1575, %v1465
      %v1621 = vld [vmem:[%s971 + $0x50] sm:$0x1]
      %v1622 = vsel %vm1578, %v1467, %v1621
      %1623 = vst [vmem:[%s971 + $0x50] sm:$0x1] %v1622
      %v1624 = vld [vmem:[%s971 + $0x54] sm:$0xf]
      %v1625 = vsel %vm1571, %v1469, %v1624
      %1626 = vst [vmem:[%s971 + $0x54] sm:$0xf] %v1625
      %1627 = vst.msk [vmem:[%s971 + $0x58] sm:$0xf] %vm1575, %v1471
      %v1628 = vld [vmem:[%s971 + $0x5c] sm:$0x1]
      %v1629 = vsel %vm1578, %v1473, %v1628
      %1630 = vst [vmem:[%s971 + $0x5c] sm:$0x1] %v1629
      %v1631 = vld [vmem:[%s971 + $0x60] sm:$0xf]
      %v1632 = vsel %vm1571, %v1475, %v1631
      %1633 = vst [vmem:[%s971 + $0x60] sm:$0xf] %v1632
      %1634 = vst.msk [vmem:[%s971 + $0x64] sm:$0xf] %vm1575, %v1477
      %v1635 = vld [vmem:[%s971 + $0x68] sm:$0x1]
      %v1636 = vsel %vm1578, %v1479, %v1635
      %1637 = vst [vmem:[%s971 + $0x68] sm:$0x1] %v1636
      %v1638 = vld [vmem:[%s971 + $0x6c] sm:$0xf]
      %v1639 = vsel %vm1571, %v1481, %v1638
      %1640 = vst [vmem:[%s971 + $0x6c] sm:$0xf] %v1639
      %1641 = vst.msk [vmem:[%s971 + $0x70] sm:$0xf] %vm1575, %v1483
      %v1642 = vld [vmem:[%s971 + $0x74] sm:$0x1]
      %v1643 = vsel %vm1578, %v1485, %v1642
      %1644 = vst [vmem:[%s971 + $0x74] sm:$0x1] %v1643
      %v1645 = vld [vmem:[%s971 + $0x78] sm:$0xf]
      %v1646 = vsel %vm1571, %v1487, %v1645
      %1647 = vst [vmem:[%s971 + $0x78] sm:$0xf] %v1646
      %1648 = vst.msk [vmem:[%s971 + $0x7c] sm:$0xf] %vm1575, %v1489
      %v1649 = vld [vmem:[%s971 + $0x80] sm:$0x1]
      %v1650 = vsel %vm1578, %v1491, %v1649
      %1651 = vst [vmem:[%s971 + $0x80] sm:$0x1] %v1650
      %v1652 = vld [vmem:[%s971 + $0x84] sm:$0xf]
      %v1653 = vsel %vm1571, %v1493, %v1652
      %1654 = vst [vmem:[%s971 + $0x84] sm:$0xf] %v1653
      %1655 = vst.msk [vmem:[%s971 + $0x88] sm:$0xf] %vm1575, %v1495
      %v1656 = vld [vmem:[%s971 + $0x8c] sm:$0x1]
      %v1657 = vsel %vm1578, %v1497, %v1656
      %1658 = vst [vmem:[%s971 + $0x8c] sm:$0x1] %v1657
      %v1659 = vld [vmem:[%s971 + $0x90] sm:$0xf]
      %v1660 = vsel %vm1571, %v1499, %v1659
      %1661 = vst [vmem:[%s971 + $0x90] sm:$0xf] %v1660
      %1662 = vst.msk [vmem:[%s971 + $0x94] sm:$0xf] %vm1575, %v1501
      %v1663 = vld [vmem:[%s971 + $0x98] sm:$0x1]
      %v1664 = vsel %vm1578, %v1503, %v1663
      %1665 = vst [vmem:[%s971 + $0x98] sm:$0x1] %v1664
      %v1666 = vld [vmem:[%s971 + $0x9c] sm:$0xf]
      %v1667 = vsel %vm1571, %v1505, %v1666
      %1668 = vst [vmem:[%s971 + $0x9c] sm:$0xf] %v1667
      %1669 = vst.msk [vmem:[%s971 + $0xa0] sm:$0xf] %vm1575, %v1507
      %v1670 = vld [vmem:[%s971 + $0xa4] sm:$0x1]
      %v1671 = vsel %vm1578, %v1509, %v1670
      %1672 = vst [vmem:[%s971 + $0xa4] sm:$0x1] %v1671
      %v1673 = vld [vmem:[%s971 + $0xa8] sm:$0xf]
      %v1674 = vsel %vm1571, %v1511, %v1673
      %1675 = vst [vmem:[%s971 + $0xa8] sm:$0xf] %v1674
      %1676 = vst.msk [vmem:[%s971 + $0xac] sm:$0xf] %vm1575, %v1513
      %v1677 = vld [vmem:[%s971 + $0xb0] sm:$0x1]
      %v1678 = vsel %vm1578, %v1515, %v1677
      %1679 = vst [vmem:[%s971 + $0xb0] sm:$0x1] %v1678
      %v1680 = vld [vmem:[%s971 + $0xb4] sm:$0xf]
      %v1681 = vsel %vm1571, %v1517, %v1680
      %1682 = vst [vmem:[%s971 + $0xb4] sm:$0xf] %v1681
      %1683 = vst.msk [vmem:[%s971 + $0xb8] sm:$0xf] %vm1575, %v1519
      %v1684 = vld [vmem:[%s971 + $0xbc] sm:$0x1]
      %v1685 = vsel %vm1578, %v1521, %v1684
      %1686 = vst [vmem:[%s971 + $0xbc] sm:$0x1] %v1685
      %v1687 = vld [vmem:[#allocation2] sm:$0xf]
      %v1688 = vld [vmem:[#allocation2 + $0x4] sm:$0xf]
      %v1689 = vld [vmem:[#allocation2 + $0xc] sm:$0xf]
      %v1690 = vld [vmem:[#allocation2 + $0x10] sm:$0xf]
      %v1691 = vld [vmem:[#allocation2 + $0x18] sm:$0xf]
      %v1692 = vld [vmem:[#allocation2 + $0x1c] sm:$0xf]
      %v1693 = vld [vmem:[#allocation2 + $0x24] sm:$0xf]
      %v1694 = vld [vmem:[#allocation2 + $0x28] sm:$0xf]
      %v1695 = vld [vmem:[#allocation2 + $0x30] sm:$0xf]
      %v1696 = vld [vmem:[#allocation2 + $0x34] sm:$0xf]
      %v1697 = vld [vmem:[#allocation2 + $0x3c] sm:$0xf]
      %v1698 = vld [vmem:[#allocation2 + $0x40] sm:$0xf]
      %v1699 = vld [vmem:[#allocation2 + $0x48] sm:$0xf]
      %v1700 = vld [vmem:[#allocation2 + $0x4c] sm:$0xf]
      %v1701 = vld [vmem:[#allocation2 + $0x54] sm:$0xf]
      %v1702 = vld [vmem:[#allocation2 + $0x58] sm:$0xf]
      %v1703 = vld [vmem:[#allocation2 + $0x60] sm:$0xf]
      %v1704 = vld [vmem:[#allocation2 + $0x64] sm:$0xf]
      %v1705 = vld [vmem:[#allocation2 + $0x6c] sm:$0xf]
      %v1706 = vld [vmem:[#allocation2 + $0x70] sm:$0xf]
      %v1707 = vld [vmem:[#allocation2 + $0x78] sm:$0xf]
      %v1708 = vld [vmem:[#allocation2 + $0x7c] sm:$0xf]
      %v1709 = vld [vmem:[#allocation2 + $0x84] sm:$0xf]
      %v1710 = vld [vmem:[#allocation2 + $0x88] sm:$0xf]
      %v1711 = vld [vmem:[#allocation2 + $0x90] sm:$0xf]
      %v1712 = vld [vmem:[#allocation2 + $0x94] sm:$0xf]
      %v1713 = vld [vmem:[#allocation2 + $0x9c] sm:$0xf]
      %v1714 = vld [vmem:[#allocation2 + $0xa0] sm:$0xf]
      %v1715 = vld [vmem:[#allocation2 + $0xa8] sm:$0xf]
      %v1716 = vld [vmem:[#allocation2 + $0xac] sm:$0xf]
      %v1717 = vld [vmem:[#allocation2 + $0xb4] sm:$0xf]
      %v1718 = vld [vmem:[#allocation2 + $0xb8] sm:$0xf]
      %v1719 = vld [vmem:[#allocation2 + $0xc0] sm:$0xf]
      %v1720 = vld [vmem:[#allocation2 + $0xc4] sm:$0xf]
      %v1721 = vld [vmem:[#allocation2 + $0xcc] sm:$0xf]
      %v1722 = vld [vmem:[#allocation2 + $0xd0] sm:$0xf]
      %v1723 = vld [vmem:[#allocation2 + $0x8] sm:$0x1]
      %v1724 = vld [vmem:[#allocation2 + $0x14] sm:$0x1]
      %v1725 = vld [vmem:[#allocation2 + $0x20] sm:$0x1]
      %v1726 = vld [vmem:[#allocation2 + $0x2c] sm:$0x1]
      %v1727 = vld [vmem:[#allocation2 + $0x38] sm:$0x1]
      %v1728 = vld [vmem:[#allocation2 + $0x44] sm:$0x1]
      %v1729 = vld [vmem:[#allocation2 + $0x50] sm:$0x1]
      %v1730 = vld [vmem:[#allocation2 + $0x5c] sm:$0x1]
      %v1731 = vld [vmem:[#allocation2 + $0x68] sm:$0x1]
      %v1732 = vld [vmem:[#allocation2 + $0x74] sm:$0x1]
      %v1733 = vld [vmem:[#allocation2 + $0x80] sm:$0x1]
      %v1734 = vld [vmem:[#allocation2 + $0x8c] sm:$0x1]
      %v1735 = vld [vmem:[#allocation2 + $0x98] sm:$0x1]
      %v1736 = vld [vmem:[#allocation2 + $0xa4] sm:$0x1]
      %v1737 = vld [vmem:[#allocation2 + $0xb0] sm:$0x1]
      %v1738 = vld [vmem:[#allocation2 + $0xbc] sm:$0x1]
      %v1739 = vld [vmem:[#allocation2 + $0xc8] sm:$0x1]
      %v1740 = vld [vmem:[#allocation2 + $0xd4] sm:$0x1]
      %v1741 = vld [vmem:[#allocation2] sm:$0xe]
      %v1742 = vld [vmem:[#allocation2 + $0xc] sm:$0xe]
      %v1743 = vld [vmem:[#allocation2 + $0x18] sm:$0xe]
      %v1744 = vld [vmem:[#allocation2 + $0x24] sm:$0xe]
      %v1745 = vld [vmem:[#allocation2 + $0x30] sm:$0xe]
      %v1746 = vld [vmem:[#allocation2 + $0x3c] sm:$0xe]
      %v1747 = vld [vmem:[#allocation2 + $0x48] sm:$0xe]
      %v1748 = vld [vmem:[#allocation2 + $0x54] sm:$0xe]
      %v1749 = vld [vmem:[#allocation2 + $0x60] sm:$0xe]
      %v1750 = vld [vmem:[#allocation2 + $0x6c] sm:$0xe]
      %v1751 = vld [vmem:[#allocation2 + $0x78] sm:$0xe]
      %v1752 = vld [vmem:[#allocation2 + $0x84] sm:$0xe]
      %v1753 = vld [vmem:[#allocation2 + $0x90] sm:$0xe]
      %v1754 = vld [vmem:[#allocation2 + $0x9c] sm:$0xe]
      %v1755 = vld [vmem:[#allocation2 + $0xa8] sm:$0xe]
      %v1756 = vld [vmem:[#allocation2 + $0xb4] sm:$0xe]
      %v1757 = vld [vmem:[#allocation2 + $0xc0] sm:$0xe]
      %v1758 = vld [vmem:[#allocation2 + $0xcc] sm:$0xe]
      %v1791 = vunpack.c.l.b16 %v1687
      %v1792 = vunpack.c.l.b16 %v1688
      %v1793 = vunpack.c.l.b16 %v1689
      %v1794 = vunpack.c.l.b16 %v1690
      %v1795 = vunpack.c.l.b16 %v1691
      %v1796 = vunpack.c.l.b16 %v1692
      %v1797 = vunpack.c.l.b16 %v1693
      %v1798 = vunpack.c.l.b16 %v1694
      %v1799 = vunpack.c.l.b16 %v1695
      %v1800 = vunpack.c.l.b16 %v1696
      %v1801 = vunpack.c.l.b16 %v1697
      %v1802 = vunpack.c.l.b16 %v1698
      %v1803 = vunpack.c.l.b16 %v1699
      %v1804 = vunpack.c.l.b16 %v1700
      %v1805 = vunpack.c.l.b16 %v1701
      %v1806 = vunpack.c.l.b16 %v1702
      %v1807 = vunpack.c.l.b16 %v1703
      %v1808 = vunpack.c.l.b16 %v1704
      %v1809 = vunpack.c.l.b16 %v1705
      %v1810 = vunpack.c.l.b16 %v1706
      %v1811 = vunpack.c.l.b16 %v1707
      %v1812 = vunpack.c.l.b16 %v1708
      %v1813 = vunpack.c.l.b16 %v1709
      %v1814 = vunpack.c.l.b16 %v1710
      %v1815 = vunpack.c.l.b16 %v1711
      %v1816 = vunpack.c.l.b16 %v1712
      %v1817 = vunpack.c.l.b16 %v1713
      %v1818 = vunpack.c.l.b16 %v1714
      %v1819 = vunpack.c.l.b16 %v1715
      %v1820 = vunpack.c.l.b16 %v1716
      %v1821 = vunpack.c.l.b16 %v1717
      %v1822 = vunpack.c.l.b16 %v1718
      %v1823 = vpack.c.b16 %v1792, %v1791
      %v1824 = vpack.c.b16 %v1794, %v1793
      %v1825 = vpack.c.b16 %v1796, %v1795
      %v1826 = vpack.c.b16 %v1798, %v1797
      %v1827 = vpack.c.b16 %v1800, %v1799
      %v1828 = vpack.c.b16 %v1802, %v1801
      %v1829 = vpack.c.b16 %v1804, %v1803
      %v1830 = vpack.c.b16 %v1806, %v1805
      %v1831 = vpack.c.b16 %v1808, %v1807
      %v1832 = vpack.c.b16 %v1810, %v1809
      %v1833 = vpack.c.b16 %v1812, %v1811
      %v1834 = vpack.c.b16 %v1814, %v1813
      %v1835 = vpack.c.b16 %v1816, %v1815
      %v1836 = vpack.c.b16 %v1818, %v1817
      %v1837 = vpack.c.b16 %v1820, %v1819
      %v1838 = vpack.c.b16 %v1822, %v1821
      %v1871 = vunpack.c.l.b16 %v1723
      %v1872 = vunpack.c.l.b16 %v1724
      %v1873 = vunpack.c.l.b16 %v1725
      %v1874 = vunpack.c.l.b16 %v1726
      %v1875 = vunpack.c.l.b16 %v1727
      %v1876 = vunpack.c.l.b16 %v1728
      %v1877 = vunpack.c.l.b16 %v1729
      %v1878 = vunpack.c.l.b16 %v1730
      %v1879 = vunpack.c.l.b16 %v1731
      %v1880 = vunpack.c.l.b16 %v1732
      %v1881 = vunpack.c.l.b16 %v1733
      %v1882 = vunpack.c.l.b16 %v1734
      %v1883 = vunpack.c.l.b16 %v1735
      %v1884 = vunpack.c.l.b16 %v1736
      %v1885 = vunpack.c.l.b16 %v1737
      %v1886 = vunpack.c.l.b16 %v1738
      %v1887 = vpack.c.b16 %v1871, %v1871
      %v1888 = vpack.c.b16 %v1872, %v1872
      %v1889 = vpack.c.b16 %v1873, %v1873
      %v1890 = vpack.c.b16 %v1874, %v1874
      %v1891 = vpack.c.b16 %v1875, %v1875
      %v1892 = vpack.c.b16 %v1876, %v1876
      %v1893 = vpack.c.b16 %v1877, %v1877
      %v1894 = vpack.c.b16 %v1878, %v1878
      %v1895 = vpack.c.b16 %v1879, %v1879
      %v1896 = vpack.c.b16 %v1880, %v1880
      %v1897 = vpack.c.b16 %v1881, %v1881
      %v1898 = vpack.c.b16 %v1882, %v1882
      %v1899 = vpack.c.b16 %v1883, %v1883
      %v1900 = vpack.c.b16 %v1884, %v1884
      %v1901 = vpack.c.b16 %v1885, %v1885
      %v1902 = vpack.c.b16 %v1886, %v1886
      %vm1903 = vsmask.f32 7424
      %v1905 = vshrl.u32 %v1823, 16
      %v1907 = vshll.u32 %v1823, 16
      %v1909 = vrot.slane %v1907, 1
      %v1910 = vor.u32 %v1905, %v1909
      %v1912 = vshll.u32 %v1887, 16
      %v1914 = vrot.slane %v1912, 1
      %v1915 = vsel %vm1903, %v1910, %v1914
      %v1917 = vshrl.u32 %v1824, 16
      %v1919 = vshll.u32 %v1824, 16
      %v1921 = vrot.slane %v1919, 1
      %v1922 = vor.u32 %v1917, %v1921
      %v1924 = vshll.u32 %v1888, 16
      %v1926 = vrot.slane %v1924, 1
      %v1927 = vsel %vm1903, %v1922, %v1926
      %v1929 = vshrl.u32 %v1825, 16
      %v1931 = vshll.u32 %v1825, 16
      %v1933 = vrot.slane %v1931, 1
      %v1934 = vor.u32 %v1929, %v1933
      %v1936 = vshll.u32 %v1889, 16
      %v1938 = vrot.slane %v1936, 1
      %v1939 = vsel %vm1903, %v1934, %v1938
      %v1941 = vshrl.u32 %v1826, 16
      %v1943 = vshll.u32 %v1826, 16
      %v1945 = vrot.slane %v1943, 1
      %v1946 = vor.u32 %v1941, %v1945
      %v1948 = vshll.u32 %v1890, 16
      %v1950 = vrot.slane %v1948, 1
      %v1951 = vsel %vm1903, %v1946, %v1950
      %v1953 = vshrl.u32 %v1827, 16
      %v1955 = vshll.u32 %v1827, 16
      %v1957 = vrot.slane %v1955, 1
      %v1958 = vor.u32 %v1953, %v1957
      %v1960 = vshll.u32 %v1891, 16
      %v1962 = vrot.slane %v1960, 1
      %v1963 = vsel %vm1903, %v1958, %v1962
      %v1965 = vshrl.u32 %v1828, 16
      %v1967 = vshll.u32 %v1828, 16
      %v1969 = vrot.slane %v1967, 1
      %v1970 = vor.u32 %v1965, %v1969
      %v1972 = vshll.u32 %v1892, 16
      %v1974 = vrot.slane %v1972, 1
      %v1975 = vsel %vm1903, %v1970, %v1974
      %v1977 = vshrl.u32 %v1829, 16
      %v1979 = vshll.u32 %v1829, 16
      %v1981 = vrot.slane %v1979, 1
      %v1982 = vor.u32 %v1977, %v1981
      %v1984 = vshll.u32 %v1893, 16
      %v1986 = vrot.slane %v1984, 1
      %v1987 = vsel %vm1903, %v1982, %v1986
      %v1989 = vshrl.u32 %v1830, 16
      %v1991 = vshll.u32 %v1830, 16
      %v1993 = vrot.slane %v1991, 1
      %v1994 = vor.u32 %v1989, %v1993
      %v1996 = vshll.u32 %v1894, 16
      %v1998 = vrot.slane %v1996, 1
      %v1999 = vsel %vm1903, %v1994, %v1998
      %v2001 = vshrl.u32 %v1831, 16
      %v2003 = vshll.u32 %v1831, 16
      %v2005 = vrot.slane %v2003, 1
      %v2006 = vor.u32 %v2001, %v2005
      %v2008 = vshll.u32 %v1895, 16
      %v2010 = vrot.slane %v2008, 1
      %v2011 = vsel %vm1903, %v2006, %v2010
      %v2013 = vshrl.u32 %v1832, 16
      %v2015 = vshll.u32 %v1832, 16
      %v2017 = vrot.slane %v2015, 1
      %v2018 = vor.u32 %v2013, %v2017
      %v2020 = vshll.u32 %v1896, 16
      %v2022 = vrot.slane %v2020, 1
      %v2023 = vsel %vm1903, %v2018, %v2022
      %v2025 = vshrl.u32 %v1833, 16
      %v2027 = vshll.u32 %v1833, 16
      %v2029 = vrot.slane %v2027, 1
      %v2030 = vor.u32 %v2025, %v2029
      %v2032 = vshll.u32 %v1897, 16
      %v2034 = vrot.slane %v2032, 1
      %v2035 = vsel %vm1903, %v2030, %v2034
      %v2037 = vshrl.u32 %v1834, 16
      %v2039 = vshll.u32 %v1834, 16
      %v2041 = vrot.slane %v2039, 1
      %v2042 = vor.u32 %v2037, %v2041
      %v2044 = vshll.u32 %v1898, 16
      %v2046 = vrot.slane %v2044, 1
      %v2047 = vsel %vm1903, %v2042, %v2046
      %v2049 = vshrl.u32 %v1835, 16
      %v2051 = vshll.u32 %v1835, 16
      %v2053 = vrot.slane %v2051, 1
      %v2054 = vor.u32 %v2049, %v2053
      %v2056 = vshll.u32 %v1899, 16
      %v2058 = vrot.slane %v2056, 1
      %v2059 = vsel %vm1903, %v2054, %v2058
      %v2061 = vshrl.u32 %v1836, 16
      %v2063 = vshll.u32 %v1836, 16
      %v2065 = vrot.slane %v2063, 1
      %v2066 = vor.u32 %v2061, %v2065
      %v2068 = vshll.u32 %v1900, 16
      %v2070 = vrot.slane %v2068, 1
      %v2071 = vsel %vm1903, %v2066, %v2070
      %v2073 = vshrl.u32 %v1837, 16
      %v2075 = vshll.u32 %v1837, 16
      %v2077 = vrot.slane %v2075, 1
      %v2078 = vor.u32 %v2073, %v2077
      %v2080 = vshll.u32 %v1901, 16
      %v2082 = vrot.slane %v2080, 1
      %v2083 = vsel %vm1903, %v2078, %v2082
      %v2085 = vshrl.u32 %v1838, 16
      %v2087 = vshll.u32 %v1838, 16
      %v2089 = vrot.slane %v2087, 1
      %v2090 = vor.u32 %v2085, %v2089
      %v2092 = vshll.u32 %v1902, 16
      %v2094 = vrot.slane %v2092, 1
      %v2095 = vsel %vm1903, %v2090, %v2094
      %v2128 = vunpack.c.l.b16 %v1741
      %v2129 = vunpack.c.l.b16 %v1742
      %v2130 = vunpack.c.l.b16 %v1743
      %v2131 = vunpack.c.l.b16 %v1744
      %v2132 = vunpack.c.l.b16 %v1745
      %v2133 = vunpack.c.l.b16 %v1746
      %v2134 = vunpack.c.l.b16 %v1747
      %v2135 = vunpack.c.l.b16 %v1748
      %v2136 = vunpack.c.l.b16 %v1749
      %v2137 = vunpack.c.l.b16 %v1750
      %v2138 = vunpack.c.l.b16 %v1751
      %v2139 = vunpack.c.l.b16 %v1752
      %v2140 = vunpack.c.l.b16 %v1753
      %v2141 = vunpack.c.l.b16 %v1754
      %v2142 = vunpack.c.l.b16 %v1755
      %v2143 = vunpack.c.l.b16 %v1756
      %v2144 = vpack.c.b16 %v1792, %v2128
      %v2145 = vpack.c.b16 %v1794, %v2129
      %v2146 = vpack.c.b16 %v1796, %v2130
      %v2147 = vpack.c.b16 %v1798, %v2131
      %v2148 = vpack.c.b16 %v1800, %v2132
      %v2149 = vpack.c.b16 %v1802, %v2133
      %v2150 = vpack.c.b16 %v1804, %v2134
      %v2151 = vpack.c.b16 %v1806, %v2135
      %v2152 = vpack.c.b16 %v1808, %v2136
      %v2153 = vpack.c.b16 %v1810, %v2137
      %v2154 = vpack.c.b16 %v1812, %v2138
      %v2155 = vpack.c.b16 %v1814, %v2139
      %v2156 = vpack.c.b16 %v1816, %v2140
      %v2157 = vpack.c.b16 %v1818, %v2141
      %v2158 = vpack.c.b16 %v1820, %v2142
      %v2159 = vpack.c.b16 %v1822, %v2143
      %vm2160 = vcmask 1046528
      %v2161 = vrot.slane %v2144, 1
      %v2162 = vrot.slane %v1887, 1
      %v2163 = vsel %vm2160, %v2161, %v2162
      %v2164 = vrot.slane %v2145, 1
      %v2165 = vrot.slane %v1888, 1
      %v2166 = vsel %vm2160, %v2164, %v2165
      %v2167 = vrot.slane %v2146, 1
      %v2168 = vrot.slane %v1889, 1
      %v2169 = vsel %vm2160, %v2167, %v2168
      %v2170 = vrot.slane %v2147, 1
      %v2171 = vrot.slane %v1890, 1
      %v2172 = vsel %vm2160, %v2170, %v2171
      %v2173 = vrot.slane %v2148, 1
      %v2174 = vrot.slane %v1891, 1
      %v2175 = vsel %vm2160, %v2173, %v2174
      %v2176 = vrot.slane %v2149, 1
      %v2177 = vrot.slane %v1892, 1
      %v2178 = vsel %vm2160, %v2176, %v2177
      %v2179 = vrot.slane %v2150, 1
      %v2180 = vrot.slane %v1893, 1
      %v2181 = vsel %vm2160, %v2179, %v2180
      %v2182 = vrot.slane %v2151, 1
      %v2183 = vrot.slane %v1894, 1
      %v2184 = vsel %vm2160, %v2182, %v2183
      %v2185 = vrot.slane %v2152, 1
      %v2186 = vrot.slane %v1895, 1
      %v2187 = vsel %vm2160, %v2185, %v2186
      %v2188 = vrot.slane %v2153, 1
      %v2189 = vrot.slane %v1896, 1
      %v2190 = vsel %vm2160, %v2188, %v2189
      %v2191 = vrot.slane %v2154, 1
      %v2192 = vrot.slane %v1897, 1
      %v2193 = vsel %vm2160, %v2191, %v2192
      %v2194 = vrot.slane %v2155, 1
      %v2195 = vrot.slane %v1898, 1
      %v2196 = vsel %vm2160, %v2194, %v2195
      %v2197 = vrot.slane %v2156, 1
      %v2198 = vrot.slane %v1899, 1
      %v2199 = vsel %vm2160, %v2197, %v2198
      %v2200 = vrot.slane %v2157, 1
      %v2201 = vrot.slane %v1900, 1
      %v2202 = vsel %vm2160, %v2200, %v2201
      %v2203 = vrot.slane %v2158, 1
      %v2204 = vrot.slane %v1901, 1
      %v2205 = vsel %vm2160, %v2203, %v2204
      %v2206 = vrot.slane %v2159, 1
      %v2207 = vrot.slane %v1902, 1
      %v2208 = vsel %vm2160, %v2206, %v2207
      %v2227 = vunpack.c.l.b16 %v1719
      %v2228 = vunpack.c.l.b16 %v1720
      %v2229 = vpack.c.b16 %v2228, %v2227
      %v2232 = vunpack.c.l.b16 %v1739
      %v2233 = vpack.c.b16 %v2232, %v2232
      %v2235 = vshrl.u32 %v2229, 16
      %v2237 = vshll.u32 %v2229, 16
      %v2239 = vrot.slane %v2237, 1
      %v2240 = vor.u32 %v2235, %v2239
      %v2242 = vshll.u32 %v2233, 16
      %v2244 = vrot.slane %v2242, 1
      %v2245 = vsel %vm1903, %v2240, %v2244
      %v2248 = vunpack.c.l.b16 %v1757
      %v2249 = vpack.c.b16 %v2228, %v2248
      %v2250 = vrot.slane %v2249, 1
      %v2251 = vrot.slane %v2233, 1
      %v2252 = vsel %vm2160, %v2250, %v2251
      %v2256 = vunpack.c.l.b16 %v1721
      %v2257 = vunpack.c.l.b16 %v1722
      %v2258 = vpack.c.b16 %v2257, %v2256
      %v2261 = vunpack.c.l.b16 %v1740
      %v2262 = vpack.c.b16 %v2261, %v2261
      %v2264 = vshrl.u32 %v2258, 16
      %v2266 = vshll.u32 %v2258, 16
      %v2268 = vrot.slane %v2266, 1
      %v2269 = vor.u32 %v2264, %v2268
      %v2271 = vshll.u32 %v2262, 16
      %v2273 = vrot.slane %v2271, 1
      %v2274 = vsel %vm1903, %v2269, %v2273
      %v2277 = vunpack.c.l.b16 %v1758
      %v2278 = vpack.c.b16 %v2257, %v2277
      %v2279 = vrot.slane %v2278, 1
      %v2280 = vrot.slane %v2262, 1
      %v2281 = vsel %vm2160, %v2279, %v2280
      %v2283 = vld [vmem:[%s3] sm:$0xf]
      %v2284 = vld [vmem:[%s3 + $0x4] sm:$0xf]
      %v2285 = vld [vmem:[%s3 + $0x8] sm:$0xf]
      %v2286 = vld [vmem:[%s3 + $0xc] sm:$0xf]
      %v2287 = vld [vmem:[%s3 + $0x10] sm:$0xf]
      %v2288 = vld [vmem:[%s3 + $0x14] sm:$0xf]
      %v2289 = vld [vmem:[%s3 + $0x18] sm:$0xf]
      %v2290 = vld [vmem:[%s3 + $0x1c] sm:$0xf]
      %v2291 = vld [vmem:[%s3 + $0x20] sm:$0xf]
      %v2292 = vld [vmem:[%s3 + $0x24] sm:$0xf]
      %v2293 = vld [vmem:[%s3 + $0x28] sm:$0xf]
      %v2294 = vld [vmem:[%s3 + $0x2c] sm:$0xf]
      %v2295 = vld [vmem:[%s3 + $0x30] sm:$0xf]
      %v2296 = vld [vmem:[%s3 + $0x34] sm:$0xf]
      %v2297 = vld [vmem:[%s3 + $0x38] sm:$0xf]
      %v2298 = vld [vmem:[%s3 + $0x3c] sm:$0xf]
      %v2299 = vld [vmem:[%s3 + $0x40] sm:$0xf]
      %v2300 = vld [vmem:[%s3 + $0x44] sm:$0xf]
      %v2301 = vld [vmem:[%s3 + $0x48] sm:$0xf]
      %v2302 = vld [vmem:[%s3 + $0x4c] sm:$0xf]
      %v2303 = vld [vmem:[%s3 + $0x50] sm:$0xf]
      %v2304 = vld [vmem:[%s3 + $0x54] sm:$0xf]
      %v2305 = vld [vmem:[%s3 + $0x58] sm:$0xf]
      %v2306 = vld [vmem:[%s3 + $0x5c] sm:$0xf]
      %v2307 = vld [vmem:[%s3 + $0x60] sm:$0xf]
      %v2308 = vld [vmem:[%s3 + $0x64] sm:$0xf]
      %v2309 = vld [vmem:[%s3 + $0x68] sm:$0xf]
      %v2310 = vld [vmem:[%s3 + $0x6c] sm:$0xf]
      %v2311 = vld [vmem:[%s3 + $0x70] sm:$0xf]
      %v2312 = vld [vmem:[%s3 + $0x74] sm:$0xf]
      %v2313 = vld [vmem:[%s3 + $0x78] sm:$0xf]
      %v2314 = vld [vmem:[%s3 + $0x7c] sm:$0xf]
      %v2315 = vld [vmem:[%s3 + $0x80] sm:$0xf]
      %v2316 = vld [vmem:[%s3 + $0x84] sm:$0xf]
      %v2317 = vld [vmem:[%s3 + $0x88] sm:$0xf]
      %v2318 = vld [vmem:[%s3 + $0x8c] sm:$0xf]
      %v2319 = vld [vmem:[%s3 + $0x90] sm:$0xf]
      %v2320 = vld [vmem:[%s3 + $0x94] sm:$0xf]
      %v2321 = vld [vmem:[%s3 + $0x98] sm:$0xf]
      %v2322 = vld [vmem:[%s3 + $0x9c] sm:$0xf]
      %v2323 = vld [vmem:[%s3 + $0xa0] sm:$0xf]
      %v2324 = vld [vmem:[%s3 + $0xa4] sm:$0xf]
      %v2325 = vld [vmem:[%s3 + $0xa8] sm:$0xf]
      %v2326 = vld [vmem:[%s3 + $0xac] sm:$0xf]
      %v2327 = vld [vmem:[%s3 + $0xb0] sm:$0xf]
      %v2328 = vld [vmem:[%s3 + $0xb4] sm:$0xf]
      %v2329 = vld [vmem:[%s3 + $0xb8] sm:$0xf]
      %v2330 = vld [vmem:[%s3 + $0xbc] sm:$0xf]
      %v2331 = vld [vmem:[%s3 + $0xc0] sm:$0xf]
      %v2332 = vld [vmem:[%s3 + $0xc4] sm:$0xf]
      %v2333 = vld [vmem:[%s3 + $0xc8] sm:$0xf]
      %v2334 = vld [vmem:[%s3 + $0xcc] sm:$0xf]
      %v2335 = vld [vmem:[%s3 + $0xd0] sm:$0xf]
      %v2336 = vld [vmem:[%s3 + $0xd4] sm:$0xf]
      %v2337 = vld [vmem:[%s3 + $0xd8] sm:$0xf]
      %v2338 = vld [vmem:[%s3 + $0xdc] sm:$0xf]
      %v2339 = vld [vmem:[%s3 + $0xe0] sm:$0xf]
      %v2340 = vld [vmem:[%s3 + $0xe4] sm:$0xf]
      %v2341 = vld [vmem:[%s3 + $0xe8] sm:$0xf]
      %v2342 = vld [vmem:[%s3 + $0xec] sm:$0xf]
      %v2343 = vld [vmem:[%s3 + $0xf0] sm:$0xf]
      %v2344 = vld [vmem:[%s3 + $0xf4] sm:$0xf]
      %v2345 = vld [vmem:[%s3 + $0xf8] sm:$0xf]
      %v2346 = vld [vmem:[%s3 + $0xfc] sm:$0xf]
      %v2347 = vld [vmem:[%s3 + $0x100] sm:$0xf]
      %v2348 = vld [vmem:[%s3 + $0x104] sm:$0xf]
      %v2349 = vld [vmem:[%s3 + $0x108] sm:$0xf]
      %v2350 = vld [vmem:[%s3 + $0x10c] sm:$0xf]
      %v2351 = vld [vmem:[%s3 + $0x110] sm:$0xf]
      %v2352 = vld [vmem:[%s3 + $0x114] sm:$0xf]
      %v2353 = vld [vmem:[%s3 + $0x118] sm:$0xf]
      %v2354 = vld [vmem:[%s3 + $0x11c] sm:$0xf]
      %v2355 = vld [vmem:[%s3 + $0x120] sm:$0xf]
      %v2356 = vld [vmem:[%s3 + $0x124] sm:$0xf]
      %v2357 = vld [vmem:[%s3 + $0x128] sm:$0xf]
      %v2358 = vld [vmem:[%s3 + $0x12c] sm:$0xf]
      %v2359 = vld [vmem:[%s3 + $0x130] sm:$0xf]
      %v2360 = vld [vmem:[%s3 + $0x134] sm:$0xf]
      %v2361 = vld [vmem:[%s3 + $0x138] sm:$0xf]
      %v2362 = vld [vmem:[%s3 + $0x13c] sm:$0xf]
      %v2363 = vld [vmem:[%s3 + $0x140] sm:$0xf]
      %v2364 = vld [vmem:[%s3 + $0x144] sm:$0xf]
      %v2365 = vld [vmem:[%s3 + $0x148] sm:$0xf]
      %v2366 = vld [vmem:[%s3 + $0x14c] sm:$0xf]
      %v2367 = vld [vmem:[%s3 + $0x150] sm:$0xf]
      %v2368 = vld [vmem:[%s3 + $0x154] sm:$0xf]
      %v2369 = vld [vmem:[%s3 + $0x158] sm:$0xf]
      %v2370 = vld [vmem:[%s3 + $0x15c] sm:$0xf]
      %v2371 = vld [vmem:[%s3 + $0x160] sm:$0xf]
      %v2372 = vld [vmem:[%s3 + $0x164] sm:$0xf]
      %v2373 = vld [vmem:[%s3 + $0x168] sm:$0xf]
      %v2374 = vld [vmem:[%s3 + $0x16c] sm:$0xf]
      %v2375 = vld [vmem:[%s3 + $0x170] sm:$0xf]
      %v2376 = vld [vmem:[%s3 + $0x174] sm:$0xf]
      %v2377 = vld [vmem:[%s3 + $0x178] sm:$0xf]
      %v2378 = vld [vmem:[%s3 + $0x17c] sm:$0xf]
      %v2379 = vld [vmem:[%s3 + $0x180] sm:$0xf]
      %v2380 = vld [vmem:[%s3 + $0x184] sm:$0xf]
      %v2381 = vld [vmem:[%s3 + $0x188] sm:$0xf]
      %v2382 = vld [vmem:[%s3 + $0x18c] sm:$0xf]
      %v2383 = vld [vmem:[%s3 + $0x190] sm:$0xf]
      %v2384 = vld [vmem:[%s3 + $0x194] sm:$0xf]
      %v2385 = vld [vmem:[%s3 + $0x198] sm:$0xf]
      %v2386 = vld [vmem:[%s3 + $0x19c] sm:$0xf]
      %v2387 = vld [vmem:[%s3 + $0x1a0] sm:$0xf]
      %v2388 = vld [vmem:[%s3 + $0x1a4] sm:$0xf]
      %v2389 = vld [vmem:[%s3 + $0x1a8] sm:$0xf]
      %v2390 = vld [vmem:[%s3 + $0x1ac] sm:$0xf]
      %v2391 = vld [vmem:[%s3 + $0x1b0] sm:$0xf]
      %v2392 = vld [vmem:[%s3 + $0x1b4] sm:$0xf]
      %v2393 = vld [vmem:[%s3 + $0x1b8] sm:$0xf]
      %v2394 = vld [vmem:[%s3 + $0x1bc] sm:$0xf]
      %v2395 = vld [vmem:[%s3 + $0x1c0] sm:$0xf]
      %v2396 = vld [vmem:[%s3 + $0x1c4] sm:$0xf]
      %v2397 = vld [vmem:[%s3 + $0x1c8] sm:$0xf]
      %v2398 = vld [vmem:[%s3 + $0x1cc] sm:$0xf]
      %v2399 = vld [vmem:[%s3 + $0x1d0] sm:$0xf]
      %v2400 = vld [vmem:[%s3 + $0x1d4] sm:$0xf]
      %v2401 = vld [vmem:[%s3 + $0x1d8] sm:$0xf]
      %v2402 = vld [vmem:[%s3 + $0x1dc] sm:$0xf]
      %v2403 = vld [vmem:[%s3 + $0x1e0] sm:$0xf]
      %v2404 = vld [vmem:[%s3 + $0x1e4] sm:$0xf]
      %v2405 = vld [vmem:[%s3 + $0x1e8] sm:$0xf]
      %v2406 = vld [vmem:[%s3 + $0x1ec] sm:$0xf]
      %v2407 = vld [vmem:[%s3 + $0x1f0] sm:$0xf]
      %v2408 = vld [vmem:[%s3 + $0x1f4] sm:$0xf]
      %v2409 = vld [vmem:[%s3 + $0x1f8] sm:$0xf]
      %v2410 = vld [vmem:[%s3 + $0x1fc] sm:$0xf]
      %v2411 = vld [vmem:[%s3 + $0x200] sm:$0xf]
      %v2412 = vld [vmem:[%s3 + $0x204] sm:$0xf]
      %v2413 = vld [vmem:[%s3 + $0x208] sm:$0xf]
      %v2414 = vld [vmem:[%s3 + $0x20c] sm:$0xf]
      %v2415 = vld [vmem:[%s3 + $0x210] sm:$0xf]
      %v2416 = vld [vmem:[%s3 + $0x214] sm:$0xf]
      %v2417 = vld [vmem:[%s3 + $0x218] sm:$0xf]
      %v2418 = vld [vmem:[%s3 + $0x21c] sm:$0xf]
      %v2419 = vld [vmem:[%s3 + $0x220] sm:$0xf]
      %v2420 = vld [vmem:[%s3 + $0x224] sm:$0xf]
      %v2421 = vld [vmem:[%s3 + $0x228] sm:$0xf]
      %v2422 = vld [vmem:[%s3 + $0x22c] sm:$0xf]
      %v2423 = vld [vmem:[%s3 + $0x230] sm:$0xf]
      %v2424 = vld [vmem:[%s3 + $0x234] sm:$0xf]
      %v2425 = vld [vmem:[%s3 + $0x238] sm:$0xf]
      %v2426 = vld [vmem:[%s3 + $0x23c] sm:$0xf]
      %v2427 = vld [vmem:[%s4] sm:$0x1]
      %v2429 = vperm.slane %v2427, 0
      %v2575 = vunpack.c.l.b16 %v2283
      %v2576 = vunpack.c.l.b16 %v2284
      %v2577 = vunpack.c.l.b16 %v2285
      %v2578 = vunpack.c.l.b16 %v2286
      %v2579 = vunpack.c.l.b16 %v2287
      %v2580 = vunpack.c.l.b16 %v2288
      %v2581 = vunpack.c.l.b16 %v2289
      %v2582 = vunpack.c.l.b16 %v2290
      %v2583 = vunpack.c.l.b16 %v2291
      %v2584 = vunpack.c.l.b16 %v2292
      %v2585 = vunpack.c.l.b16 %v2293
      %v2586 = vunpack.c.l.b16 %v2294
      %v2587 = vunpack.c.l.b16 %v2295
      %v2588 = vunpack.c.l.b16 %v2296
      %v2589 = vunpack.c.l.b16 %v2297
      %v2590 = vunpack.c.l.b16 %v2298
      %v2591 = vunpack.c.l.b16 %v2299
      %v2592 = vunpack.c.l.b16 %v2300
      %v2593 = vunpack.c.l.b16 %v2301
      %v2594 = vunpack.c.l.b16 %v2302
      %v2595 = vunpack.c.l.b16 %v2303
      %v2596 = vunpack.c.l.b16 %v2304
      %v2597 = vunpack.c.l.b16 %v2305
      %v2598 = vunpack.c.l.b16 %v2306
      %v2599 = vunpack.c.l.b16 %v2307
      %v2600 = vunpack.c.l.b16 %v2308
      %v2601 = vunpack.c.l.b16 %v2309
      %v2602 = vunpack.c.l.b16 %v2310
      %v2603 = vunpack.c.l.b16 %v2311
      %v2604 = vunpack.c.l.b16 %v2312
      %v2605 = vunpack.c.l.b16 %v2313
      %v2606 = vunpack.c.l.b16 %v2314
      %v2607 = vunpack.c.l.b16 %v2315
      %v2608 = vunpack.c.l.b16 %v2316
      %v2609 = vunpack.c.l.b16 %v2317
      %v2610 = vunpack.c.l.b16 %v2318
      %v2611 = vunpack.c.l.b16 %v2319
      %v2612 = vunpack.c.l.b16 %v2320
      %v2613 = vunpack.c.l.b16 %v2321
      %v2614 = vunpack.c.l.b16 %v2322
      %v2615 = vunpack.c.l.b16 %v2323
      %v2616 = vunpack.c.l.b16 %v2324
      %v2617 = vunpack.c.l.b16 %v2325
      %v2618 = vunpack.c.l.b16 %v2326
      %v2619 = vunpack.c.l.b16 %v2327
      %v2620 = vunpack.c.l.b16 %v2328
      %v2621 = vunpack.c.l.b16 %v2329
      %v2622 = vunpack.c.l.b16 %v2330
      %v2623 = vunpack.c.l.b16 %v2331
      %v2624 = vunpack.c.l.b16 %v2332
      %v2625 = vunpack.c.l.b16 %v2333
      %v2626 = vunpack.c.l.b16 %v2334
      %v2627 = vunpack.c.l.b16 %v2335
      %v2628 = vunpack.c.l.b16 %v2336
      %v2629 = vunpack.c.l.b16 %v2337
      %v2630 = vunpack.c.l.b16 %v2338
      %v2631 = vunpack.c.l.b16 %v2339
      %v2632 = vunpack.c.l.b16 %v2340
      %v2633 = vunpack.c.l.b16 %v2341
      %v2634 = vunpack.c.l.b16 %v2342
      %v2635 = vunpack.c.l.b16 %v2343
      %v2636 = vunpack.c.l.b16 %v2344
      %v2637 = vunpack.c.l.b16 %v2345
      %v2638 = vunpack.c.l.b16 %v2346
      %v2639 = vunpack.c.l.b16 %v2347
      %v2640 = vunpack.c.l.b16 %v2348
      %v2641 = vunpack.c.l.b16 %v2349
      %v2642 = vunpack.c.l.b16 %v2350
      %v2643 = vunpack.c.l.b16 %v2351
      %v2644 = vunpack.c.l.b16 %v2352
      %v2645 = vunpack.c.l.b16 %v2353
      %v2646 = vunpack.c.l.b16 %v2354
      %v2647 = vunpack.c.l.b16 %v2355
      %v2648 = vunpack.c.l.b16 %v2356
      %v2649 = vunpack.c.l.b16 %v2357
      %v2650 = vunpack.c.l.b16 %v2358
      %v2651 = vunpack.c.l.b16 %v2359
      %v2652 = vunpack.c.l.b16 %v2360
      %v2653 = vunpack.c.l.b16 %v2361
      %v2654 = vunpack.c.l.b16 %v2362
      %v2655 = vunpack.c.l.b16 %v2363
      %v2656 = vunpack.c.l.b16 %v2364
      %v2657 = vunpack.c.l.b16 %v2365
      %v2658 = vunpack.c.l.b16 %v2366
      %v2659 = vunpack.c.l.b16 %v2367
      %v2660 = vunpack.c.l.b16 %v2368
      %v2661 = vunpack.c.l.b16 %v2369
      %v2662 = vunpack.c.l.b16 %v2370
      %v2663 = vunpack.c.l.b16 %v2371
      %v2664 = vunpack.c.l.b16 %v2372
      %v2665 = vunpack.c.l.b16 %v2373
      %v2666 = vunpack.c.l.b16 %v2374
      %v2667 = vunpack.c.l.b16 %v2375
      %v2668 = vunpack.c.l.b16 %v2376
      %v2669 = vunpack.c.l.b16 %v2377
      %v2670 = vunpack.c.l.b16 %v2378
      %v2671 = vunpack.c.l.b16 %v2379
      %v2672 = vunpack.c.l.b16 %v2380
      %v2673 = vunpack.c.l.b16 %v2381
      %v2674 = vunpack.c.l.b16 %v2382
      %v2675 = vunpack.c.l.b16 %v2383
      %v2676 = vunpack.c.l.b16 %v2384
      %v2677 = vunpack.c.l.b16 %v2385
      %v2678 = vunpack.c.l.b16 %v2386
      %v2679 = vunpack.c.l.b16 %v2387
      %v2680 = vunpack.c.l.b16 %v2388
      %v2681 = vunpack.c.l.b16 %v2389
      %v2682 = vunpack.c.l.b16 %v2390
      %v2683 = vunpack.c.l.b16 %v2391
      %v2684 = vunpack.c.l.b16 %v2392
      %v2685 = vunpack.c.l.b16 %v2393
      %v2686 = vunpack.c.l.b16 %v2394
      %v2687 = vunpack.c.l.b16 %v2395
      %v2688 = vunpack.c.l.b16 %v2396
      %v2689 = vunpack.c.l.b16 %v2397
      %v2690 = vunpack.c.l.b16 %v2398
      %v2691 = vunpack.c.l.b16 %v2399
      %v2692 = vunpack.c.l.b16 %v2400
      %v2693 = vunpack.c.l.b16 %v2401
      %v2694 = vunpack.c.l.b16 %v2402
      %v2695 = vunpack.c.l.b16 %v2403
      %v2696 = vunpack.c.l.b16 %v2404
      %v2697 = vunpack.c.l.b16 %v2405
      %v2698 = vunpack.c.l.b16 %v2406
      %v2699 = vunpack.c.l.b16 %v2407
      %v2700 = vunpack.c.l.b16 %v2408
      %v2701 = vunpack.c.l.b16 %v2409
      %v2702 = vunpack.c.l.b16 %v2410
      %v2703 = vunpack.c.l.b16 %v2411
      %v2704 = vunpack.c.l.b16 %v2412
      %v2705 = vunpack.c.l.b16 %v2413
      %v2706 = vunpack.c.l.b16 %v2414
      %v2707 = vunpack.c.l.b16 %v2415
      %v2708 = vunpack.c.l.b16 %v2416
      %v2709 = vunpack.c.l.b16 %v2417
      %v2710 = vunpack.c.l.b16 %v2418
      %v2711 = vunpack.c.l.b16 %v2419
      %v2712 = vunpack.c.l.b16 %v2420
      %v2713 = vunpack.c.l.b16 %v2421
      %v2714 = vunpack.c.l.b16 %v2422
      %v2715 = vunpack.c.l.b16 %v2423
      %v2716 = vunpack.c.l.b16 %v2424
      %v2717 = vunpack.c.l.b16 %v2425
      %v2718 = vunpack.c.l.b16 %v2426
      %v2719 = vpack.c.b16 %v2576, %v2575
      %v2720 = vpack.c.b16 %v2578, %v2577
      %v2721 = vpack.c.b16 %v2580, %v2579
      %v2722 = vpack.c.b16 %v2582, %v2581
      %v2723 = vpack.c.b16 %v2584, %v2583
      %v2724 = vpack.c.b16 %v2586, %v2585
      %v2725 = vpack.c.b16 %v2588, %v2587
      %v2726 = vpack.c.b16 %v2590, %v2589
      %v2727 = vpack.c.b16 %v2592, %v2591
      %v2728 = vpack.c.b16 %v2594, %v2593
      %v2729 = vpack.c.b16 %v2596, %v2595
      %v2730 = vpack.c.b16 %v2598, %v2597
      %v2731 = vpack.c.b16 %v2600, %v2599
      %v2732 = vpack.c.b16 %v2602, %v2601
      %v2733 = vpack.c.b16 %v2604, %v2603
      %v2734 = vpack.c.b16 %v2606, %v2605
      %v2735 = vpack.c.b16 %v2608, %v2607
      %v2736 = vpack.c.b16 %v2610, %v2609
      %v2737 = vpack.c.b16 %v2612, %v2611
      %v2738 = vpack.c.b16 %v2614, %v2613
      %v2739 = vpack.c.b16 %v2616, %v2615
      %v2740 = vpack.c.b16 %v2618, %v2617
      %v2741 = vpack.c.b16 %v2620, %v2619
      %v2742 = vpack.c.b16 %v2622, %v2621
      %v2743 = vpack.c.b16 %v2624, %v2623
      %v2744 = vpack.c.b16 %v2626, %v2625
      %v2745 = vpack.c.b16 %v2628, %v2627
      %v2746 = vpack.c.b16 %v2630, %v2629
      %v2747 = vpack.c.b16 %v2632, %v2631
      %v2748 = vpack.c.b16 %v2634, %v2633
      %v2749 = vpack.c.b16 %v2636, %v2635
      %v2750 = vpack.c.b16 %v2638, %v2637
      %v2751 = vpack.c.b16 %v2640, %v2639
      %v2752 = vpack.c.b16 %v2642, %v2641
      %v2753 = vpack.c.b16 %v2644, %v2643
      %v2754 = vpack.c.b16 %v2646, %v2645
      %v2755 = vpack.c.b16 %v2648, %v2647
      %v2756 = vpack.c.b16 %v2650, %v2649
      %v2757 = vpack.c.b16 %v2652, %v2651
      %v2758 = vpack.c.b16 %v2654, %v2653
      %v2759 = vpack.c.b16 %v2656, %v2655
      %v2760 = vpack.c.b16 %v2658, %v2657
      %v2761 = vpack.c.b16 %v2660, %v2659
      %v2762 = vpack.c.b16 %v2662, %v2661
      %v2763 = vpack.c.b16 %v2664, %v2663
      %v2764 = vpack.c.b16 %v2666, %v2665
      %v2765 = vpack.c.b16 %v2668, %v2667
      %v2766 = vpack.c.b16 %v2670, %v2669
      %v2767 = vpack.c.b16 %v2672, %v2671
      %v2768 = vpack.c.b16 %v2674, %v2673
      %v2769 = vpack.c.b16 %v2676, %v2675
      %v2770 = vpack.c.b16 %v2678, %v2677
      %v2771 = vpack.c.b16 %v2680, %v2679
      %v2772 = vpack.c.b16 %v2682, %v2681
      %v2773 = vpack.c.b16 %v2684, %v2683
      %v2774 = vpack.c.b16 %v2686, %v2685
      %v2775 = vpack.c.b16 %v2688, %v2687
      %v2776 = vpack.c.b16 %v2690, %v2689
      %v2777 = vpack.c.b16 %v2692, %v2691
      %v2778 = vpack.c.b16 %v2694, %v2693
      %v2779 = vpack.c.b16 %v2696, %v2695
      %v2780 = vpack.c.b16 %v2698, %v2697
      %v2781 = vpack.c.b16 %v2700, %v2699
      %v2782 = vpack.c.b16 %v2702, %v2701
      %v2783 = vpack.c.b16 %v2704, %v2703
      %v2784 = vpack.c.b16 %v2706, %v2705
      %v2785 = vpack.c.b16 %v2708, %v2707
      %v2786 = vpack.c.b16 %v2710, %v2709
      %v2787 = vpack.c.b16 %v2712, %v2711
      %v2788 = vpack.c.b16 %v2714, %v2713
      %v2789 = vpack.c.b16 %v2716, %v2715
      %v2790 = vpack.c.b16 %v2718, %v2717
      %2863 = vmatpush.bf16.msra.mxu0 %v2726
      %2864 = vmatpush.bf16.msra.mxu0 %v2725
      %2865 = vmatpush.bf16.msra.mxu0 %v2724
      %2866 = vmatpush.bf16.msra.mxu0 %v2723
      %2867 = vmatpush.bf16.msra.mxu0 %v2722
      %2868 = vmatpush.bf16.msra.mxu0 %v2721
      %2869 = vmatpush.bf16.msra.mxu0 %v2720
      %2870 = vmatpush.bf16.msra.mxu0 %v2719
      %2871 = vmatmul.bf16.gmra.mxu0 %v1823
      %v2872 = vpop.f32.mrf.mxu0
      %v2873 = vadd.f32 %v2429, %v2872
      %v2874 = vpop.f32.mrf.mxu0
      %v2875 = vadd.f32 %v2429, %v2874
      %2876 = vmatmul.bf16.gmra.mxu0 %v1824
      %v2877 = vpop.f32.mrf.mxu0
      %v2878 = vadd.f32 %v2429, %v2877
      %v2879 = vpop.f32.mrf.mxu0
      %v2880 = vadd.f32 %v2429, %v2879
      %2881 = vmatmul.bf16.gmra.mxu0 %v1825
      %v2882 = vpop.f32.mrf.mxu0
      %v2883 = vadd.f32 %v2429, %v2882
      %v2884 = vpop.f32.mrf.mxu0
      %v2885 = vadd.f32 %v2429, %v2884
      %2886 = vmatmul.bf16.gmra.mxu0 %v1826
      %v2887 = vpop.f32.mrf.mxu0
      %v2888 = vadd.f32 %v2429, %v2887
      %v2889 = vpop.f32.mrf.mxu0
      %v2890 = vadd.f32 %v2429, %v2889
      %2891 = vmatmul.bf16.gmra.mxu0 %v1827
      %v2892 = vpop.f32.mrf.mxu0
      %v2893 = vadd.f32 %v2429, %v2892
      %v2894 = vpop.f32.mrf.mxu0
      %v2895 = vadd.f32 %v2429, %v2894
      %2896 = vmatmul.bf16.gmra.mxu0 %v1828
      %v2897 = vpop.f32.mrf.mxu0
      %v2898 = vadd.f32 %v2429, %v2897
      %v2899 = vpop.f32.mrf.mxu0
      %v2900 = vadd.f32 %v2429, %v2899
      %2901 = vmatmul.bf16.gmra.mxu0 %v1829
      %v2902 = vpop.f32.mrf.mxu0
      %v2903 = vadd.f32 %v2429, %v2902
      %v2904 = vpop.f32.mrf.mxu0
      %v2905 = vadd.f32 %v2429, %v2904
      %2906 = vmatmul.bf16.gmra.mxu0 %v1830
      %v2907 = vpop.f32.mrf.mxu0
      %v2908 = vadd.f32 %v2429, %v2907
      %v2909 = vpop.f32.mrf.mxu0
      %v2910 = vadd.f32 %v2429, %v2909
      %2911 = vmatmul.bf16.gmra.mxu0 %v1831
      %v2912 = vpop.f32.mrf.mxu0
      %v2913 = vadd.f32 %v2429, %v2912
      %v2914 = vpop.f32.mrf.mxu0
      %v2915 = vadd.f32 %v2429, %v2914
      %2916 = vmatmul.bf16.gmra.mxu0 %v1832
      %v2917 = vpop.f32.mrf.mxu0
      %v2918 = vadd.f32 %v2429, %v2917
      %v2919 = vpop.f32.mrf.mxu0
      %v2920 = vadd.f32 %v2429, %v2919
      %2921 = vmatmul.bf16.gmra.mxu0 %v1833
      %v2922 = vpop.f32.mrf.mxu0
      %v2923 = vadd.f32 %v2429, %v2922
      %v2924 = vpop.f32.mrf.mxu0
      %v2925 = vadd.f32 %v2429, %v2924
      %2926 = vmatmul.bf16.gmra.mxu0 %v1834
      %v2927 = vpop.f32.mrf.mxu0
      %v2928 = vadd.f32 %v2429, %v2927
      %v2929 = vpop.f32.mrf.mxu0
      %v2930 = vadd.f32 %v2429, %v2929
      %2931 = vmatmul.bf16.gmra.mxu0 %v1835
      %v2932 = vpop.f32.mrf.mxu0
      %v2933 = vadd.f32 %v2429, %v2932
      %v2934 = vpop.f32.mrf.mxu0
      %v2935 = vadd.f32 %v2429, %v2934
      %2936 = vmatmul.bf16.gmra.mxu0 %v1836
      %v2937 = vpop.f32.mrf.mxu0
      %v2938 = vadd.f32 %v2429, %v2937
      %v2939 = vpop.f32.mrf.mxu0
      %v2940 = vadd.f32 %v2429, %v2939
      %2941 = vmatmul.bf16.gmra.mxu0 %v1837
      %v2942 = vpop.f32.mrf.mxu0
      %v2943 = vadd.f32 %v2429, %v2942
      %v2944 = vpop.f32.mrf.mxu0
      %v2945 = vadd.f32 %v2429, %v2944
      %2946 = vmatmul.bf16.gmra.mxu0 %v1838
      %v2947 = vpop.f32.mrf.mxu0
      %v2948 = vadd.f32 %v2429, %v2947
      %v2949 = vpop.f32.mrf.mxu0
      %v2950 = vadd.f32 %v2429, %v2949
      %2951 = vdwg.mxu0
      %2952 = vmatpush.bf16.msra.mxu0 %v2734
      %2953 = vmatpush.bf16.msra.mxu0 %v2733
      %2954 = vmatpush.bf16.msra.mxu0 %v2732
      %2955 = vmatpush.bf16.msra.mxu0 %v2731
      %2956 = vmatpush.bf16.msra.mxu0 %v2730
      %2957 = vmatpush.bf16.msra.mxu0 %v2729
      %2958 = vmatpush.bf16.msra.mxu0 %v2728
      %2959 = vmatpush.bf16.msra.mxu0 %v2727
      %2960 = vmatmul.bf16.gmra.mxu0 %v1915
      %v2961 = vpop.f32.mrf.mxu0
      %v2962 = vadd.f32 %v2873, %v2961
      %v2963 = vpop.f32.mrf.mxu0
      %v2964 = vadd.f32 %v2875, %v2963
      %2965 = vmatmul.bf16.gmra.mxu0 %v1927
      %v2966 = vpop.f32.mrf.mxu0
      %v2967 = vadd.f32 %v2878, %v2966
      %v2968 = vpop.f32.mrf.mxu0
      %v2969 = vadd.f32 %v2880, %v2968
      %2970 = vmatmul.bf16.gmra.mxu0 %v1939
      %v2971 = vpop.f32.mrf.mxu0
      %v2972 = vadd.f32 %v2883, %v2971
      %v2973 = vpop.f32.mrf.mxu0
      %v2974 = vadd.f32 %v2885, %v2973
      %2975 = vmatmul.bf16.gmra.mxu0 %v1951
      %v2976 = vpop.f32.mrf.mxu0
      %v2977 = vadd.f32 %v2888, %v2976
      %v2978 = vpop.f32.mrf.mxu0
      %v2979 = vadd.f32 %v2890, %v2978
      %2980 = vmatmul.bf16.gmra.mxu0 %v1963
      %v2981 = vpop.f32.mrf.mxu0
      %v2982 = vadd.f32 %v2893, %v2981
      %v2983 = vpop.f32.mrf.mxu0
      %v2984 = vadd.f32 %v2895, %v2983
      %2985 = vmatmul.bf16.gmra.mxu0 %v1975
      %v2986 = vpop.f32.mrf.mxu0
      %v2987 = vadd.f32 %v2898, %v2986
      %v2988 = vpop.f32.mrf.mxu0
      %v2989 = vadd.f32 %v2900, %v2988
      %2990 = vmatmul.bf16.gmra.mxu0 %v1987
      %v2991 = vpop.f32.mrf.mxu0
      %v2992 = vadd.f32 %v2903, %v2991
      %v2993 = vpop.f32.mrf.mxu0
      %v2994 = vadd.f32 %v2905, %v2993
      %2995 = vmatmul.bf16.gmra.mxu0 %v1999
      %v2996 = vpop.f32.mrf.mxu0
      %v2997 = vadd.f32 %v2908, %v2996
      %v2998 = vpop.f32.mrf.mxu0
      %v2999 = vadd.f32 %v2910, %v2998
      %3000 = vmatmul.bf16.gmra.mxu0 %v2011
      %v3001 = vpop.f32.mrf.mxu0
      %v3002 = vadd.f32 %v2913, %v3001
      %v3003 = vpop.f32.mrf.mxu0
      %v3004 = vadd.f32 %v2915, %v3003
      %3005 = vmatmul.bf16.gmra.mxu0 %v2023
      %v3006 = vpop.f32.mrf.mxu0
      %v3007 = vadd.f32 %v2918, %v3006
      %v3008 = vpop.f32.mrf.mxu0
      %v3009 = vadd.f32 %v2920, %v3008
      %3010 = vmatmul.bf16.gmra.mxu0 %v2035
      %v3011 = vpop.f32.mrf.mxu0
      %v3012 = vadd.f32 %v2923, %v3011
      %v3013 = vpop.f32.mrf.mxu0
      %v3014 = vadd.f32 %v2925, %v3013
      %3015 = vmatmul.bf16.gmra.mxu0 %v2047
      %v3016 = vpop.f32.mrf.mxu0
      %v3017 = vadd.f32 %v2928, %v3016
      %v3018 = vpop.f32.mrf.mxu0
      %v3019 = vadd.f32 %v2930, %v3018
      %3020 = vmatmul.bf16.gmra.mxu0 %v2059
      %v3021 = vpop.f32.mrf.mxu0
      %v3022 = vadd.f32 %v2933, %v3021
      %v3023 = vpop.f32.mrf.mxu0
      %v3024 = vadd.f32 %v2935, %v3023
      %3025 = vmatmul.bf16.gmra.mxu0 %v2071
      %v3026 = vpop.f32.mrf.mxu0
      %v3027 = vadd.f32 %v2938, %v3026
      %v3028 = vpop.f32.mrf.mxu0
      %v3029 = vadd.f32 %v2940, %v3028
      %3030 = vmatmul.bf16.gmra.mxu0 %v2083
      %v3031 = vpop.f32.mrf.mxu0
      %v3032 = vadd.f32 %v2943, %v3031
      %v3033 = vpop.f32.mrf.mxu0
      %v3034 = vadd.f32 %v2945, %v3033
      %3035 = vmatmul.bf16.gmra.mxu0 %v2095
      %v3036 = vpop.f32.mrf.mxu0
      %v3037 = vadd.f32 %v2948, %v3036
      %v3038 = vpop.f32.mrf.mxu0
      %v3039 = vadd.f32 %v2950, %v3038
      %3040 = vdwg.mxu0
      %3041 = vmatpush.bf16.msra.mxu0 %v2742
      %3042 = vmatpush.bf16.msra.mxu0 %v2741
      %3043 = vmatpush.bf16.msra.mxu0 %v2740
      %3044 = vmatpush.bf16.msra.mxu0 %v2739
      %3045 = vmatpush.bf16.msra.mxu0 %v2738
      %3046 = vmatpush.bf16.msra.mxu0 %v2737
      %3047 = vmatpush.bf16.msra.mxu0 %v2736
      %3048 = vmatpush.bf16.msra.mxu0 %v2735
      %3049 = vmatmul.bf16.gmra.mxu0 %v2163
      %v3050 = vpop.f32.mrf.mxu0
      %v3051 = vadd.f32 %v2962, %v3050
      %v3052 = vpop.f32.mrf.mxu0
      %v3053 = vadd.f32 %v2964, %v3052
      %3054 = vmatmul.bf16.gmra.mxu0 %v2166
      %v3055 = vpop.f32.mrf.mxu0
      %v3056 = vadd.f32 %v2967, %v3055
      %v3057 = vpop.f32.mrf.mxu0
      %v3058 = vadd.f32 %v2969, %v3057
      %3059 = vmatmul.bf16.gmra.mxu0 %v2169
      %v3060 = vpop.f32.mrf.mxu0
      %v3061 = vadd.f32 %v2972, %v3060
      %v3062 = vpop.f32.mrf.mxu0
      %v3063 = vadd.f32 %v2974, %v3062
      %3064 = vmatmul.bf16.gmra.mxu0 %v2172
      %v3065 = vpop.f32.mrf.mxu0
      %v3066 = vadd.f32 %v2977, %v3065
      %v3067 = vpop.f32.mrf.mxu0
      %v3068 = vadd.f32 %v2979, %v3067
      %3069 = vmatmul.bf16.gmra.mxu0 %v2175
      %v3070 = vpop.f32.mrf.mxu0
      %v3071 = vadd.f32 %v2982, %v3070
      %v3072 = vpop.f32.mrf.mxu0
      %v3073 = vadd.f32 %v2984, %v3072
      %3074 = vmatmul.bf16.gmra.mxu0 %v2178
      %v3075 = vpop.f32.mrf.mxu0
      %v3076 = vadd.f32 %v2987, %v3075
      %v3077 = vpop.f32.mrf.mxu0
      %v3078 = vadd.f32 %v2989, %v3077
      %3079 = vmatmul.bf16.gmra.mxu0 %v2181
      %v3080 = vpop.f32.mrf.mxu0
      %v3081 = vadd.f32 %v2992, %v3080
      %v3082 = vpop.f32.mrf.mxu0
      %v3083 = vadd.f32 %v2994, %v3082
      %3084 = vmatmul.bf16.gmra.mxu0 %v2184
      %v3085 = vpop.f32.mrf.mxu0
      %v3086 = vadd.f32 %v2997, %v3085
      %v3087 = vpop.f32.mrf.mxu0
      %v3088 = vadd.f32 %v2999, %v3087
      %3089 = vmatmul.bf16.gmra.mxu0 %v2187
      %v3090 = vpop.f32.mrf.mxu0
      %v3091 = vadd.f32 %v3002, %v3090
      %v3092 = vpop.f32.mrf.mxu0
      %v3093 = vadd.f32 %v3004, %v3092
      %3094 = vmatmul.bf16.gmra.mxu0 %v2190
      %v3095 = vpop.f32.mrf.mxu0
      %v3096 = vadd.f32 %v3007, %v3095
      %v3097 = vpop.f32.mrf.mxu0
      %v3098 = vadd.f32 %v3009, %v3097
      %3099 = vmatmul.bf16.gmra.mxu0 %v2193
      %v3100 = vpop.f32.mrf.mxu0
      %v3101 = vadd.f32 %v3012, %v3100
      %v3102 = vpop.f32.mrf.mxu0
      %v3103 = vadd.f32 %v3014, %v3102
      %3104 = vmatmul.bf16.gmra.mxu0 %v2196
      %v3105 = vpop.f32.mrf.mxu0
      %v3106 = vadd.f32 %v3017, %v3105
      %v3107 = vpop.f32.mrf.mxu0
      %v3108 = vadd.f32 %v3019, %v3107
      %3109 = vmatmul.bf16.gmra.mxu0 %v2199
      %v3110 = vpop.f32.mrf.mxu0
      %v3111 = vadd.f32 %v3022, %v3110
      %v3112 = vpop.f32.mrf.mxu0
      %v3113 = vadd.f32 %v3024, %v3112
      %3114 = vmatmul.bf16.gmra.mxu0 %v2202
      %v3115 = vpop.f32.mrf.mxu0
      %v3116 = vadd.f32 %v3027, %v3115
      %v3117 = vpop.f32.mrf.mxu0
      %v3118 = vadd.f32 %v3029, %v3117
      %3119 = vmatmul.bf16.gmra.mxu0 %v2205
      %v3120 = vpop.f32.mrf.mxu0
      %v3121 = vadd.f32 %v3032, %v3120
      %v3122 = vpop.f32.mrf.mxu0
      %v3123 = vadd.f32 %v3034, %v3122
      %3124 = vmatmul.bf16.gmra.mxu0 %v2208
      %v3125 = vpop.f32.mrf.mxu0
      %v3126 = vadd.f32 %v3037, %v3125
      %v3127 = vpop.f32.mrf.mxu0
      %v3128 = vadd.f32 %v3039, %v3127
      %3129 = vdwg.mxu0
      %3130 = vmatpush.bf16.msra.mxu0 %v2750
      %3131 = vmatpush.bf16.msra.mxu0 %v2749
      %3132 = vmatpush.bf16.msra.mxu0 %v2748
      %3133 = vmatpush.bf16.msra.mxu0 %v2747
      %3134 = vmatpush.bf16.msra.mxu0 %v2746
      %3135 = vmatpush.bf16.msra.mxu0 %v2745
      %3136 = vmatpush.bf16.msra.mxu0 %v2744
      %3137 = vmatpush.bf16.msra.mxu0 %v2743
      %3138 = vmatmul.bf16.gmra.mxu0 %v1824
      %v3139 = vpop.f32.mrf.mxu0
      %v3140 = vadd.f32 %v3051, %v3139
      %v3141 = vpop.f32.mrf.mxu0
      %v3142 = vadd.f32 %v3053, %v3141
      %3143 = vmatmul.bf16.gmra.mxu0 %v1825
      %v3144 = vpop.f32.mrf.mxu0
      %v3145 = vadd.f32 %v3056, %v3144
      %v3146 = vpop.f32.mrf.mxu0
      %v3147 = vadd.f32 %v3058, %v3146
      %3148 = vmatmul.bf16.gmra.mxu0 %v1826
      %v3149 = vpop.f32.mrf.mxu0
      %v3150 = vadd.f32 %v3061, %v3149
      %v3151 = vpop.f32.mrf.mxu0
      %v3152 = vadd.f32 %v3063, %v3151
      %3153 = vmatmul.bf16.gmra.mxu0 %v1827
      %v3154 = vpop.f32.mrf.mxu0
      %v3155 = vadd.f32 %v3066, %v3154
      %v3156 = vpop.f32.mrf.mxu0
      %v3157 = vadd.f32 %v3068, %v3156
      %3158 = vmatmul.bf16.gmra.mxu0 %v1828
      %v3159 = vpop.f32.mrf.mxu0
      %v3160 = vadd.f32 %v3071, %v3159
      %v3161 = vpop.f32.mrf.mxu0
      %v3162 = vadd.f32 %v3073, %v3161
      %3163 = vmatmul.bf16.gmra.mxu0 %v1829
      %v3164 = vpop.f32.mrf.mxu0
      %v3165 = vadd.f32 %v3076, %v3164
      %v3166 = vpop.f32.mrf.mxu0
      %v3167 = vadd.f32 %v3078, %v3166
      %3168 = vmatmul.bf16.gmra.mxu0 %v1830
      %v3169 = vpop.f32.mrf.mxu0
      %v3170 = vadd.f32 %v3081, %v3169
      %v3171 = vpop.f32.mrf.mxu0
      %v3172 = vadd.f32 %v3083, %v3171
      %3173 = vmatmul.bf16.gmra.mxu0 %v1831
      %v3174 = vpop.f32.mrf.mxu0
      %v3175 = vadd.f32 %v3086, %v3174
      %v3176 = vpop.f32.mrf.mxu0
      %v3177 = vadd.f32 %v3088, %v3176
      %3178 = vmatmul.bf16.gmra.mxu0 %v1832
      %v3179 = vpop.f32.mrf.mxu0
      %v3180 = vadd.f32 %v3091, %v3179
      %v3181 = vpop.f32.mrf.mxu0
      %v3182 = vadd.f32 %v3093, %v3181
      %3183 = vmatmul.bf16.gmra.mxu0 %v1833
      %v3184 = vpop.f32.mrf.mxu0
      %v3185 = vadd.f32 %v3096, %v3184
      %v3186 = vpop.f32.mrf.mxu0
      %v3187 = vadd.f32 %v3098, %v3186
      %3188 = vmatmul.bf16.gmra.mxu0 %v1834
      %v3189 = vpop.f32.mrf.mxu0
      %v3190 = vadd.f32 %v3101, %v3189
      %v3191 = vpop.f32.mrf.mxu0
      %v3192 = vadd.f32 %v3103, %v3191
      %3193 = vmatmul.bf16.gmra.mxu0 %v1835
      %v3194 = vpop.f32.mrf.mxu0
      %v3195 = vadd.f32 %v3106, %v3194
      %v3196 = vpop.f32.mrf.mxu0
      %v3197 = vadd.f32 %v3108, %v3196
      %3198 = vmatmul.bf16.gmra.mxu0 %v1836
      %v3199 = vpop.f32.mrf.mxu0
      %v3200 = vadd.f32 %v3111, %v3199
      %v3201 = vpop.f32.mrf.mxu0
      %v3202 = vadd.f32 %v3113, %v3201
      %3203 = vmatmul.bf16.gmra.mxu0 %v1837
      %v3204 = vpop.f32.mrf.mxu0
      %v3205 = vadd.f32 %v3116, %v3204
      %v3206 = vpop.f32.mrf.mxu0
      %v3207 = vadd.f32 %v3118, %v3206
      %3208 = vmatmul.bf16.gmra.mxu0 %v1838
      %v3209 = vpop.f32.mrf.mxu0
      %v3210 = vadd.f32 %v3121, %v3209
      %v3211 = vpop.f32.mrf.mxu0
      %v3212 = vadd.f32 %v3123, %v3211
      %3213 = vmatmul.bf16.gmra.mxu0 %v2229
      %v3214 = vpop.f32.mrf.mxu0
      %v3215 = vadd.f32 %v3126, %v3214
      %v3216 = vpop.f32.mrf.mxu0
      %v3217 = vadd.f32 %v3128, %v3216
      %3218 = vdwg.mxu0
      %3219 = vmatpush.bf16.msra.mxu0 %v2758
      %3220 = vmatpush.bf16.msra.mxu0 %v2757
      %3221 = vmatpush.bf16.msra.mxu0 %v2756
      %3222 = vmatpush.bf16.msra.mxu0 %v2755
      %3223 = vmatpush.bf16.msra.mxu0 %v2754
      %3224 = vmatpush.bf16.msra.mxu0 %v2753
      %3225 = vmatpush.bf16.msra.mxu0 %v2752
      %3226 = vmatpush.bf16.msra.mxu0 %v2751
      %3227 = vmatmul.bf16.gmra.mxu0 %v1927
      %v3228 = vpop.f32.mrf.mxu0
      %v3229 = vadd.f32 %v3140, %v3228
      %v3230 = vpop.f32.mrf.mxu0
      %v3231 = vadd.f32 %v3142, %v3230
      %3232 = vmatmul.bf16.gmra.mxu0 %v1939
      %v3233 = vpop.f32.mrf.mxu0
      %v3234 = vadd.f32 %v3145, %v3233
      %v3235 = vpop.f32.mrf.mxu0
      %v3236 = vadd.f32 %v3147, %v3235
      %3237 = vmatmul.bf16.gmra.mxu0 %v1951
      %v3238 = vpop.f32.mrf.mxu0
      %v3239 = vadd.f32 %v3150, %v3238
      %v3240 = vpop.f32.mrf.mxu0
      %v3241 = vadd.f32 %v3152, %v3240
      %3242 = vmatmul.bf16.gmra.mxu0 %v1963
      %v3243 = vpop.f32.mrf.mxu0
      %v3244 = vadd.f32 %v3155, %v3243
      %v3245 = vpop.f32.mrf.mxu0
      %v3246 = vadd.f32 %v3157, %v3245
      %3247 = vmatmul.bf16.gmra.mxu0 %v1975
      %v3248 = vpop.f32.mrf.mxu0
      %v3249 = vadd.f32 %v3160, %v3248
      %v3250 = vpop.f32.mrf.mxu0
      %v3251 = vadd.f32 %v3162, %v3250
      %3252 = vmatmul.bf16.gmra.mxu0 %v1987
      %v3253 = vpop.f32.mrf.mxu0
      %v3254 = vadd.f32 %v3165, %v3253
      %v3255 = vpop.f32.mrf.mxu0
      %v3256 = vadd.f32 %v3167, %v3255
      %3257 = vmatmul.bf16.gmra.mxu0 %v1999
      %v3258 = vpop.f32.mrf.mxu0
      %v3259 = vadd.f32 %v3170, %v3258
      %v3260 = vpop.f32.mrf.mxu0
      %v3261 = vadd.f32 %v3172, %v3260
      %3262 = vmatmul.bf16.gmra.mxu0 %v2011
      %v3263 = vpop.f32.mrf.mxu0
      %v3264 = vadd.f32 %v3175, %v3263
      %v3265 = vpop.f32.mrf.mxu0
      %v3266 = vadd.f32 %v3177, %v3265
      %3267 = vmatmul.bf16.gmra.mxu0 %v2023
      %v3268 = vpop.f32.mrf.mxu0
      %v3269 = vadd.f32 %v3180, %v3268
      %v3270 = vpop.f32.mrf.mxu0
      %v3271 = vadd.f32 %v3182, %v3270
      %3272 = vmatmul.bf16.gmra.mxu0 %v2035
      %v3273 = vpop.f32.mrf.mxu0
      %v3274 = vadd.f32 %v3185, %v3273
      %v3275 = vpop.f32.mrf.mxu0
      %v3276 = vadd.f32 %v3187, %v3275
      %3277 = vmatmul.bf16.gmra.mxu0 %v2047
      %v3278 = vpop.f32.mrf.mxu0
      %v3279 = vadd.f32 %v3190, %v3278
      %v3280 = vpop.f32.mrf.mxu0
      %v3281 = vadd.f32 %v3192, %v3280
      %3282 = vmatmul.bf16.gmra.mxu0 %v2059
      %v3283 = vpop.f32.mrf.mxu0
      %v3284 = vadd.f32 %v3195, %v3283
      %v3285 = vpop.f32.mrf.mxu0
      %v3286 = vadd.f32 %v3197, %v3285
      %3287 = vmatmul.bf16.gmra.mxu0 %v2071
      %v3288 = vpop.f32.mrf.mxu0
      %v3289 = vadd.f32 %v3200, %v3288
      %v3290 = vpop.f32.mrf.mxu0
      %v3291 = vadd.f32 %v3202, %v3290
      %3292 = vmatmul.bf16.gmra.mxu0 %v2083
      %v3293 = vpop.f32.mrf.mxu0
      %v3294 = vadd.f32 %v3205, %v3293
      %v3295 = vpop.f32.mrf.mxu0
      %v3296 = vadd.f32 %v3207, %v3295
      %3297 = vmatmul.bf16.gmra.mxu0 %v2095
      %v3298 = vpop.f32.mrf.mxu0
      %v3299 = vadd.f32 %v3210, %v3298
      %v3300 = vpop.f32.mrf.mxu0
      %v3301 = vadd.f32 %v3212, %v3300
      %3302 = vmatmul.bf16.gmra.mxu0 %v2245
      %v3303 = vpop.f32.mrf.mxu0
      %v3304 = vadd.f32 %v3215, %v3303
      %v3305 = vpop.f32.mrf.mxu0
      %v3306 = vadd.f32 %v3217, %v3305
      %3307 = vdwg.mxu0
      %3308 = vmatpush.bf16.msra.mxu0 %v2766
      %3309 = vmatpush.bf16.msra.mxu0 %v2765
      %3310 = vmatpush.bf16.msra.mxu0 %v2764
      %3311 = vmatpush.bf16.msra.mxu0 %v2763
      %3312 = vmatpush.bf16.msra.mxu0 %v2762
      %3313 = vmatpush.bf16.msra.mxu0 %v2761
      %3314 = vmatpush.bf16.msra.mxu0 %v2760
      %3315 = vmatpush.bf16.msra.mxu0 %v2759
      %3316 = vmatmul.bf16.gmra.mxu0 %v2166
      %v3317 = vpop.f32.mrf.mxu0
      %v3318 = vadd.f32 %v3229, %v3317
      %v3319 = vpop.f32.mrf.mxu0
      %v3320 = vadd.f32 %v3231, %v3319
      %3321 = vmatmul.bf16.gmra.mxu0 %v2169
      %v3322 = vpop.f32.mrf.mxu0
      %v3323 = vadd.f32 %v3234, %v3322
      %v3324 = vpop.f32.mrf.mxu0
      %v3325 = vadd.f32 %v3236, %v3324
      %3326 = vmatmul.bf16.gmra.mxu0 %v2172
      %v3327 = vpop.f32.mrf.mxu0
      %v3328 = vadd.f32 %v3239, %v3327
      %v3329 = vpop.f32.mrf.mxu0
      %v3330 = vadd.f32 %v3241, %v3329
      %3331 = vmatmul.bf16.gmra.mxu0 %v2175
      %v3332 = vpop.f32.mrf.mxu0
      %v3333 = vadd.f32 %v3244, %v3332
      %v3334 = vpop.f32.mrf.mxu0
      %v3335 = vadd.f32 %v3246, %v3334
      %3336 = vmatmul.bf16.gmra.mxu0 %v2178
      %v3337 = vpop.f32.mrf.mxu0
      %v3338 = vadd.f32 %v3249, %v3337
      %v3339 = vpop.f32.mrf.mxu0
      %v3340 = vadd.f32 %v3251, %v3339
      %3341 = vmatmul.bf16.gmra.mxu0 %v2181
      %v3342 = vpop.f32.mrf.mxu0
      %v3343 = vadd.f32 %v3254, %v3342
      %v3344 = vpop.f32.mrf.mxu0
      %v3345 = vadd.f32 %v3256, %v3344
      %3346 = vmatmul.bf16.gmra.mxu0 %v2184
      %v3347 = vpop.f32.mrf.mxu0
      %v3348 = vadd.f32 %v3259, %v3347
      %v3349 = vpop.f32.mrf.mxu0
      %v3350 = vadd.f32 %v3261, %v3349
      %3351 = vmatmul.bf16.gmra.mxu0 %v2187
      %v3352 = vpop.f32.mrf.mxu0
      %v3353 = vadd.f32 %v3264, %v3352
      %v3354 = vpop.f32.mrf.mxu0
      %v3355 = vadd.f32 %v3266, %v3354
      %3356 = vmatmul.bf16.gmra.mxu0 %v2190
      %v3357 = vpop.f32.mrf.mxu0
      %v3358 = vadd.f32 %v3269, %v3357
      %v3359 = vpop.f32.mrf.mxu0
      %v3360 = vadd.f32 %v3271, %v3359
      %3361 = vmatmul.bf16.gmra.mxu0 %v2193
      %v3362 = vpop.f32.mrf.mxu0
      %v3363 = vadd.f32 %v3274, %v3362
      %v3364 = vpop.f32.mrf.mxu0
      %v3365 = vadd.f32 %v3276, %v3364
      %3366 = vmatmul.bf16.gmra.mxu0 %v2196
      %v3367 = vpop.f32.mrf.mxu0
      %v3368 = vadd.f32 %v3279, %v3367
      %v3369 = vpop.f32.mrf.mxu0
      %v3370 = vadd.f32 %v3281, %v3369
      %3371 = vmatmul.bf16.gmra.mxu0 %v2199
      %v3372 = vpop.f32.mrf.mxu0
      %v3373 = vadd.f32 %v3284, %v3372
      %v3374 = vpop.f32.mrf.mxu0
      %v3375 = vadd.f32 %v3286, %v3374
      %3376 = vmatmul.bf16.gmra.mxu0 %v2202
      %v3377 = vpop.f32.mrf.mxu0
      %v3378 = vadd.f32 %v3289, %v3377
      %v3379 = vpop.f32.mrf.mxu0
      %v3380 = vadd.f32 %v3291, %v3379
      %3381 = vmatmul.bf16.gmra.mxu0 %v2205
      %v3382 = vpop.f32.mrf.mxu0
      %v3383 = vadd.f32 %v3294, %v3382
      %v3384 = vpop.f32.mrf.mxu0
      %v3385 = vadd.f32 %v3296, %v3384
      %3386 = vmatmul.bf16.gmra.mxu0 %v2208
      %v3387 = vpop.f32.mrf.mxu0
      %v3388 = vadd.f32 %v3299, %v3387
      %v3389 = vpop.f32.mrf.mxu0
      %v3390 = vadd.f32 %v3301, %v3389
      %3391 = vmatmul.bf16.gmra.mxu0 %v2252
      %v3392 = vpop.f32.mrf.mxu0
      %v3393 = vadd.f32 %v3304, %v3392
      %v3394 = vpop.f32.mrf.mxu0
      %v3395 = vadd.f32 %v3306, %v3394
      %3396 = vdwg.mxu0
      %3397 = vmatpush.bf16.msra.mxu0 %v2774
      %3398 = vmatpush.bf16.msra.mxu0 %v2773
      %3399 = vmatpush.bf16.msra.mxu0 %v2772
      %3400 = vmatpush.bf16.msra.mxu0 %v2771
      %3401 = vmatpush.bf16.msra.mxu0 %v2770
      %3402 = vmatpush.bf16.msra.mxu0 %v2769
      %3403 = vmatpush.bf16.msra.mxu0 %v2768
      %3404 = vmatpush.bf16.msra.mxu0 %v2767
      %3405 = vmatmul.bf16.gmra.mxu0 %v1825
      %v3406 = vpop.f32.mrf.mxu0
      %v3407 = vadd.f32 %v3318, %v3406
      %v3408 = vpop.f32.mrf.mxu0
      %v3409 = vadd.f32 %v3320, %v3408
      %3410 = vmatmul.bf16.gmra.mxu0 %v1826
      %v3411 = vpop.f32.mrf.mxu0
      %v3412 = vadd.f32 %v3323, %v3411
      %v3413 = vpop.f32.mrf.mxu0
      %v3414 = vadd.f32 %v3325, %v3413
      %3415 = vmatmul.bf16.gmra.mxu0 %v1827
      %v3416 = vpop.f32.mrf.mxu0
      %v3417 = vadd.f32 %v3328, %v3416
      %v3418 = vpop.f32.mrf.mxu0
      %v3419 = vadd.f32 %v3330, %v3418
      %3420 = vmatmul.bf16.gmra.mxu0 %v1828
      %v3421 = vpop.f32.mrf.mxu0
      %v3422 = vadd.f32 %v3333, %v3421
      %v3423 = vpop.f32.mrf.mxu0
      %v3424 = vadd.f32 %v3335, %v3423
      %3425 = vmatmul.bf16.gmra.mxu0 %v1829
      %v3426 = vpop.f32.mrf.mxu0
      %v3427 = vadd.f32 %v3338, %v3426
      %v3428 = vpop.f32.mrf.mxu0
      %v3429 = vadd.f32 %v3340, %v3428
      %3430 = vmatmul.bf16.gmra.mxu0 %v1830
      %v3431 = vpop.f32.mrf.mxu0
      %v3432 = vadd.f32 %v3343, %v3431
      %v3433 = vpop.f32.mrf.mxu0
      %v3434 = vadd.f32 %v3345, %v3433
      %3435 = vmatmul.bf16.gmra.mxu0 %v1831
      %v3436 = vpop.f32.mrf.mxu0
      %v3437 = vadd.f32 %v3348, %v3436
      %v3438 = vpop.f32.mrf.mxu0
      %v3439 = vadd.f32 %v3350, %v3438
      %3440 = vmatmul.bf16.gmra.mxu0 %v1832
      %v3441 = vpop.f32.mrf.mxu0
      %v3442 = vadd.f32 %v3353, %v3441
      %v3443 = vpop.f32.mrf.mxu0
      %v3444 = vadd.f32 %v3355, %v3443
      %3445 = vmatmul.bf16.gmra.mxu0 %v1833
      %v3446 = vpop.f32.mrf.mxu0
      %v3447 = vadd.f32 %v3358, %v3446
      %v3448 = vpop.f32.mrf.mxu0
      %v3449 = vadd.f32 %v3360, %v3448
      %3450 = vmatmul.bf16.gmra.mxu0 %v1834
      %v3451 = vpop.f32.mrf.mxu0
      %v3452 = vadd.f32 %v3363, %v3451
      %v3453 = vpop.f32.mrf.mxu0
      %v3454 = vadd.f32 %v3365, %v3453
      %3455 = vmatmul.bf16.gmra.mxu0 %v1835
      %v3456 = vpop.f32.mrf.mxu0
      %v3457 = vadd.f32 %v3368, %v3456
      %v3458 = vpop.f32.mrf.mxu0
      %v3459 = vadd.f32 %v3370, %v3458
      %3460 = vmatmul.bf16.gmra.mxu0 %v1836
      %v3461 = vpop.f32.mrf.mxu0
      %v3462 = vadd.f32 %v3373, %v3461
      %v3463 = vpop.f32.mrf.mxu0
      %v3464 = vadd.f32 %v3375, %v3463
      %3465 = vmatmul.bf16.gmra.mxu0 %v1837
      %v3466 = vpop.f32.mrf.mxu0
      %v3467 = vadd.f32 %v3378, %v3466
      %v3468 = vpop.f32.mrf.mxu0
      %v3469 = vadd.f32 %v3380, %v3468
      %3470 = vmatmul.bf16.gmra.mxu0 %v1838
      %v3471 = vpop.f32.mrf.mxu0
      %v3472 = vadd.f32 %v3383, %v3471
      %v3473 = vpop.f32.mrf.mxu0
      %v3474 = vadd.f32 %v3385, %v3473
      %3475 = vmatmul.bf16.gmra.mxu0 %v2229
      %v3476 = vpop.f32.mrf.mxu0
      %v3477 = vadd.f32 %v3388, %v3476
      %v3478 = vpop.f32.mrf.mxu0
      %v3479 = vadd.f32 %v3390, %v3478
      %3480 = vmatmul.bf16.gmra.mxu0 %v2258
      %v3481 = vpop.f32.mrf.mxu0
      %v3482 = vadd.f32 %v3393, %v3481
      %v3483 = vpop.f32.mrf.mxu0
      %v3484 = vadd.f32 %v3395, %v3483
      %3485 = vdwg.mxu0
      %3486 = vmatpush.bf16.msra.mxu0 %v2782
      %3487 = vmatpush.bf16.msra.mxu0 %v2781
      %3488 = vmatpush.bf16.msra.mxu0 %v2780
      %3489 = vmatpush.bf16.msra.mxu0 %v2779
      %3490 = vmatpush.bf16.msra.mxu0 %v2778
      %3491 = vmatpush.bf16.msra.mxu0 %v2777
      %3492 = vmatpush.bf16.msra.mxu0 %v2776
      %3493 = vmatpush.bf16.msra.mxu0 %v2775
      %3494 = vmatmul.bf16.gmra.mxu0 %v1939
      %v3495 = vpop.f32.mrf.mxu0
      %v3496 = vadd.f32 %v3407, %v3495
      %v3497 = vpop.f32.mrf.mxu0
      %v3498 = vadd.f32 %v3409, %v3497
      %3499 = vmatmul.bf16.gmra.mxu0 %v1951
      %v3500 = vpop.f32.mrf.mxu0
      %v3501 = vadd.f32 %v3412, %v3500
      %v3502 = vpop.f32.mrf.mxu0
      %v3503 = vadd.f32 %v3414, %v3502
      %3504 = vmatmul.bf16.gmra.mxu0 %v1963
      %v3505 = vpop.f32.mrf.mxu0
      %v3506 = vadd.f32 %v3417, %v3505
      %v3507 = vpop.f32.mrf.mxu0
      %v3508 = vadd.f32 %v3419, %v3507
      %3509 = vmatmul.bf16.gmra.mxu0 %v1975
      %v3510 = vpop.f32.mrf.mxu0
      %v3511 = vadd.f32 %v3422, %v3510
      %v3512 = vpop.f32.mrf.mxu0
      %v3513 = vadd.f32 %v3424, %v3512
      %3514 = vmatmul.bf16.gmra.mxu0 %v1987
      %v3515 = vpop.f32.mrf.mxu0
      %v3516 = vadd.f32 %v3427, %v3515
      %v3517 = vpop.f32.mrf.mxu0
      %v3518 = vadd.f32 %v3429, %v3517
      %3519 = vmatmul.bf16.gmra.mxu0 %v1999
      %v3520 = vpop.f32.mrf.mxu0
      %v3521 = vadd.f32 %v3432, %v3520
      %v3522 = vpop.f32.mrf.mxu0
      %v3523 = vadd.f32 %v3434, %v3522
      %3524 = vmatmul.bf16.gmra.mxu0 %v2011
      %v3525 = vpop.f32.mrf.mxu0
      %v3526 = vadd.f32 %v3437, %v3525
      %v3527 = vpop.f32.mrf.mxu0
      %v3528 = vadd.f32 %v3439, %v3527
      %3529 = vmatmul.bf16.gmra.mxu0 %v2023
      %v3530 = vpop.f32.mrf.mxu0
      %v3531 = vadd.f32 %v3442, %v3530
      %v3532 = vpop.f32.mrf.mxu0
      %v3533 = vadd.f32 %v3444, %v3532
      %3534 = vmatmul.bf16.gmra.mxu0 %v2035
      %v3535 = vpop.f32.mrf.mxu0
      %v3536 = vadd.f32 %v3447, %v3535
      %v3537 = vpop.f32.mrf.mxu0
      %v3538 = vadd.f32 %v3449, %v3537
      %3539 = vmatmul.bf16.gmra.mxu0 %v2047
      %v3540 = vpop.f32.mrf.mxu0
      %v3541 = vadd.f32 %v3452, %v3540
      %v3542 = vpop.f32.mrf.mxu0
      %v3543 = vadd.f32 %v3454, %v3542
      %3544 = vmatmul.bf16.gmra.mxu0 %v2059
      %v3545 = vpop.f32.mrf.mxu0
      %v3546 = vadd.f32 %v3457, %v3545
      %v3547 = vpop.f32.mrf.mxu0
      %v3548 = vadd.f32 %v3459, %v3547
      %3549 = vmatmul.bf16.gmra.mxu0 %v2071
      %v3550 = vpop.f32.mrf.mxu0
      %v3551 = vadd.f32 %v3462, %v3550
      %v3552 = vpop.f32.mrf.mxu0
      %v3553 = vadd.f32 %v3464, %v3552
      %3554 = vmatmul.bf16.gmra.mxu0 %v2083
      %v3555 = vpop.f32.mrf.mxu0
      %v3556 = vadd.f32 %v3467, %v3555
      %v3557 = vpop.f32.mrf.mxu0
      %v3558 = vadd.f32 %v3469, %v3557
      %3559 = vmatmul.bf16.gmra.mxu0 %v2095
      %v3560 = vpop.f32.mrf.mxu0
      %v3561 = vadd.f32 %v3472, %v3560
      %v3562 = vpop.f32.mrf.mxu0
      %v3563 = vadd.f32 %v3474, %v3562
      %3564 = vmatmul.bf16.gmra.mxu0 %v2245
      %v3565 = vpop.f32.mrf.mxu0
      %v3566 = vadd.f32 %v3477, %v3565
      %v3567 = vpop.f32.mrf.mxu0
      %v3568 = vadd.f32 %v3479, %v3567
      %3569 = vmatmul.bf16.gmra.mxu0 %v2274
      %v3570 = vpop.f32.mrf.mxu0
      %v3571 = vadd.f32 %v3482, %v3570
      %v3572 = vpop.f32.mrf.mxu0
      %v3573 = vadd.f32 %v3484, %v3572
      %3574 = vdwg.mxu0
      %3575 = vmatpush.bf16.msra.mxu0 %v2790
      %3576 = vmatpush.bf16.msra.mxu0 %v2789
      %3577 = vmatpush.bf16.msra.mxu0 %v2788
      %3578 = vmatpush.bf16.msra.mxu0 %v2787
      %3579 = vmatpush.bf16.msra.mxu0 %v2786
      %3580 = vmatpush.bf16.msra.mxu0 %v2785
      %3581 = vmatpush.bf16.msra.mxu0 %v2784
      %3582 = vmatpush.bf16.msra.mxu0 %v2783
      %3583 = vmatmul.bf16.gmra.mxu0 %v2169
      %v3584 = vpop.f32.mrf.mxu0
      %v3585 = vadd.f32 %v3496, %v3584
      %v3586 = vpop.f32.mrf.mxu0
      %v3587 = vadd.f32 %v3498, %v3586
      %3588 = vmatmul.bf16.gmra.mxu0 %v2172
      %v3589 = vpop.f32.mrf.mxu0
      %v3590 = vadd.f32 %v3501, %v3589
      %v3591 = vpop.f32.mrf.mxu0
      %v3592 = vadd.f32 %v3503, %v3591
      %3593 = vmatmul.bf16.gmra.mxu0 %v2175
      %v3594 = vpop.f32.mrf.mxu0
      %v3595 = vadd.f32 %v3506, %v3594
      %v3596 = vpop.f32.mrf.mxu0
      %v3597 = vadd.f32 %v3508, %v3596
      %3598 = vmatmul.bf16.gmra.mxu0 %v2178
      %v3599 = vpop.f32.mrf.mxu0
      %v3600 = vadd.f32 %v3511, %v3599
      %v3601 = vpop.f32.mrf.mxu0
      %v3602 = vadd.f32 %v3513, %v3601
      %3603 = vmatmul.bf16.gmra.mxu0 %v2181
      %v3604 = vpop.f32.mrf.mxu0
      %v3605 = vadd.f32 %v3516, %v3604
      %v3606 = vpop.f32.mrf.mxu0
      %v3607 = vadd.f32 %v3518, %v3606
      %3608 = vmatmul.bf16.gmra.mxu0 %v2184
      %v3609 = vpop.f32.mrf.mxu0
      %v3610 = vadd.f32 %v3521, %v3609
      %v3611 = vpop.f32.mrf.mxu0
      %v3612 = vadd.f32 %v3523, %v3611
      %3613 = vmatmul.bf16.gmra.mxu0 %v2187
      %v3614 = vpop.f32.mrf.mxu0
      %v3615 = vadd.f32 %v3526, %v3614
      %v3616 = vpop.f32.mrf.mxu0
      %v3617 = vadd.f32 %v3528, %v3616
      %3618 = vmatmul.bf16.gmra.mxu0 %v2190
      %v3619 = vpop.f32.mrf.mxu0
      %v3620 = vadd.f32 %v3531, %v3619
      %v3621 = vpop.f32.mrf.mxu0
      %v3622 = vadd.f32 %v3533, %v3621
      %3623 = vmatmul.bf16.gmra.mxu0 %v2193
      %v3624 = vpop.f32.mrf.mxu0
      %v3625 = vadd.f32 %v3536, %v3624
      %v3626 = vpop.f32.mrf.mxu0
      %v3627 = vadd.f32 %v3538, %v3626
      %3628 = vmatmul.bf16.gmra.mxu0 %v2196
      %v3629 = vpop.f32.mrf.mxu0
      %v3630 = vadd.f32 %v3541, %v3629
      %v3631 = vpop.f32.mrf.mxu0
      %v3632 = vadd.f32 %v3543, %v3631
      %3633 = vmatmul.bf16.gmra.mxu0 %v2199
      %v3634 = vpop.f32.mrf.mxu0
      %v3635 = vadd.f32 %v3546, %v3634
      %v3636 = vpop.f32.mrf.mxu0
      %v3637 = vadd.f32 %v3548, %v3636
      %3638 = vmatmul.bf16.gmra.mxu0 %v2202
      %v3639 = vpop.f32.mrf.mxu0
      %v3640 = vadd.f32 %v3551, %v3639
      %v3641 = vpop.f32.mrf.mxu0
      %v3642 = vadd.f32 %v3553, %v3641
      %3643 = vmatmul.bf16.gmra.mxu0 %v2205
      %v3644 = vpop.f32.mrf.mxu0
      %v3645 = vadd.f32 %v3556, %v3644
      %v3646 = vpop.f32.mrf.mxu0
      %v3647 = vadd.f32 %v3558, %v3646
      %3648 = vmatmul.bf16.gmra.mxu0 %v2208
      %v3649 = vpop.f32.mrf.mxu0
      %v3650 = vadd.f32 %v3561, %v3649
      %v3651 = vpop.f32.mrf.mxu0
      %v3652 = vadd.f32 %v3563, %v3651
      %3653 = vmatmul.bf16.gmra.mxu0 %v2252
      %v3654 = vpop.f32.mrf.mxu0
      %v3655 = vadd.f32 %v3566, %v3654
      %v3656 = vpop.f32.mrf.mxu0
      %v3657 = vadd.f32 %v3568, %v3656
      %3658 = vmatmul.bf16.gmra.mxu0 %v2281
      %v3659 = vpop.f32.mrf.mxu0
      %v3660 = vadd.f32 %v3571, %v3659
      %v3661 = vpop.f32.mrf.mxu0
      %v3662 = vadd.f32 %v3573, %v3661
      %3663 = vdwg.mxu0
      %v3664 = vmax.f32 %v3585, 0.0
      %v3665 = vmax.f32 %v3587, 0.0
      %v3666 = vmax.f32 %v3590, 0.0
      %v3667 = vmax.f32 %v3592, 0.0
      %v3668 = vmax.f32 %v3595, 0.0
      %v3669 = vmax.f32 %v3597, 0.0
      %v3670 = vmax.f32 %v3600, 0.0
      %v3671 = vmax.f32 %v3602, 0.0
      %v3672 = vmax.f32 %v3605, 0.0
      %v3673 = vmax.f32 %v3607, 0.0
      %v3674 = vmax.f32 %v3610, 0.0
      %v3675 = vmax.f32 %v3612, 0.0
      %v3676 = vmax.f32 %v3615, 0.0
      %v3677 = vmax.f32 %v3617, 0.0
      %v3678 = vmax.f32 %v3620, 0.0
      %v3679 = vmax.f32 %v3622, 0.0
      %v3680 = vmax.f32 %v3625, 0.0
      %v3681 = vmax.f32 %v3627, 0.0
      %v3682 = vmax.f32 %v3630, 0.0
      %v3683 = vmax.f32 %v3632, 0.0
      %v3684 = vmax.f32 %v3635, 0.0
      %v3685 = vmax.f32 %v3637, 0.0
      %v3686 = vmax.f32 %v3640, 0.0
      %v3687 = vmax.f32 %v3642, 0.0
      %v3688 = vmax.f32 %v3645, 0.0
      %v3689 = vmax.f32 %v3647, 0.0
      %v3690 = vmax.f32 %v3650, 0.0
      %v3691 = vmax.f32 %v3652, 0.0
      %v3692 = vmax.f32 %v3655, 0.0
      %v3693 = vmax.f32 %v3657, 0.0
      %v3694 = vmax.f32 %v3660, 0.0
      %v3695 = vmax.f32 %v3662, 0.0
      %3696 = vst [vmem:[#allocation3] sm:$0xf] 0
      %3697 = vst [vmem:[#allocation3 + $0x4] sm:$0xf] 0
      %3698 = vst [vmem:[#allocation3 + $0x8] sm:$0x1] 0
      %3699 = vst [vmem:[#allocation3 + $0xc] sm:$0xf] 0
      %3700 = vst [vmem:[#allocation3 + $0x10] sm:$0xf] 0
      %3701 = vst [vmem:[#allocation3 + $0x14] sm:$0x1] 0
      %3702 = vst [vmem:[#allocation3 + $0x18] sm:$0xf] 0
      %3703 = vst [vmem:[#allocation3 + $0x1c] sm:$0xf] 0
      %3704 = vst [vmem:[#allocation3 + $0x20] sm:$0x1] 0
      %3705 = vst [vmem:[#allocation3 + $0x24] sm:$0xf] 0
      %3706 = vst [vmem:[#allocation3 + $0x28] sm:$0xf] 0
      %3707 = vst [vmem:[#allocation3 + $0x2c] sm:$0x1] 0
      %3708 = vst [vmem:[#allocation3 + $0x30] sm:$0xf] 0
      %3709 = vst [vmem:[#allocation3 + $0x34] sm:$0xf] 0
      %3710 = vst [vmem:[#allocation3 + $0x38] sm:$0x1] 0
      %3711 = vst [vmem:[#allocation3 + $0x3c] sm:$0xf] 0
      %3712 = vst [vmem:[#allocation3 + $0x40] sm:$0xf] 0
      %3713 = vst [vmem:[#allocation3 + $0x44] sm:$0x1] 0
      %3714 = vst [vmem:[#allocation3 + $0x48] sm:$0xf] 0
      %3715 = vst [vmem:[#allocation3 + $0x4c] sm:$0xf] 0
      %3716 = vst [vmem:[#allocation3 + $0x50] sm:$0x1] 0
      %3717 = vst [vmem:[#allocation3 + $0x54] sm:$0xf] 0
      %3718 = vst [vmem:[#allocation3 + $0x58] sm:$0xf] 0
      %3719 = vst [vmem:[#allocation3 + $0x5c] sm:$0x1] 0
      %3720 = vst [vmem:[#allocation3 + $0x60] sm:$0xf] 0
      %3721 = vst [vmem:[#allocation3 + $0x64] sm:$0xf] 0
      %3722 = vst [vmem:[#allocation3 + $0x68] sm:$0x1] 0
      %3723 = vst [vmem:[#allocation3 + $0x6c] sm:$0xf] 0
      %3724 = vst [vmem:[#allocation3 + $0x70] sm:$0xf] 0
      %3725 = vst [vmem:[#allocation3 + $0x74] sm:$0x1] 0
      %3726 = vst [vmem:[#allocation3 + $0x78] sm:$0xf] 0
      %3727 = vst [vmem:[#allocation3 + $0x7c] sm:$0xf] 0
      %3728 = vst [vmem:[#allocation3 + $0x80] sm:$0x1] 0
      %3729 = vst [vmem:[#allocation3 + $0x84] sm:$0xf] 0
      %3730 = vst [vmem:[#allocation3 + $0x88] sm:$0xf] 0
      %3731 = vst [vmem:[#allocation3 + $0x8c] sm:$0x1] 0
      %3732 = vst [vmem:[#allocation3 + $0x90] sm:$0xf] 0
      %3733 = vst [vmem:[#allocation3 + $0x94] sm:$0xf] 0
      %3734 = vst [vmem:[#allocation3 + $0x98] sm:$0x1] 0
      %3735 = vst [vmem:[#allocation3 + $0x9c] sm:$0xf] 0
      %3736 = vst [vmem:[#allocation3 + $0xa0] sm:$0xf] 0
      %3737 = vst [vmem:[#allocation3 + $0xa4] sm:$0x1] 0
      %3738 = vst [vmem:[#allocation3 + $0xa8] sm:$0xf] 0
      %3739 = vst [vmem:[#allocation3 + $0xac] sm:$0xf] 0
      %3740 = vst [vmem:[#allocation3 + $0xb0] sm:$0x1] 0
      %3741 = vst [vmem:[#allocation3 + $0xb4] sm:$0xf] 0
      %3742 = vst [vmem:[#allocation3 + $0xb8] sm:$0xf] 0
      %3743 = vst [vmem:[#allocation3 + $0xbc] sm:$0x1] 0
      %3744 = vst [vmem:[#allocation3 + $0xc0] sm:$0xf] 0
      %3745 = vst [vmem:[#allocation3 + $0xc4] sm:$0xf] 0
      %3746 = vst [vmem:[#allocation3 + $0xc8] sm:$0x1] 0
      %3747 = vst [vmem:[#allocation3 + $0xcc] sm:$0xf] 0
      %3748 = vst [vmem:[#allocation3 + $0xd0] sm:$0xf] 0
      %3749 = vst [vmem:[#allocation3 + $0xd4] sm:$0x1] 0
      %v3750 = vpack.c.bf16 %v3664, %v3664
      %v3751 = vpack.c.bf16 %v3665, %v3665
      %v3752 = vpack.c.bf16 %v3666, %v3666
      %v3753 = vpack.c.bf16 %v3667, %v3667
      %v3754 = vpack.c.bf16 %v3668, %v3668
      %v3755 = vpack.c.bf16 %v3669, %v3669
      %v3756 = vpack.c.bf16 %v3670, %v3670
      %v3757 = vpack.c.bf16 %v3671, %v3671
      %v3758 = vpack.c.bf16 %v3672, %v3672
      %v3759 = vpack.c.bf16 %v3673, %v3673
      %v3760 = vpack.c.bf16 %v3674, %v3674
      %v3761 = vpack.c.bf16 %v3675, %v3675
      %v3762 = vpack.c.bf16 %v3676, %v3676
      %v3763 = vpack.c.bf16 %v3677, %v3677
      %v3764 = vpack.c.bf16 %v3678, %v3678
      %v3765 = vpack.c.bf16 %v3679, %v3679
      %v3766 = vpack.c.bf16 %v3680, %v3680
      %v3767 = vpack.c.bf16 %v3681, %v3681
      %v3768 = vpack.c.bf16 %v3682, %v3682
      %v3769 = vpack.c.bf16 %v3683, %v3683
      %v3770 = vpack.c.bf16 %v3684, %v3684
      %v3771 = vpack.c.bf16 %v3685, %v3685
      %v3772 = vpack.c.bf16 %v3686, %v3686
      %v3773 = vpack.c.bf16 %v3687, %v3687
      %v3774 = vpack.c.bf16 %v3688, %v3688
      %v3775 = vpack.c.bf16 %v3689, %v3689
      %v3776 = vpack.c.bf16 %v3690, %v3690
      %v3777 = vpack.c.bf16 %v3691, %v3691
      %v3778 = vpack.c.bf16 %v3692, %v3692
      %v3779 = vpack.c.bf16 %v3693, %v3693
      %v3780 = vpack.c.bf16 %v3694, %v3694
      %v3781 = vpack.c.bf16 %v3695, %v3695
      %v3783 = vshrl.u32 %v3750, 16
      %v3785 = vrot.slane %v3783, 7
      %v3786 = vshll.u32 %v3750, 16
      %v3788 = vor.u32 %v3785, %v3786
      %v3789 = vrot.slane %v3785, 4
      %v3791 = vshrl.u32 %v3751, 16
      %v3793 = vrot.slane %v3791, 7
      %v3794 = vshll.u32 %v3751, 16
      %v3796 = vor.u32 %v3793, %v3794
      %v3797 = vsel %vm650, %v3789, %v3796
      %v3798 = vrot.slane %v3793, 4
      %v3800 = vshrl.u32 %v3752, 16
      %v3802 = vrot.slane %v3800, 7
      %v3803 = vshll.u32 %v3752, 16
      %v3805 = vor.u32 %v3802, %v3803
      %v3806 = vrot.slane %v3802, 4
      %v3808 = vshrl.u32 %v3753, 16
      %v3810 = vrot.slane %v3808, 7
      %v3811 = vshll.u32 %v3753, 16
      %v3813 = vor.u32 %v3810, %v3811
      %v3814 = vsel %vm650, %v3806, %v3813
      %v3815 = vrot.slane %v3810, 4
      %v3817 = vshrl.u32 %v3754, 16
      %v3819 = vrot.slane %v3817, 7
      %v3820 = vshll.u32 %v3754, 16
      %v3822 = vor.u32 %v3819, %v3820
      %v3823 = vrot.slane %v3819, 4
      %v3825 = vshrl.u32 %v3755, 16
      %v3827 = vrot.slane %v3825, 7
      %v3828 = vshll.u32 %v3755, 16
      %v3830 = vor.u32 %v3827, %v3828
      %v3831 = vsel %vm650, %v3823, %v3830
      %v3832 = vrot.slane %v3827, 4
      %v3834 = vshrl.u32 %v3756, 16
      %v3836 = vrot.slane %v3834, 7
      %v3837 = vshll.u32 %v3756, 16
      %v3839 = vor.u32 %v3836, %v3837
      %v3840 = vrot.slane %v3836, 4
      %v3842 = vshrl.u32 %v3757, 16
      %v3844 = vrot.slane %v3842, 7
      %v3845 = vshll.u32 %v3757, 16
      %v3847 = vor.u32 %v3844, %v3845
      %v3848 = vsel %vm650, %v3840, %v3847
      %v3849 = vrot.slane %v3844, 4
      %v3851 = vshrl.u32 %v3758, 16
      %v3853 = vrot.slane %v3851, 7
      %v3854 = vshll.u32 %v3758, 16
      %v3856 = vor.u32 %v3853, %v3854
      %v3857 = vrot.slane %v3853, 4
      %v3859 = vshrl.u32 %v3759, 16
      %v3861 = vrot.slane %v3859, 7
      %v3862 = vshll.u32 %v3759, 16
      %v3864 = vor.u32 %v3861, %v3862
      %v3865 = vsel %vm650, %v3857, %v3864
      %v3866 = vrot.slane %v3861, 4
      %v3868 = vshrl.u32 %v3760, 16
      %v3870 = vrot.slane %v3868, 7
      %v3871 = vshll.u32 %v3760, 16
      %v3873 = vor.u32 %v3870, %v3871
      %v3874 = vrot.slane %v3870, 4
      %v3876 = vshrl.u32 %v3761, 16
      %v3878 = vrot.slane %v3876, 7
      %v3879 = vshll.u32 %v3761, 16
      %v3881 = vor.u32 %v3878, %v3879
      %v3882 = vsel %vm650, %v3874, %v3881
      %v3883 = vrot.slane %v3878, 4
      %v3885 = vshrl.u32 %v3762, 16
      %v3887 = vrot.slane %v3885, 7
      %v3888 = vshll.u32 %v3762, 16
      %v3890 = vor.u32 %v3887, %v3888
      %v3891 = vrot.slane %v3887, 4
      %v3893 = vshrl.u32 %v3763, 16
      %v3895 = vrot.slane %v3893, 7
      %v3896 = vshll.u32 %v3763, 16
      %v3898 = vor.u32 %v3895, %v3896
      %v3899 = vsel %vm650, %v3891, %v3898
      %v3900 = vrot.slane %v3895, 4
      %v3902 = vshrl.u32 %v3764, 16
      %v3904 = vrot.slane %v3902, 7
      %v3905 = vshll.u32 %v3764, 16
      %v3907 = vor.u32 %v3904, %v3905
      %v3908 = vrot.slane %v3904, 4
      %v3910 = vshrl.u32 %v3765, 16
      %v3912 = vrot.slane %v3910, 7
      %v3913 = vshll.u32 %v3765, 16
      %v3915 = vor.u32 %v3912, %v3913
      %v3916 = vsel %vm650, %v3908, %v3915
      %v3917 = vrot.slane %v3912, 4
      %v3919 = vshrl.u32 %v3766, 16
      %v3921 = vrot.slane %v3919, 7
      %v3922 = vshll.u32 %v3766, 16
      %v3924 = vor.u32 %v3921, %v3922
      %v3925 = vrot.slane %v3921, 4
      %v3927 = vshrl.u32 %v3767, 16
      %v3929 = vrot.slane %v3927, 7
      %v3930 = vshll.u32 %v3767, 16
      %v3932 = vor.u32 %v3929, %v3930
      %v3933 = vsel %vm650, %v3925, %v3932
      %v3934 = vrot.slane %v3929, 4
      %v3936 = vshrl.u32 %v3768, 16
      %v3938 = vrot.slane %v3936, 7
      %v3939 = vshll.u32 %v3768, 16
      %v3941 = vor.u32 %v3938, %v3939
      %v3942 = vrot.slane %v3938, 4
      %v3944 = vshrl.u32 %v3769, 16
      %v3946 = vrot.slane %v3944, 7
      %v3947 = vshll.u32 %v3769, 16
      %v3949 = vor.u32 %v3946, %v3947
      %v3950 = vsel %vm650, %v3942, %v3949
      %v3951 = vrot.slane %v3946, 4
      %v3953 = vshrl.u32 %v3770, 16
      %v3955 = vrot.slane %v3953, 7
      %v3956 = vshll.u32 %v3770, 16
      %v3958 = vor.u32 %v3955, %v3956
      %v3959 = vrot.slane %v3955, 4
      %v3961 = vshrl.u32 %v3771, 16
      %v3963 = vrot.slane %v3961, 7
      %v3964 = vshll.u32 %v3771, 16
      %v3966 = vor.u32 %v3963, %v3964
      %v3967 = vsel %vm650, %v3959, %v3966
      %v3968 = vrot.slane %v3963, 4
      %v3970 = vshrl.u32 %v3772, 16
      %v3972 = vrot.slane %v3970, 7
      %v3973 = vshll.u32 %v3772, 16
      %v3975 = vor.u32 %v3972, %v3973
      %v3976 = vrot.slane %v3972, 4
      %v3978 = vshrl.u32 %v3773, 16
      %v3980 = vrot.slane %v3978, 7
      %v3981 = vshll.u32 %v3773, 16
      %v3983 = vor.u32 %v3980, %v3981
      %v3984 = vsel %vm650, %v3976, %v3983
      %v3985 = vrot.slane %v3980, 4
      %v3987 = vshrl.u32 %v3774, 16
      %v3989 = vrot.slane %v3987, 7
      %v3990 = vshll.u32 %v3774, 16
      %v3992 = vor.u32 %v3989, %v3990
      %v3993 = vrot.slane %v3989, 4
      %v3995 = vshrl.u32 %v3775, 16
      %v3997 = vrot.slane %v3995, 7
      %v3998 = vshll.u32 %v3775, 16
      %v4000 = vor.u32 %v3997, %v3998
      %v4001 = vsel %vm650, %v3993, %v4000
      %v4002 = vrot.slane %v3997, 4
      %v4004 = vshrl.u32 %v3776, 16
      %v4006 = vrot.slane %v4004, 7
      %v4007 = vshll.u32 %v3776, 16
      %v4009 = vor.u32 %v4006, %v4007
      %v4010 = vrot.slane %v4006, 4
      %v4012 = vshrl.u32 %v3777, 16
      %v4014 = vrot.slane %v4012, 7
      %v4015 = vshll.u32 %v3777, 16
      %v4017 = vor.u32 %v4014, %v4015
      %v4018 = vsel %vm650, %v4010, %v4017
      %v4019 = vrot.slane %v4014, 4
      %v4021 = vshrl.u32 %v3778, 16
      %v4023 = vrot.slane %v4021, 7
      %v4024 = vshll.u32 %v3778, 16
      %v4026 = vor.u32 %v4023, %v4024
      %v4027 = vrot.slane %v4023, 4
      %v4029 = vshrl.u32 %v3779, 16
      %v4031 = vrot.slane %v4029, 7
      %v4032 = vshll.u32 %v3779, 16
      %v4034 = vor.u32 %v4031, %v4032
      %v4035 = vsel %vm650, %v4027, %v4034
      %v4036 = vrot.slane %v4031, 4
      %v4038 = vshrl.u32 %v3780, 16
      %v4040 = vrot.slane %v4038, 7
      %v4041 = vshll.u32 %v3780, 16
      %v4043 = vor.u32 %v4040, %v4041
      %v4044 = vrot.slane %v4040, 4
      %v4046 = vshrl.u32 %v3781, 16
      %v4048 = vrot.slane %v4046, 7
      %v4049 = vshll.u32 %v3781, 16
      %v4051 = vor.u32 %v4048, %v4049
      %v4052 = vsel %vm650, %v4044, %v4051
      %v4053 = vrot.slane %v4048, 4
      %s4102 = scalar_lea.vmem [#allocation3], 12
      %vm4103 = vcmask 1043456
      %vm4104 = vmand %vm4103, %vm973
      %v4105 = vld [vmem:[%s4102] sm:$0xf]
      %v4106 = vsel %vm4104, %v3788, %v4105
      %4107 = vst [vmem:[%s4102] sm:$0xf] %v4106
      %4108 = vst [vmem:[%s4102 + $0x4] sm:$0xf] %v3797
      %vm4109 = vcmask 1040384
      %vm4110 = vmand %vm4109, %vm648
      %v4111 = vld [vmem:[%s4102 + $0x8] sm:$0x1]
      %v4112 = vsel %vm4110, %v3798, %v4111
      %4113 = vst [vmem:[%s4102 + $0x8] sm:$0x1] %v4112
      %v4114 = vld [vmem:[%s4102 + $0xc] sm:$0xf]
      %v4115 = vsel %vm4104, %v3805, %v4114
      %4116 = vst [vmem:[%s4102 + $0xc] sm:$0xf] %v4115
      %4117 = vst [vmem:[%s4102 + $0x10] sm:$0xf] %v3814
      %v4118 = vld [vmem:[%s4102 + $0x14] sm:$0x1]
      %v4119 = vsel %vm4110, %v3815, %v4118
      %4120 = vst [vmem:[%s4102 + $0x14] sm:$0x1] %v4119
      %v4121 = vld [vmem:[%s4102 + $0x18] sm:$0xf]
      %v4122 = vsel %vm4104, %v3822, %v4121
      %4123 = vst [vmem:[%s4102 + $0x18] sm:$0xf] %v4122
      %4124 = vst [vmem:[%s4102 + $0x1c] sm:$0xf] %v3831
      %v4125 = vld [vmem:[%s4102 + $0x20] sm:$0x1]
      %v4126 = vsel %vm4110, %v3832, %v4125
      %4127 = vst [vmem:[%s4102 + $0x20] sm:$0x1] %v4126
      %v4128 = vld [vmem:[%s4102 + $0x24] sm:$0xf]
      %v4129 = vsel %vm4104, %v3839, %v4128
      %4130 = vst [vmem:[%s4102 + $0x24] sm:$0xf] %v4129
      %4131 = vst [vmem:[%s4102 + $0x28] sm:$0xf] %v3848
      %v4132 = vld [vmem:[%s4102 + $0x2c] sm:$0x1]
      %v4133 = vsel %vm4110, %v3849, %v4132
      %4134 = vst [vmem:[%s4102 + $0x2c] sm:$0x1] %v4133
      %v4135 = vld [vmem:[%s4102 + $0x30] sm:$0xf]
      %v4136 = vsel %vm4104, %v3856, %v4135
      %4137 = vst [vmem:[%s4102 + $0x30] sm:$0xf] %v4136
      %4138 = vst [vmem:[%s4102 + $0x34] sm:$0xf] %v3865
      %v4139 = vld [vmem:[%s4102 + $0x38] sm:$0x1]
      %v4140 = vsel %vm4110, %v3866, %v4139
      %4141 = vst [vmem:[%s4102 + $0x38] sm:$0x1] %v4140
      %v4142 = vld [vmem:[%s4102 + $0x3c] sm:$0xf]
      %v4143 = vsel %vm4104, %v3873, %v4142
      %4144 = vst [vmem:[%s4102 + $0x3c] sm:$0xf] %v4143
      %4145 = vst [vmem:[%s4102 + $0x40] sm:$0xf] %v3882
      %v4146 = vld [vmem:[%s4102 + $0x44] sm:$0x1]
      %v4147 = vsel %vm4110, %v3883, %v4146
      %4148 = vst [vmem:[%s4102 + $0x44] sm:$0x1] %v4147
      %v4149 = vld [vmem:[%s4102 + $0x48] sm:$0xf]
      %v4150 = vsel %vm4104, %v3890, %v4149
      %4151 = vst [vmem:[%s4102 + $0x48] sm:$0xf] %v4150
      %4152 = vst [vmem:[%s4102 + $0x4c] sm:$0xf] %v3899
      %v4153 = vld [vmem:[%s4102 + $0x50] sm:$0x1]
      %v4154 = vsel %vm4110, %v3900, %v4153
      %4155 = vst [vmem:[%s4102 + $0x50] sm:$0x1] %v4154
      %v4156 = vld [vmem:[%s4102 + $0x54] sm:$0xf]
      %v4157 = vsel %vm4104, %v3907, %v4156
      %4158 = vst [vmem:[%s4102 + $0x54] sm:$0xf] %v4157
      %4159 = vst [vmem:[%s4102 + $0x58] sm:$0xf] %v3916
      %v4160 = vld [vmem:[%s4102 + $0x5c] sm:$0x1]
      %v4161 = vsel %vm4110, %v3917, %v4160
      %4162 = vst [vmem:[%s4102 + $0x5c] sm:$0x1] %v4161
      %v4163 = vld [vmem:[%s4102 + $0x60] sm:$0xf]
      %v4164 = vsel %vm4104, %v3924, %v4163
      %4165 = vst [vmem:[%s4102 + $0x60] sm:$0xf] %v4164
      %4166 = vst [vmem:[%s4102 + $0x64] sm:$0xf] %v3933
      %v4167 = vld [vmem:[%s4102 + $0x68] sm:$0x1]
      %v4168 = vsel %vm4110, %v3934, %v4167
      %4169 = vst [vmem:[%s4102 + $0x68] sm:$0x1] %v4168
      %v4170 = vld [vmem:[%s4102 + $0x6c] sm:$0xf]
      %v4171 = vsel %vm4104, %v3941, %v4170
      %4172 = vst [vmem:[%s4102 + $0x6c] sm:$0xf] %v4171
      %4173 = vst [vmem:[%s4102 + $0x70] sm:$0xf] %v3950
      %v4174 = vld [vmem:[%s4102 + $0x74] sm:$0x1]
      %v4175 = vsel %vm4110, %v3951, %v4174
      %4176 = vst [vmem:[%s4102 + $0x74] sm:$0x1] %v4175
      %v4177 = vld [vmem:[%s4102 + $0x78] sm:$0xf]
      %v4178 = vsel %vm4104, %v3958, %v4177
      %4179 = vst [vmem:[%s4102 + $0x78] sm:$0xf] %v4178
      %4180 = vst [vmem:[%s4102 + $0x7c] sm:$0xf] %v3967
      %v4181 = vld [vmem:[%s4102 + $0x80] sm:$0x1]
      %v4182 = vsel %vm4110, %v3968, %v4181
      %4183 = vst [vmem:[%s4102 + $0x80] sm:$0x1] %v4182
      %v4184 = vld [vmem:[%s4102 + $0x84] sm:$0xf]
      %v4185 = vsel %vm4104, %v3975, %v4184
      %4186 = vst [vmem:[%s4102 + $0x84] sm:$0xf] %v4185
      %4187 = vst [vmem:[%s4102 + $0x88] sm:$0xf] %v3984
      %v4188 = vld [vmem:[%s4102 + $0x8c] sm:$0x1]
      %v4189 = vsel %vm4110, %v3985, %v4188
      %4190 = vst [vmem:[%s4102 + $0x8c] sm:$0x1] %v4189
      %v4191 = vld [vmem:[%s4102 + $0x90] sm:$0xf]
      %v4192 = vsel %vm4104, %v3992, %v4191
      %4193 = vst [vmem:[%s4102 + $0x90] sm:$0xf] %v4192
      %4194 = vst [vmem:[%s4102 + $0x94] sm:$0xf] %v4001
      %v4195 = vld [vmem:[%s4102 + $0x98] sm:$0x1]
      %v4196 = vsel %vm4110, %v4002, %v4195
      %4197 = vst [vmem:[%s4102 + $0x98] sm:$0x1] %v4196
      %v4198 = vld [vmem:[%s4102 + $0x9c] sm:$0xf]
      %v4199 = vsel %vm4104, %v4009, %v4198
      %4200 = vst [vmem:[%s4102 + $0x9c] sm:$0xf] %v4199
      %4201 = vst [vmem:[%s4102 + $0xa0] sm:$0xf] %v4018
      %v4202 = vld [vmem:[%s4102 + $0xa4] sm:$0x1]
      %v4203 = vsel %vm4110, %v4019, %v4202
      %4204 = vst [vmem:[%s4102 + $0xa4] sm:$0x1] %v4203
      %v4205 = vld [vmem:[%s4102 + $0xa8] sm:$0xf]
      %v4206 = vsel %vm4104, %v4026, %v4205
      %4207 = vst [vmem:[%s4102 + $0xa8] sm:$0xf] %v4206
      %4208 = vst [vmem:[%s4102 + $0xac] sm:$0xf] %v4035
      %v4209 = vld [vmem:[%s4102 + $0xb0] sm:$0x1]
      %v4210 = vsel %vm4110, %v4036, %v4209
      %4211 = vst [vmem:[%s4102 + $0xb0] sm:$0x1] %v4210
      %v4212 = vld [vmem:[%s4102 + $0xb4] sm:$0xf]
      %v4213 = vsel %vm4104, %v4043, %v4212
      %4214 = vst [vmem:[%s4102 + $0xb4] sm:$0xf] %v4213
      %4215 = vst [vmem:[%s4102 + $0xb8] sm:$0xf] %v4052
      %v4216 = vld [vmem:[%s4102 + $0xbc] sm:$0x1]
      %v4217 = vsel %vm4110, %v4053, %v4216
      %4218 = vst [vmem:[%s4102 + $0xbc] sm:$0x1] %v4217
      %v4219 = vld [vmem:[#allocation3] sm:$0xf]
      %v4220 = vld [vmem:[#allocation3 + $0x4] sm:$0xf]
      %v4221 = vld [vmem:[#allocation3 + $0xc] sm:$0xf]
      %v4222 = vld [vmem:[#allocation3 + $0x10] sm:$0xf]
      %v4223 = vld [vmem:[#allocation3 + $0x18] sm:$0xf]
      %v4224 = vld [vmem:[#allocation3 + $0x1c] sm:$0xf]
      %v4225 = vld [vmem:[#allocation3 + $0x24] sm:$0xf]
      %v4226 = vld [vmem:[#allocation3 + $0x28] sm:$0xf]
      %v4227 = vld [vmem:[#allocation3 + $0x30] sm:$0xf]
      %v4228 = vld [vmem:[#allocation3 + $0x34] sm:$0xf]
      %v4229 = vld [vmem:[#allocation3 + $0x3c] sm:$0xf]
      %v4230 = vld [vmem:[#allocation3 + $0x40] sm:$0xf]
      %v4231 = vld [vmem:[#allocation3 + $0x48] sm:$0xf]
      %v4232 = vld [vmem:[#allocation3 + $0x4c] sm:$0xf]
      %v4233 = vld [vmem:[#allocation3 + $0x54] sm:$0xf]
      %v4234 = vld [vmem:[#allocation3 + $0x58] sm:$0xf]
      %v4235 = vld [vmem:[#allocation3 + $0x60] sm:$0xf]
      %v4236 = vld [vmem:[#allocation3 + $0x64] sm:$0xf]
      %v4237 = vld [vmem:[#allocation3 + $0x6c] sm:$0xf]
      %v4238 = vld [vmem:[#allocation3 + $0x70] sm:$0xf]
      %v4239 = vld [vmem:[#allocation3 + $0x78] sm:$0xf]
      %v4240 = vld [vmem:[#allocation3 + $0x7c] sm:$0xf]
      %v4241 = vld [vmem:[#allocation3 + $0x84] sm:$0xf]
      %v4242 = vld [vmem:[#allocation3 + $0x88] sm:$0xf]
      %v4243 = vld [vmem:[#allocation3 + $0x90] sm:$0xf]
      %v4244 = vld [vmem:[#allocation3 + $0x94] sm:$0xf]
      %v4245 = vld [vmem:[#allocation3 + $0x9c] sm:$0xf]
      %v4246 = vld [vmem:[#allocation3 + $0xa0] sm:$0xf]
      %v4247 = vld [vmem:[#allocation3 + $0xa8] sm:$0xf]
      %v4248 = vld [vmem:[#allocation3 + $0xac] sm:$0xf]
      %v4249 = vld [vmem:[#allocation3 + $0xb4] sm:$0xf]
      %v4250 = vld [vmem:[#allocation3 + $0xb8] sm:$0xf]
      %v4251 = vld [vmem:[#allocation3 + $0xc0] sm:$0xf]
      %v4252 = vld [vmem:[#allocation3 + $0xc4] sm:$0xf]
      %v4253 = vld [vmem:[#allocation3 + $0xcc] sm:$0xf]
      %v4254 = vld [vmem:[#allocation3 + $0xd0] sm:$0xf]
      %v4255 = vld [vmem:[#allocation3 + $0x8] sm:$0x1]
      %v4256 = vld [vmem:[#allocation3 + $0x14] sm:$0x1]
      %v4257 = vld [vmem:[#allocation3 + $0x20] sm:$0x1]
      %v4258 = vld [vmem:[#allocation3 + $0x2c] sm:$0x1]
      %v4259 = vld [vmem:[#allocation3 + $0x38] sm:$0x1]
      %v4260 = vld [vmem:[#allocation3 + $0x44] sm:$0x1]
      %v4261 = vld [vmem:[#allocation3 + $0x50] sm:$0x1]
      %v4262 = vld [vmem:[#allocation3 + $0x5c] sm:$0x1]
      %v4263 = vld [vmem:[#allocation3 + $0x68] sm:$0x1]
      %v4264 = vld [vmem:[#allocation3 + $0x74] sm:$0x1]
      %v4265 = vld [vmem:[#allocation3 + $0x80] sm:$0x1]
      %v4266 = vld [vmem:[#allocation3 + $0x8c] sm:$0x1]
      %v4267 = vld [vmem:[#allocation3 + $0x98] sm:$0x1]
      %v4268 = vld [vmem:[#allocation3 + $0xa4] sm:$0x1]
      %v4269 = vld [vmem:[#allocation3 + $0xb0] sm:$0x1]
      %v4270 = vld [vmem:[#allocation3 + $0xbc] sm:$0x1]
      %v4271 = vld [vmem:[#allocation3 + $0xc8] sm:$0x1]
      %v4272 = vld [vmem:[#allocation3 + $0xd4] sm:$0x1]
      %v4273 = vld [vmem:[#allocation3] sm:$0xe]
      %v4274 = vld [vmem:[#allocation3 + $0xc] sm:$0xe]
      %v4275 = vld [vmem:[#allocation3 + $0x18] sm:$0xe]
      %v4276 = vld [vmem:[#allocation3 + $0x24] sm:$0xe]
      %v4277 = vld [vmem:[#allocation3 + $0x30] sm:$0xe]
      %v4278 = vld [vmem:[#allocation3 + $0x3c] sm:$0xe]
      %v4279 = vld [vmem:[#allocation3 + $0x48] sm:$0xe]
      %v4280 = vld [vmem:[#allocation3 + $0x54] sm:$0xe]
      %v4281 = vld [vmem:[#allocation3 + $0x60] sm:$0xe]
      %v4282 = vld [vmem:[#allocation3 + $0x6c] sm:$0xe]
      %v4283 = vld [vmem:[#allocation3 + $0x78] sm:$0xe]
      %v4284 = vld [vmem:[#allocation3 + $0x84] sm:$0xe]
      %v4285 = vld [vmem:[#allocation3 + $0x90] sm:$0xe]
      %v4286 = vld [vmem:[#allocation3 + $0x9c] sm:$0xe]
      %v4287 = vld [vmem:[#allocation3 + $0xa8] sm:$0xe]
      %v4288 = vld [vmem:[#allocation3 + $0xb4] sm:$0xe]
      %v4289 = vld [vmem:[#allocation3 + $0xc0] sm:$0xe]
      %v4290 = vld [vmem:[#allocation3 + $0xcc] sm:$0xe]
      %v4323 = vunpack.c.l.b16 %v4219
      %v4324 = vunpack.c.l.b16 %v4220
      %v4325 = vunpack.c.l.b16 %v4221
      %v4326 = vunpack.c.l.b16 %v4222
      %v4327 = vunpack.c.l.b16 %v4223
      %v4328 = vunpack.c.l.b16 %v4224
      %v4329 = vunpack.c.l.b16 %v4225
      %v4330 = vunpack.c.l.b16 %v4226
      %v4331 = vunpack.c.l.b16 %v4227
      %v4332 = vunpack.c.l.b16 %v4228
      %v4333 = vunpack.c.l.b16 %v4229
      %v4334 = vunpack.c.l.b16 %v4230
      %v4335 = vunpack.c.l.b16 %v4231
      %v4336 = vunpack.c.l.b16 %v4232
      %v4337 = vunpack.c.l.b16 %v4233
      %v4338 = vunpack.c.l.b16 %v4234
      %v4339 = vunpack.c.l.b16 %v4235
      %v4340 = vunpack.c.l.b16 %v4236
      %v4341 = vunpack.c.l.b16 %v4237
      %v4342 = vunpack.c.l.b16 %v4238
      %v4343 = vunpack.c.l.b16 %v4239
      %v4344 = vunpack.c.l.b16 %v4240
      %v4345 = vunpack.c.l.b16 %v4241
      %v4346 = vunpack.c.l.b16 %v4242
      %v4347 = vunpack.c.l.b16 %v4243
      %v4348 = vunpack.c.l.b16 %v4244
      %v4349 = vunpack.c.l.b16 %v4245
      %v4350 = vunpack.c.l.b16 %v4246
      %v4351 = vunpack.c.l.b16 %v4247
      %v4352 = vunpack.c.l.b16 %v4248
      %v4353 = vunpack.c.l.b16 %v4249
      %v4354 = vunpack.c.l.b16 %v4250
      %v4355 = vpack.c.b16 %v4324, %v4323
      %v4356 = vpack.c.b16 %v4326, %v4325
      %v4357 = vpack.c.b16 %v4328, %v4327
      %v4358 = vpack.c.b16 %v4330, %v4329
      %v4359 = vpack.c.b16 %v4332, %v4331
      %v4360 = vpack.c.b16 %v4334, %v4333
      %v4361 = vpack.c.b16 %v4336, %v4335
      %v4362 = vpack.c.b16 %v4338, %v4337
      %v4363 = vpack.c.b16 %v4340, %v4339
      %v4364 = vpack.c.b16 %v4342, %v4341
      %v4365 = vpack.c.b16 %v4344, %v4343
      %v4366 = vpack.c.b16 %v4346, %v4345
      %v4367 = vpack.c.b16 %v4348, %v4347
      %v4368 = vpack.c.b16 %v4350, %v4349
      %v4369 = vpack.c.b16 %v4352, %v4351
      %v4370 = vpack.c.b16 %v4354, %v4353
      %v4403 = vunpack.c.l.b16 %v4255
      %v4404 = vunpack.c.l.b16 %v4256
      %v4405 = vunpack.c.l.b16 %v4257
      %v4406 = vunpack.c.l.b16 %v4258
      %v4407 = vunpack.c.l.b16 %v4259
      %v4408 = vunpack.c.l.b16 %v4260
      %v4409 = vunpack.c.l.b16 %v4261
      %v4410 = vunpack.c.l.b16 %v4262
      %v4411 = vunpack.c.l.b16 %v4263
      %v4412 = vunpack.c.l.b16 %v4264
      %v4413 = vunpack.c.l.b16 %v4265
      %v4414 = vunpack.c.l.b16 %v4266
      %v4415 = vunpack.c.l.b16 %v4267
      %v4416 = vunpack.c.l.b16 %v4268
      %v4417 = vunpack.c.l.b16 %v4269
      %v4418 = vunpack.c.l.b16 %v4270
      %v4419 = vpack.c.b16 %v4403, %v4403
      %v4420 = vpack.c.b16 %v4404, %v4404
      %v4421 = vpack.c.b16 %v4405, %v4405
      %v4422 = vpack.c.b16 %v4406, %v4406
      %v4423 = vpack.c.b16 %v4407, %v4407
      %v4424 = vpack.c.b16 %v4408, %v4408
      %v4425 = vpack.c.b16 %v4409, %v4409
      %v4426 = vpack.c.b16 %v4410, %v4410
      %v4427 = vpack.c.b16 %v4411, %v4411
      %v4428 = vpack.c.b16 %v4412, %v4412
      %v4429 = vpack.c.b16 %v4413, %v4413
      %v4430 = vpack.c.b16 %v4414, %v4414
      %v4431 = vpack.c.b16 %v4415, %v4415
      %v4432 = vpack.c.b16 %v4416, %v4416
      %v4433 = vpack.c.b16 %v4417, %v4417
      %v4434 = vpack.c.b16 %v4418, %v4418
      %v4436 = vshrl.u32 %v4355, 16
      %v4438 = vshll.u32 %v4355, 16
      %v4440 = vrot.slane %v4438, 1
      %v4441 = vor.u32 %v4436, %v4440
      %v4443 = vshll.u32 %v4419, 16
      %v4445 = vrot.slane %v4443, 1
      %v4446 = vsel %vm1903, %v4441, %v4445
      %v4448 = vshrl.u32 %v4356, 16
      %v4450 = vshll.u32 %v4356, 16
      %v4452 = vrot.slane %v4450, 1
      %v4453 = vor.u32 %v4448, %v4452
      %v4455 = vshll.u32 %v4420, 16
      %v4457 = vrot.slane %v4455, 1
      %v4458 = vsel %vm1903, %v4453, %v4457
      %v4460 = vshrl.u32 %v4357, 16
      %v4462 = vshll.u32 %v4357, 16
      %v4464 = vrot.slane %v4462, 1
      %v4465 = vor.u32 %v4460, %v4464
      %v4467 = vshll.u32 %v4421, 16
      %v4469 = vrot.slane %v4467, 1
      %v4470 = vsel %vm1903, %v4465, %v4469
      %v4472 = vshrl.u32 %v4358, 16
      %v4474 = vshll.u32 %v4358, 16
      %v4476 = vrot.slane %v4474, 1
      %v4477 = vor.u32 %v4472, %v4476
      %v4479 = vshll.u32 %v4422, 16
      %v4481 = vrot.slane %v4479, 1
      %v4482 = vsel %vm1903, %v4477, %v4481
      %v4484 = vshrl.u32 %v4359, 16
      %v4486 = vshll.u32 %v4359, 16
      %v4488 = vrot.slane %v4486, 1
      %v4489 = vor.u32 %v4484, %v4488
      %v4491 = vshll.u32 %v4423, 16
      %v4493 = vrot.slane %v4491, 1
      %v4494 = vsel %vm1903, %v4489, %v4493
      %v4496 = vshrl.u32 %v4360, 16
      %v4498 = vshll.u32 %v4360, 16
      %v4500 = vrot.slane %v4498, 1
      %v4501 = vor.u32 %v4496, %v4500
      %v4503 = vshll.u32 %v4424, 16
      %v4505 = vrot.slane %v4503, 1
      %v4506 = vsel %vm1903, %v4501, %v4505
      %v4508 = vshrl.u32 %v4361, 16
      %v4510 = vshll.u32 %v4361, 16
      %v4512 = vrot.slane %v4510, 1
      %v4513 = vor.u32 %v4508, %v4512
      %v4515 = vshll.u32 %v4425, 16
      %v4517 = vrot.slane %v4515, 1
      %v4518 = vsel %vm1903, %v4513, %v4517
      %v4520 = vshrl.u32 %v4362, 16
      %v4522 = vshll.u32 %v4362, 16
      %v4524 = vrot.slane %v4522, 1
      %v4525 = vor.u32 %v4520, %v4524
      %v4527 = vshll.u32 %v4426, 16
      %v4529 = vrot.slane %v4527, 1
      %v4530 = vsel %vm1903, %v4525, %v4529
      %v4532 = vshrl.u32 %v4363, 16
      %v4534 = vshll.u32 %v4363, 16
      %v4536 = vrot.slane %v4534, 1
      %v4537 = vor.u32 %v4532, %v4536
      %v4539 = vshll.u32 %v4427, 16
      %v4541 = vrot.slane %v4539, 1
      %v4542 = vsel %vm1903, %v4537, %v4541
      %v4544 = vshrl.u32 %v4364, 16
      %v4546 = vshll.u32 %v4364, 16
      %v4548 = vrot.slane %v4546, 1
      %v4549 = vor.u32 %v4544, %v4548
      %v4551 = vshll.u32 %v4428, 16
      %v4553 = vrot.slane %v4551, 1
      %v4554 = vsel %vm1903, %v4549, %v4553
      %v4556 = vshrl.u32 %v4365, 16
      %v4558 = vshll.u32 %v4365, 16
      %v4560 = vrot.slane %v4558, 1
      %v4561 = vor.u32 %v4556, %v4560
      %v4563 = vshll.u32 %v4429, 16
      %v4565 = vrot.slane %v4563, 1
      %v4566 = vsel %vm1903, %v4561, %v4565
      %v4568 = vshrl.u32 %v4366, 16
      %v4570 = vshll.u32 %v4366, 16
      %v4572 = vrot.slane %v4570, 1
      %v4573 = vor.u32 %v4568, %v4572
      %v4575 = vshll.u32 %v4430, 16
      %v4577 = vrot.slane %v4575, 1
      %v4578 = vsel %vm1903, %v4573, %v4577
      %v4580 = vshrl.u32 %v4367, 16
      %v4582 = vshll.u32 %v4367, 16
      %v4584 = vrot.slane %v4582, 1
      %v4585 = vor.u32 %v4580, %v4584
      %v4587 = vshll.u32 %v4431, 16
      %v4589 = vrot.slane %v4587, 1
      %v4590 = vsel %vm1903, %v4585, %v4589
      %v4592 = vshrl.u32 %v4368, 16
      %v4594 = vshll.u32 %v4368, 16
      %v4596 = vrot.slane %v4594, 1
      %v4597 = vor.u32 %v4592, %v4596
      %v4599 = vshll.u32 %v4432, 16
      %v4601 = vrot.slane %v4599, 1
      %v4602 = vsel %vm1903, %v4597, %v4601
      %v4604 = vshrl.u32 %v4369, 16
      %v4606 = vshll.u32 %v4369, 16
      %v4608 = vrot.slane %v4606, 1
      %v4609 = vor.u32 %v4604, %v4608
      %v4611 = vshll.u32 %v4433, 16
      %v4613 = vrot.slane %v4611, 1
      %v4614 = vsel %vm1903, %v4609, %v4613
      %v4616 = vshrl.u32 %v4370, 16
      %v4618 = vshll.u32 %v4370, 16
      %v4620 = vrot.slane %v4618, 1
      %v4621 = vor.u32 %v4616, %v4620
      %v4623 = vshll.u32 %v4434, 16
      %v4625 = vrot.slane %v4623, 1
      %v4626 = vsel %vm1903, %v4621, %v4625
      %v4659 = vunpack.c.l.b16 %v4273
      %v4660 = vunpack.c.l.b16 %v4274
      %v4661 = vunpack.c.l.b16 %v4275
      %v4662 = vunpack.c.l.b16 %v4276
      %v4663 = vunpack.c.l.b16 %v4277
      %v4664 = vunpack.c.l.b16 %v4278
      %v4665 = vunpack.c.l.b16 %v4279
      %v4666 = vunpack.c.l.b16 %v4280
      %v4667 = vunpack.c.l.b16 %v4281
      %v4668 = vunpack.c.l.b16 %v4282
      %v4669 = vunpack.c.l.b16 %v4283
      %v4670 = vunpack.c.l.b16 %v4284
      %v4671 = vunpack.c.l.b16 %v4285
      %v4672 = vunpack.c.l.b16 %v4286
      %v4673 = vunpack.c.l.b16 %v4287
      %v4674 = vunpack.c.l.b16 %v4288
      %v4675 = vpack.c.b16 %v4324, %v4659
      %v4676 = vpack.c.b16 %v4326, %v4660
      %v4677 = vpack.c.b16 %v4328, %v4661
      %v4678 = vpack.c.b16 %v4330, %v4662
      %v4679 = vpack.c.b16 %v4332, %v4663
      %v4680 = vpack.c.b16 %v4334, %v4664
      %v4681 = vpack.c.b16 %v4336, %v4665
      %v4682 = vpack.c.b16 %v4338, %v4666
      %v4683 = vpack.c.b16 %v4340, %v4667
      %v4684 = vpack.c.b16 %v4342, %v4668
      %v4685 = vpack.c.b16 %v4344, %v4669
      %v4686 = vpack.c.b16 %v4346, %v4670
      %v4687 = vpack.c.b16 %v4348, %v4671
      %v4688 = vpack.c.b16 %v4350, %v4672
      %v4689 = vpack.c.b16 %v4352, %v4673
      %v4690 = vpack.c.b16 %v4354, %v4674
      %v4691 = vrot.slane %v4675, 1
      %v4692 = vrot.slane %v4419, 1
      %v4693 = vsel %vm2160, %v4691, %v4692
      %v4694 = vrot.slane %v4676, 1
      %v4695 = vrot.slane %v4420, 1
      %v4696 = vsel %vm2160, %v4694, %v4695
      %v4697 = vrot.slane %v4677, 1
      %v4698 = vrot.slane %v4421, 1
      %v4699 = vsel %vm2160, %v4697, %v4698
      %v4700 = vrot.slane %v4678, 1
      %v4701 = vrot.slane %v4422, 1
      %v4702 = vsel %vm2160, %v4700, %v4701
      %v4703 = vrot.slane %v4679, 1
      %v4704 = vrot.slane %v4423, 1
      %v4705 = vsel %vm2160, %v4703, %v4704
      %v4706 = vrot.slane %v4680, 1
      %v4707 = vrot.slane %v4424, 1
      %v4708 = vsel %vm2160, %v4706, %v4707
      %v4709 = vrot.slane %v4681, 1
      %v4710 = vrot.slane %v4425, 1
      %v4711 = vsel %vm2160, %v4709, %v4710
      %v4712 = vrot.slane %v4682, 1
      %v4713 = vrot.slane %v4426, 1
      %v4714 = vsel %vm2160, %v4712, %v4713
      %v4715 = vrot.slane %v4683, 1
      %v4716 = vrot.slane %v4427, 1
      %v4717 = vsel %vm2160, %v4715, %v4716
      %v4718 = vrot.slane %v4684, 1
      %v4719 = vrot.slane %v4428, 1
      %v4720 = vsel %vm2160, %v4718, %v4719
      %v4721 = vrot.slane %v4685, 1
      %v4722 = vrot.slane %v4429, 1
      %v4723 = vsel %vm2160, %v4721, %v4722
      %v4724 = vrot.slane %v4686, 1
      %v4725 = vrot.slane %v4430, 1
      %v4726 = vsel %vm2160, %v4724, %v4725
      %v4727 = vrot.slane %v4687, 1
      %v4728 = vrot.slane %v4431, 1
      %v4729 = vsel %vm2160, %v4727, %v4728
      %v4730 = vrot.slane %v4688, 1
      %v4731 = vrot.slane %v4432, 1
      %v4732 = vsel %vm2160, %v4730, %v4731
      %v4733 = vrot.slane %v4689, 1
      %v4734 = vrot.slane %v4433, 1
      %v4735 = vsel %vm2160, %v4733, %v4734
      %v4736 = vrot.slane %v4690, 1
      %v4737 = vrot.slane %v4434, 1
      %v4738 = vsel %vm2160, %v4736, %v4737
      %v4757 = vunpack.c.l.b16 %v4251
      %v4758 = vunpack.c.l.b16 %v4252
      %v4759 = vpack.c.b16 %v4758, %v4757
      %v4762 = vunpack.c.l.b16 %v4271
      %v4763 = vpack.c.b16 %v4762, %v4762
      %v4765 = vshrl.u32 %v4759, 16
      %v4767 = vshll.u32 %v4759, 16
      %v4769 = vrot.slane %v4767, 1
      %v4770 = vor.u32 %v4765, %v4769
      %v4772 = vshll.u32 %v4763, 16
      %v4774 = vrot.slane %v4772, 1
      %v4775 = vsel %vm1903, %v4770, %v4774
      %v4778 = vunpack.c.l.b16 %v4289
      %v4779 = vpack.c.b16 %v4758, %v4778
      %v4780 = vrot.slane %v4779, 1
      %v4781 = vrot.slane %v4763, 1
      %v4782 = vsel %vm2160, %v4780, %v4781
      %v4786 = vunpack.c.l.b16 %v4253
      %v4787 = vunpack.c.l.b16 %v4254
      %v4788 = vpack.c.b16 %v4787, %v4786
      %v4791 = vunpack.c.l.b16 %v4272
      %v4792 = vpack.c.b16 %v4791, %v4791
      %v4794 = vshrl.u32 %v4788, 16
      %v4796 = vshll.u32 %v4788, 16
      %v4798 = vrot.slane %v4796, 1
      %v4799 = vor.u32 %v4794, %v4798
      %v4801 = vshll.u32 %v4792, 16
      %v4803 = vrot.slane %v4801, 1
      %v4804 = vsel %vm1903, %v4799, %v4803
      %v4807 = vunpack.c.l.b16 %v4290
      %v4808 = vpack.c.b16 %v4787, %v4807
      %v4809 = vrot.slane %v4808, 1
      %v4810 = vrot.slane %v4792, 1
      %v4811 = vsel %vm2160, %v4809, %v4810
      %v4813 = vld [vmem:[%s5] sm:$0xf]
      %v4814 = vld [vmem:[%s5 + $0x4] sm:$0xf]
      %v4815 = vld [vmem:[%s5 + $0x8] sm:$0xf]
      %v4816 = vld [vmem:[%s5 + $0xc] sm:$0xf]
      %v4817 = vld [vmem:[%s5 + $0x10] sm:$0xf]
      %v4818 = vld [vmem:[%s5 + $0x14] sm:$0xf]
      %v4819 = vld [vmem:[%s5 + $0x18] sm:$0xf]
      %v4820 = vld [vmem:[%s5 + $0x1c] sm:$0xf]
      %v4821 = vld [vmem:[%s5 + $0x20] sm:$0xf]
      %v4822 = vld [vmem:[%s5 + $0x24] sm:$0xf]
      %v4823 = vld [vmem:[%s5 + $0x28] sm:$0xf]
      %v4824 = vld [vmem:[%s5 + $0x2c] sm:$0xf]
      %v4825 = vld [vmem:[%s5 + $0x30] sm:$0xf]
      %v4826 = vld [vmem:[%s5 + $0x34] sm:$0xf]
      %v4827 = vld [vmem:[%s5 + $0x38] sm:$0xf]
      %v4828 = vld [vmem:[%s5 + $0x3c] sm:$0xf]
      %v4829 = vld [vmem:[%s5 + $0x40] sm:$0xf]
      %v4830 = vld [vmem:[%s5 + $0x44] sm:$0xf]
      %v4831 = vld [vmem:[%s5 + $0x48] sm:$0xf]
      %v4832 = vld [vmem:[%s5 + $0x4c] sm:$0xf]
      %v4833 = vld [vmem:[%s5 + $0x50] sm:$0xf]
      %v4834 = vld [vmem:[%s5 + $0x54] sm:$0xf]
      %v4835 = vld [vmem:[%s5 + $0x58] sm:$0xf]
      %v4836 = vld [vmem:[%s5 + $0x5c] sm:$0xf]
      %v4837 = vld [vmem:[%s5 + $0x60] sm:$0xf]
      %v4838 = vld [vmem:[%s5 + $0x64] sm:$0xf]
      %v4839 = vld [vmem:[%s5 + $0x68] sm:$0xf]
      %v4840 = vld [vmem:[%s5 + $0x6c] sm:$0xf]
      %v4841 = vld [vmem:[%s5 + $0x70] sm:$0xf]
      %v4842 = vld [vmem:[%s5 + $0x74] sm:$0xf]
      %v4843 = vld [vmem:[%s5 + $0x78] sm:$0xf]
      %v4844 = vld [vmem:[%s5 + $0x7c] sm:$0xf]
      %v4845 = vld [vmem:[%s5 + $0x80] sm:$0xf]
      %v4846 = vld [vmem:[%s5 + $0x84] sm:$0xf]
      %v4847 = vld [vmem:[%s5 + $0x88] sm:$0xf]
      %v4848 = vld [vmem:[%s5 + $0x8c] sm:$0xf]
      %v4849 = vld [vmem:[%s5 + $0x90] sm:$0xf]
      %v4850 = vld [vmem:[%s5 + $0x94] sm:$0xf]
      %v4851 = vld [vmem:[%s5 + $0x98] sm:$0xf]
      %v4852 = vld [vmem:[%s5 + $0x9c] sm:$0xf]
      %v4853 = vld [vmem:[%s5 + $0xa0] sm:$0xf]
      %v4854 = vld [vmem:[%s5 + $0xa4] sm:$0xf]
      %v4855 = vld [vmem:[%s5 + $0xa8] sm:$0xf]
      %v4856 = vld [vmem:[%s5 + $0xac] sm:$0xf]
      %v4857 = vld [vmem:[%s5 + $0xb0] sm:$0xf]
      %v4858 = vld [vmem:[%s5 + $0xb4] sm:$0xf]
      %v4859 = vld [vmem:[%s5 + $0xb8] sm:$0xf]
      %v4860 = vld [vmem:[%s5 + $0xbc] sm:$0xf]
      %v4861 = vld [vmem:[%s5 + $0xc0] sm:$0xf]
      %v4862 = vld [vmem:[%s5 + $0xc4] sm:$0xf]
      %v4863 = vld [vmem:[%s5 + $0xc8] sm:$0xf]
      %v4864 = vld [vmem:[%s5 + $0xcc] sm:$0xf]
      %v4865 = vld [vmem:[%s5 + $0xd0] sm:$0xf]
      %v4866 = vld [vmem:[%s5 + $0xd4] sm:$0xf]
      %v4867 = vld [vmem:[%s5 + $0xd8] sm:$0xf]
      %v4868 = vld [vmem:[%s5 + $0xdc] sm:$0xf]
      %v4869 = vld [vmem:[%s5 + $0xe0] sm:$0xf]
      %v4870 = vld [vmem:[%s5 + $0xe4] sm:$0xf]
      %v4871 = vld [vmem:[%s5 + $0xe8] sm:$0xf]
      %v4872 = vld [vmem:[%s5 + $0xec] sm:$0xf]
      %v4873 = vld [vmem:[%s5 + $0xf0] sm:$0xf]
      %v4874 = vld [vmem:[%s5 + $0xf4] sm:$0xf]
      %v4875 = vld [vmem:[%s5 + $0xf8] sm:$0xf]
      %v4876 = vld [vmem:[%s5 + $0xfc] sm:$0xf]
      %v4877 = vld [vmem:[%s5 + $0x100] sm:$0xf]
      %v4878 = vld [vmem:[%s5 + $0x104] sm:$0xf]
      %v4879 = vld [vmem:[%s5 + $0x108] sm:$0xf]
      %v4880 = vld [vmem:[%s5 + $0x10c] sm:$0xf]
      %v4881 = vld [vmem:[%s5 + $0x110] sm:$0xf]
      %v4882 = vld [vmem:[%s5 + $0x114] sm:$0xf]
      %v4883 = vld [vmem:[%s5 + $0x118] sm:$0xf]
      %v4884 = vld [vmem:[%s5 + $0x11c] sm:$0xf]
      %v4885 = vld [vmem:[%s5 + $0x120] sm:$0xf]
      %v4886 = vld [vmem:[%s5 + $0x124] sm:$0xf]
      %v4887 = vld [vmem:[%s5 + $0x128] sm:$0xf]
      %v4888 = vld [vmem:[%s5 + $0x12c] sm:$0xf]
      %v4889 = vld [vmem:[%s5 + $0x130] sm:$0xf]
      %v4890 = vld [vmem:[%s5 + $0x134] sm:$0xf]
      %v4891 = vld [vmem:[%s5 + $0x138] sm:$0xf]
      %v4892 = vld [vmem:[%s5 + $0x13c] sm:$0xf]
      %v4893 = vld [vmem:[%s5 + $0x140] sm:$0xf]
      %v4894 = vld [vmem:[%s5 + $0x144] sm:$0xf]
      %v4895 = vld [vmem:[%s5 + $0x148] sm:$0xf]
      %v4896 = vld [vmem:[%s5 + $0x14c] sm:$0xf]
      %v4897 = vld [vmem:[%s5 + $0x150] sm:$0xf]
      %v4898 = vld [vmem:[%s5 + $0x154] sm:$0xf]
      %v4899 = vld [vmem:[%s5 + $0x158] sm:$0xf]
      %v4900 = vld [vmem:[%s5 + $0x15c] sm:$0xf]
      %v4901 = vld [vmem:[%s5 + $0x160] sm:$0xf]
      %v4902 = vld [vmem:[%s5 + $0x164] sm:$0xf]
      %v4903 = vld [vmem:[%s5 + $0x168] sm:$0xf]
      %v4904 = vld [vmem:[%s5 + $0x16c] sm:$0xf]
      %v4905 = vld [vmem:[%s5 + $0x170] sm:$0xf]
      %v4906 = vld [vmem:[%s5 + $0x174] sm:$0xf]
      %v4907 = vld [vmem:[%s5 + $0x178] sm:$0xf]
      %v4908 = vld [vmem:[%s5 + $0x17c] sm:$0xf]
      %v4909 = vld [vmem:[%s5 + $0x180] sm:$0xf]
      %v4910 = vld [vmem:[%s5 + $0x184] sm:$0xf]
      %v4911 = vld [vmem:[%s5 + $0x188] sm:$0xf]
      %v4912 = vld [vmem:[%s5 + $0x18c] sm:$0xf]
      %v4913 = vld [vmem:[%s5 + $0x190] sm:$0xf]
      %v4914 = vld [vmem:[%s5 + $0x194] sm:$0xf]
      %v4915 = vld [vmem:[%s5 + $0x198] sm:$0xf]
      %v4916 = vld [vmem:[%s5 + $0x19c] sm:$0xf]
      %v4917 = vld [vmem:[%s5 + $0x1a0] sm:$0xf]
      %v4918 = vld [vmem:[%s5 + $0x1a4] sm:$0xf]
      %v4919 = vld [vmem:[%s5 + $0x1a8] sm:$0xf]
      %v4920 = vld [vmem:[%s5 + $0x1ac] sm:$0xf]
      %v4921 = vld [vmem:[%s5 + $0x1b0] sm:$0xf]
      %v4922 = vld [vmem:[%s5 + $0x1b4] sm:$0xf]
      %v4923 = vld [vmem:[%s5 + $0x1b8] sm:$0xf]
      %v4924 = vld [vmem:[%s5 + $0x1bc] sm:$0xf]
      %v4925 = vld [vmem:[%s5 + $0x1c0] sm:$0xf]
      %v4926 = vld [vmem:[%s5 + $0x1c4] sm:$0xf]
      %v4927 = vld [vmem:[%s5 + $0x1c8] sm:$0xf]
      %v4928 = vld [vmem:[%s5 + $0x1cc] sm:$0xf]
      %v4929 = vld [vmem:[%s5 + $0x1d0] sm:$0xf]
      %v4930 = vld [vmem:[%s5 + $0x1d4] sm:$0xf]
      %v4931 = vld [vmem:[%s5 + $0x1d8] sm:$0xf]
      %v4932 = vld [vmem:[%s5 + $0x1dc] sm:$0xf]
      %v4933 = vld [vmem:[%s5 + $0x1e0] sm:$0xf]
      %v4934 = vld [vmem:[%s5 + $0x1e4] sm:$0xf]
      %v4935 = vld [vmem:[%s5 + $0x1e8] sm:$0xf]
      %v4936 = vld [vmem:[%s5 + $0x1ec] sm:$0xf]
      %v4937 = vld [vmem:[%s5 + $0x1f0] sm:$0xf]
      %v4938 = vld [vmem:[%s5 + $0x1f4] sm:$0xf]
      %v4939 = vld [vmem:[%s5 + $0x1f8] sm:$0xf]
      %v4940 = vld [vmem:[%s5 + $0x1fc] sm:$0xf]
      %v4941 = vld [vmem:[%s5 + $0x200] sm:$0xf]
      %v4942 = vld [vmem:[%s5 + $0x204] sm:$0xf]
      %v4943 = vld [vmem:[%s5 + $0x208] sm:$0xf]
      %v4944 = vld [vmem:[%s5 + $0x20c] sm:$0xf]
      %v4945 = vld [vmem:[%s5 + $0x210] sm:$0xf]
      %v4946 = vld [vmem:[%s5 + $0x214] sm:$0xf]
      %v4947 = vld [vmem:[%s5 + $0x218] sm:$0xf]
      %v4948 = vld [vmem:[%s5 + $0x21c] sm:$0xf]
      %v4949 = vld [vmem:[%s5 + $0x220] sm:$0xf]
      %v4950 = vld [vmem:[%s5 + $0x224] sm:$0xf]
      %v4951 = vld [vmem:[%s5 + $0x228] sm:$0xf]
      %v4952 = vld [vmem:[%s5 + $0x22c] sm:$0xf]
      %v4953 = vld [vmem:[%s5 + $0x230] sm:$0xf]
      %v4954 = vld [vmem:[%s5 + $0x234] sm:$0xf]
      %v4955 = vld [vmem:[%s5 + $0x238] sm:$0xf]
      %v4956 = vld [vmem:[%s5 + $0x23c] sm:$0xf]
      %v4957 = vld [vmem:[%s6] sm:$0x1]
      %v4959 = vperm.slane %v4957, 0
      %v5105 = vunpack.c.l.b16 %v4813
      %v5106 = vunpack.c.l.b16 %v4814
      %v5107 = vunpack.c.l.b16 %v4815
      %v5108 = vunpack.c.l.b16 %v4816
      %v5109 = vunpack.c.l.b16 %v4817
      %v5110 = vunpack.c.l.b16 %v4818
      %v5111 = vunpack.c.l.b16 %v4819
      %v5112 = vunpack.c.l.b16 %v4820
      %v5113 = vunpack.c.l.b16 %v4821
      %v5114 = vunpack.c.l.b16 %v4822
      %v5115 = vunpack.c.l.b16 %v4823
      %v5116 = vunpack.c.l.b16 %v4824
      %v5117 = vunpack.c.l.b16 %v4825
      %v5118 = vunpack.c.l.b16 %v4826
      %v5119 = vunpack.c.l.b16 %v4827
      %v5120 = vunpack.c.l.b16 %v4828
      %v5121 = vunpack.c.l.b16 %v4829
      %v5122 = vunpack.c.l.b16 %v4830
      %v5123 = vunpack.c.l.b16 %v4831
      %v5124 = vunpack.c.l.b16 %v4832
      %v5125 = vunpack.c.l.b16 %v4833
      %v5126 = vunpack.c.l.b16 %v4834
      %v5127 = vunpack.c.l.b16 %v4835
      %v5128 = vunpack.c.l.b16 %v4836
      %v5129 = vunpack.c.l.b16 %v4837
      %v5130 = vunpack.c.l.b16 %v4838
      %v5131 = vunpack.c.l.b16 %v4839
      %v5132 = vunpack.c.l.b16 %v4840
      %v5133 = vunpack.c.l.b16 %v4841
      %v5134 = vunpack.c.l.b16 %v4842
      %v5135 = vunpack.c.l.b16 %v4843
      %v5136 = vunpack.c.l.b16 %v4844
      %v5137 = vunpack.c.l.b16 %v4845
      %v5138 = vunpack.c.l.b16 %v4846
      %v5139 = vunpack.c.l.b16 %v4847
      %v5140 = vunpack.c.l.b16 %v4848
      %v5141 = vunpack.c.l.b16 %v4849
      %v5142 = vunpack.c.l.b16 %v4850
      %v5143 = vunpack.c.l.b16 %v4851
      %v5144 = vunpack.c.l.b16 %v4852
      %v5145 = vunpack.c.l.b16 %v4853
      %v5146 = vunpack.c.l.b16 %v4854
      %v5147 = vunpack.c.l.b16 %v4855
      %v5148 = vunpack.c.l.b16 %v4856
      %v5149 = vunpack.c.l.b16 %v4857
      %v5150 = vunpack.c.l.b16 %v4858
      %v5151 = vunpack.c.l.b16 %v4859
      %v5152 = vunpack.c.l.b16 %v4860
      %v5153 = vunpack.c.l.b16 %v4861
      %v5154 = vunpack.c.l.b16 %v4862
      %v5155 = vunpack.c.l.b16 %v4863
      %v5156 = vunpack.c.l.b16 %v4864
      %v5157 = vunpack.c.l.b16 %v4865
      %v5158 = vunpack.c.l.b16 %v4866
      %v5159 = vunpack.c.l.b16 %v4867
      %v5160 = vunpack.c.l.b16 %v4868
      %v5161 = vunpack.c.l.b16 %v4869
      %v5162 = vunpack.c.l.b16 %v4870
      %v5163 = vunpack.c.l.b16 %v4871
      %v5164 = vunpack.c.l.b16 %v4872
      %v5165 = vunpack.c.l.b16 %v4873
      %v5166 = vunpack.c.l.b16 %v4874
      %v5167 = vunpack.c.l.b16 %v4875
      %v5168 = vunpack.c.l.b16 %v4876
      %v5169 = vunpack.c.l.b16 %v4877
      %v5170 = vunpack.c.l.b16 %v4878
      %v5171 = vunpack.c.l.b16 %v4879
      %v5172 = vunpack.c.l.b16 %v4880
      %v5173 = vunpack.c.l.b16 %v4881
      %v5174 = vunpack.c.l.b16 %v4882
      %v5175 = vunpack.c.l.b16 %v4883
      %v5176 = vunpack.c.l.b16 %v4884
      %v5177 = vunpack.c.l.b16 %v4885
      %v5178 = vunpack.c.l.b16 %v4886
      %v5179 = vunpack.c.l.b16 %v4887
      %v5180 = vunpack.c.l.b16 %v4888
      %v5181 = vunpack.c.l.b16 %v4889
      %v5182 = vunpack.c.l.b16 %v4890
      %v5183 = vunpack.c.l.b16 %v4891
      %v5184 = vunpack.c.l.b16 %v4892
      %v5185 = vunpack.c.l.b16 %v4893
      %v5186 = vunpack.c.l.b16 %v4894
      %v5187 = vunpack.c.l.b16 %v4895
      %v5188 = vunpack.c.l.b16 %v4896
      %v5189 = vunpack.c.l.b16 %v4897
      %v5190 = vunpack.c.l.b16 %v4898
      %v5191 = vunpack.c.l.b16 %v4899
      %v5192 = vunpack.c.l.b16 %v4900
      %v5193 = vunpack.c.l.b16 %v4901
      %v5194 = vunpack.c.l.b16 %v4902
      %v5195 = vunpack.c.l.b16 %v4903
      %v5196 = vunpack.c.l.b16 %v4904
      %v5197 = vunpack.c.l.b16 %v4905
      %v5198 = vunpack.c.l.b16 %v4906
      %v5199 = vunpack.c.l.b16 %v4907
      %v5200 = vunpack.c.l.b16 %v4908
      %v5201 = vunpack.c.l.b16 %v4909
      %v5202 = vunpack.c.l.b16 %v4910
      %v5203 = vunpack.c.l.b16 %v4911
      %v5204 = vunpack.c.l.b16 %v4912
      %v5205 = vunpack.c.l.b16 %v4913
      %v5206 = vunpack.c.l.b16 %v4914
      %v5207 = vunpack.c.l.b16 %v4915
      %v5208 = vunpack.c.l.b16 %v4916
      %v5209 = vunpack.c.l.b16 %v4917
      %v5210 = vunpack.c.l.b16 %v4918
      %v5211 = vunpack.c.l.b16 %v4919
      %v5212 = vunpack.c.l.b16 %v4920
      %v5213 = vunpack.c.l.b16 %v4921
      %v5214 = vunpack.c.l.b16 %v4922
      %v5215 = vunpack.c.l.b16 %v4923
      %v5216 = vunpack.c.l.b16 %v4924
      %v5217 = vunpack.c.l.b16 %v4925
      %v5218 = vunpack.c.l.b16 %v4926
      %v5219 = vunpack.c.l.b16 %v4927
      %v5220 = vunpack.c.l.b16 %v4928
      %v5221 = vunpack.c.l.b16 %v4929
      %v5222 = vunpack.c.l.b16 %v4930
      %v5223 = vunpack.c.l.b16 %v4931
      %v5224 = vunpack.c.l.b16 %v4932
      %v5225 = vunpack.c.l.b16 %v4933
      %v5226 = vunpack.c.l.b16 %v4934
      %v5227 = vunpack.c.l.b16 %v4935
      %v5228 = vunpack.c.l.b16 %v4936
      %v5229 = vunpack.c.l.b16 %v4937
      %v5230 = vunpack.c.l.b16 %v4938
      %v5231 = vunpack.c.l.b16 %v4939
      %v5232 = vunpack.c.l.b16 %v4940
      %v5233 = vunpack.c.l.b16 %v4941
      %v5234 = vunpack.c.l.b16 %v4942
      %v5235 = vunpack.c.l.b16 %v4943
      %v5236 = vunpack.c.l.b16 %v4944
      %v5237 = vunpack.c.l.b16 %v4945
      %v5238 = vunpack.c.l.b16 %v4946
      %v5239 = vunpack.c.l.b16 %v4947
      %v5240 = vunpack.c.l.b16 %v4948
      %v5241 = vunpack.c.l.b16 %v4949
      %v5242 = vunpack.c.l.b16 %v4950
      %v5243 = vunpack.c.l.b16 %v4951
      %v5244 = vunpack.c.l.b16 %v4952
      %v5245 = vunpack.c.l.b16 %v4953
      %v5246 = vunpack.c.l.b16 %v4954
      %v5247 = vunpack.c.l.b16 %v4955
      %v5248 = vunpack.c.l.b16 %v4956
      %v5249 = vpack.c.b16 %v5106, %v5105
      %v5250 = vpack.c.b16 %v5108, %v5107
      %v5251 = vpack.c.b16 %v5110, %v5109
      %v5252 = vpack.c.b16 %v5112, %v5111
      %v5253 = vpack.c.b16 %v5114, %v5113
      %v5254 = vpack.c.b16 %v5116, %v5115
      %v5255 = vpack.c.b16 %v5118, %v5117
      %v5256 = vpack.c.b16 %v5120, %v5119
      %v5257 = vpack.c.b16 %v5122, %v5121
      %v5258 = vpack.c.b16 %v5124, %v5123
      %v5259 = vpack.c.b16 %v5126, %v5125
      %v5260 = vpack.c.b16 %v5128, %v5127
      %v5261 = vpack.c.b16 %v5130, %v5129
      %v5262 = vpack.c.b16 %v5132, %v5131
      %v5263 = vpack.c.b16 %v5134, %v5133
      %v5264 = vpack.c.b16 %v5136, %v5135
      %v5265 = vpack.c.b16 %v5138, %v5137
      %v5266 = vpack.c.b16 %v5140, %v5139
      %v5267 = vpack.c.b16 %v5142, %v5141
      %v5268 = vpack.c.b16 %v5144, %v5143
      %v5269 = vpack.c.b16 %v5146, %v5145
      %v5270 = vpack.c.b16 %v5148, %v5147
      %v5271 = vpack.c.b16 %v5150, %v5149
      %v5272 = vpack.c.b16 %v5152, %v5151
      %v5273 = vpack.c.b16 %v5154, %v5153
      %v5274 = vpack.c.b16 %v5156, %v5155
      %v5275 = vpack.c.b16 %v5158, %v5157
      %v5276 = vpack.c.b16 %v5160, %v5159
      %v5277 = vpack.c.b16 %v5162, %v5161
      %v5278 = vpack.c.b16 %v5164, %v5163
      %v5279 = vpack.c.b16 %v5166, %v5165
      %v5280 = vpack.c.b16 %v5168, %v5167
      %v5281 = vpack.c.b16 %v5170, %v5169
      %v5282 = vpack.c.b16 %v5172, %v5171
      %v5283 = vpack.c.b16 %v5174, %v5173
      %v5284 = vpack.c.b16 %v5176, %v5175
      %v5285 = vpack.c.b16 %v5178, %v5177
      %v5286 = vpack.c.b16 %v5180, %v5179
      %v5287 = vpack.c.b16 %v5182, %v5181
      %v5288 = vpack.c.b16 %v5184, %v5183
      %v5289 = vpack.c.b16 %v5186, %v5185
      %v5290 = vpack.c.b16 %v5188, %v5187
      %v5291 = vpack.c.b16 %v5190, %v5189
      %v5292 = vpack.c.b16 %v5192, %v5191
      %v5293 = vpack.c.b16 %v5194, %v5193
      %v5294 = vpack.c.b16 %v5196, %v5195
      %v5295 = vpack.c.b16 %v5198, %v5197
      %v5296 = vpack.c.b16 %v5200, %v5199
      %v5297 = vpack.c.b16 %v5202, %v5201
      %v5298 = vpack.c.b16 %v5204, %v5203
      %v5299 = vpack.c.b16 %v5206, %v5205
      %v5300 = vpack.c.b16 %v5208, %v5207
      %v5301 = vpack.c.b16 %v5210, %v5209
      %v5302 = vpack.c.b16 %v5212, %v5211
      %v5303 = vpack.c.b16 %v5214, %v5213
      %v5304 = vpack.c.b16 %v5216, %v5215
      %v5305 = vpack.c.b16 %v5218, %v5217
      %v5306 = vpack.c.b16 %v5220, %v5219
      %v5307 = vpack.c.b16 %v5222, %v5221
      %v5308 = vpack.c.b16 %v5224, %v5223
      %v5309 = vpack.c.b16 %v5226, %v5225
      %v5310 = vpack.c.b16 %v5228, %v5227
      %v5311 = vpack.c.b16 %v5230, %v5229
      %v5312 = vpack.c.b16 %v5232, %v5231
      %v5313 = vpack.c.b16 %v5234, %v5233
      %v5314 = vpack.c.b16 %v5236, %v5235
      %v5315 = vpack.c.b16 %v5238, %v5237
      %v5316 = vpack.c.b16 %v5240, %v5239
      %v5317 = vpack.c.b16 %v5242, %v5241
      %v5318 = vpack.c.b16 %v5244, %v5243
      %v5319 = vpack.c.b16 %v5246, %v5245
      %v5320 = vpack.c.b16 %v5248, %v5247
      %5393 = vmatpush.bf16.msra.mxu0 %v5256
      %5394 = vmatpush.bf16.msra.mxu0 %v5255
      %5395 = vmatpush.bf16.msra.mxu0 %v5254
      %5396 = vmatpush.bf16.msra.mxu0 %v5253
      %5397 = vmatpush.bf16.msra.mxu0 %v5252
      %5398 = vmatpush.bf16.msra.mxu0 %v5251
      %5399 = vmatpush.bf16.msra.mxu0 %v5250
      %5400 = vmatpush.bf16.msra.mxu0 %v5249
      %5401 = vmatmul.bf16.gmra.mxu0 %v4355
      %v5402 = vpop.f32.mrf.mxu0
      %v5403 = vadd.f32 %v4959, %v5402
      %v5404 = vpop.f32.mrf.mxu0
      %v5405 = vadd.f32 %v4959, %v5404
      %5406 = vmatmul.bf16.gmra.mxu0 %v4356
      %v5407 = vpop.f32.mrf.mxu0
      %v5408 = vadd.f32 %v4959, %v5407
      %v5409 = vpop.f32.mrf.mxu0
      %v5410 = vadd.f32 %v4959, %v5409
      %5411 = vmatmul.bf16.gmra.mxu0 %v4357
      %v5412 = vpop.f32.mrf.mxu0
      %v5413 = vadd.f32 %v4959, %v5412
      %v5414 = vpop.f32.mrf.mxu0
      %v5415 = vadd.f32 %v4959, %v5414
      %5416 = vmatmul.bf16.gmra.mxu0 %v4358
      %v5417 = vpop.f32.mrf.mxu0
      %v5418 = vadd.f32 %v4959, %v5417
      %v5419 = vpop.f32.mrf.mxu0
      %v5420 = vadd.f32 %v4959, %v5419
      %5421 = vmatmul.bf16.gmra.mxu0 %v4359
      %v5422 = vpop.f32.mrf.mxu0
      %v5423 = vadd.f32 %v4959, %v5422
      %v5424 = vpop.f32.mrf.mxu0
      %v5425 = vadd.f32 %v4959, %v5424
      %5426 = vmatmul.bf16.gmra.mxu0 %v4360
      %v5427 = vpop.f32.mrf.mxu0
      %v5428 = vadd.f32 %v4959, %v5427
      %v5429 = vpop.f32.mrf.mxu0
      %v5430 = vadd.f32 %v4959, %v5429
      %5431 = vmatmul.bf16.gmra.mxu0 %v4361
      %v5432 = vpop.f32.mrf.mxu0
      %v5433 = vadd.f32 %v4959, %v5432
      %v5434 = vpop.f32.mrf.mxu0
      %v5435 = vadd.f32 %v4959, %v5434
      %5436 = vmatmul.bf16.gmra.mxu0 %v4362
      %v5437 = vpop.f32.mrf.mxu0
      %v5438 = vadd.f32 %v4959, %v5437
      %v5439 = vpop.f32.mrf.mxu0
      %v5440 = vadd.f32 %v4959, %v5439
      %5441 = vmatmul.bf16.gmra.mxu0 %v4363
      %v5442 = vpop.f32.mrf.mxu0
      %v5443 = vadd.f32 %v4959, %v5442
      %v5444 = vpop.f32.mrf.mxu0
      %v5445 = vadd.f32 %v4959, %v5444
      %5446 = vmatmul.bf16.gmra.mxu0 %v4364
      %v5447 = vpop.f32.mrf.mxu0
      %v5448 = vadd.f32 %v4959, %v5447
      %v5449 = vpop.f32.mrf.mxu0
      %v5450 = vadd.f32 %v4959, %v5449
      %5451 = vmatmul.bf16.gmra.mxu0 %v4365
      %v5452 = vpop.f32.mrf.mxu0
      %v5453 = vadd.f32 %v4959, %v5452
      %v5454 = vpop.f32.mrf.mxu0
      %v5455 = vadd.f32 %v4959, %v5454
      %5456 = vmatmul.bf16.gmra.mxu0 %v4366
      %v5457 = vpop.f32.mrf.mxu0
      %v5458 = vadd.f32 %v4959, %v5457
      %v5459 = vpop.f32.mrf.mxu0
      %v5460 = vadd.f32 %v4959, %v5459
      %5461 = vmatmul.bf16.gmra.mxu0 %v4367
      %v5462 = vpop.f32.mrf.mxu0
      %v5463 = vadd.f32 %v4959, %v5462
      %v5464 = vpop.f32.mrf.mxu0
      %v5465 = vadd.f32 %v4959, %v5464
      %5466 = vmatmul.bf16.gmra.mxu0 %v4368
      %v5467 = vpop.f32.mrf.mxu0
      %v5468 = vadd.f32 %v4959, %v5467
      %v5469 = vpop.f32.mrf.mxu0
      %v5470 = vadd.f32 %v4959, %v5469
      %5471 = vmatmul.bf16.gmra.mxu0 %v4369
      %v5472 = vpop.f32.mrf.mxu0
      %v5473 = vadd.f32 %v4959, %v5472
      %v5474 = vpop.f32.mrf.mxu0
      %v5475 = vadd.f32 %v4959, %v5474
      %5476 = vmatmul.bf16.gmra.mxu0 %v4370
      %v5477 = vpop.f32.mrf.mxu0
      %v5478 = vadd.f32 %v4959, %v5477
      %v5479 = vpop.f32.mrf.mxu0
      %v5480 = vadd.f32 %v4959, %v5479
      %5481 = vdwg.mxu0
      %5482 = vmatpush.bf16.msra.mxu0 %v5264
      %5483 = vmatpush.bf16.msra.mxu0 %v5263
      %5484 = vmatpush.bf16.msra.mxu0 %v5262
      %5485 = vmatpush.bf16.msra.mxu0 %v5261
      %5486 = vmatpush.bf16.msra.mxu0 %v5260
      %5487 = vmatpush.bf16.msra.mxu0 %v5259
      %5488 = vmatpush.bf16.msra.mxu0 %v5258
      %5489 = vmatpush.bf16.msra.mxu0 %v5257
      %5490 = vmatmul.bf16.gmra.mxu0 %v4446
      %v5491 = vpop.f32.mrf.mxu0
      %v5492 = vadd.f32 %v5403, %v5491
      %v5493 = vpop.f32.mrf.mxu0
      %v5494 = vadd.f32 %v5405, %v5493
      %5495 = vmatmul.bf16.gmra.mxu0 %v4458
      %v5496 = vpop.f32.mrf.mxu0
      %v5497 = vadd.f32 %v5408, %v5496
      %v5498 = vpop.f32.mrf.mxu0
      %v5499 = vadd.f32 %v5410, %v5498
      %5500 = vmatmul.bf16.gmra.mxu0 %v4470
      %v5501 = vpop.f32.mrf.mxu0
      %v5502 = vadd.f32 %v5413, %v5501
      %v5503 = vpop.f32.mrf.mxu0
      %v5504 = vadd.f32 %v5415, %v5503
      %5505 = vmatmul.bf16.gmra.mxu0 %v4482
      %v5506 = vpop.f32.mrf.mxu0
      %v5507 = vadd.f32 %v5418, %v5506
      %v5508 = vpop.f32.mrf.mxu0
      %v5509 = vadd.f32 %v5420, %v5508
      %5510 = vmatmul.bf16.gmra.mxu0 %v4494
      %v5511 = vpop.f32.mrf.mxu0
      %v5512 = vadd.f32 %v5423, %v5511
      %v5513 = vpop.f32.mrf.mxu0
      %v5514 = vadd.f32 %v5425, %v5513
      %5515 = vmatmul.bf16.gmra.mxu0 %v4506
      %v5516 = vpop.f32.mrf.mxu0
      %v5517 = vadd.f32 %v5428, %v5516
      %v5518 = vpop.f32.mrf.mxu0
      %v5519 = vadd.f32 %v5430, %v5518
      %5520 = vmatmul.bf16.gmra.mxu0 %v4518
      %v5521 = vpop.f32.mrf.mxu0
      %v5522 = vadd.f32 %v5433, %v5521
      %v5523 = vpop.f32.mrf.mxu0
      %v5524 = vadd.f32 %v5435, %v5523
      %5525 = vmatmul.bf16.gmra.mxu0 %v4530
      %v5526 = vpop.f32.mrf.mxu0
      %v5527 = vadd.f32 %v5438, %v5526
      %v5528 = vpop.f32.mrf.mxu0
      %v5529 = vadd.f32 %v5440, %v5528
      %5530 = vmatmul.bf16.gmra.mxu0 %v4542
      %v5531 = vpop.f32.mrf.mxu0
      %v5532 = vadd.f32 %v5443, %v5531
      %v5533 = vpop.f32.mrf.mxu0
      %v5534 = vadd.f32 %v5445, %v5533
      %5535 = vmatmul.bf16.gmra.mxu0 %v4554
      %v5536 = vpop.f32.mrf.mxu0
      %v5537 = vadd.f32 %v5448, %v5536
      %v5538 = vpop.f32.mrf.mxu0
      %v5539 = vadd.f32 %v5450, %v5538
      %5540 = vmatmul.bf16.gmra.mxu0 %v4566
      %v5541 = vpop.f32.mrf.mxu0
      %v5542 = vadd.f32 %v5453, %v5541
      %v5543 = vpop.f32.mrf.mxu0
      %v5544 = vadd.f32 %v5455, %v5543
      %5545 = vmatmul.bf16.gmra.mxu0 %v4578
      %v5546 = vpop.f32.mrf.mxu0
      %v5547 = vadd.f32 %v5458, %v5546
      %v5548 = vpop.f32.mrf.mxu0
      %v5549 = vadd.f32 %v5460, %v5548
      %5550 = vmatmul.bf16.gmra.mxu0 %v4590
      %v5551 = vpop.f32.mrf.mxu0
      %v5552 = vadd.f32 %v5463, %v5551
      %v5553 = vpop.f32.mrf.mxu0
      %v5554 = vadd.f32 %v5465, %v5553
      %5555 = vmatmul.bf16.gmra.mxu0 %v4602
      %v5556 = vpop.f32.mrf.mxu0
      %v5557 = vadd.f32 %v5468, %v5556
      %v5558 = vpop.f32.mrf.mxu0
      %v5559 = vadd.f32 %v5470, %v5558
      %5560 = vmatmul.bf16.gmra.mxu0 %v4614
      %v5561 = vpop.f32.mrf.mxu0
      %v5562 = vadd.f32 %v5473, %v5561
      %v5563 = vpop.f32.mrf.mxu0
      %v5564 = vadd.f32 %v5475, %v5563
      %5565 = vmatmul.bf16.gmra.mxu0 %v4626
      %v5566 = vpop.f32.mrf.mxu0
      %v5567 = vadd.f32 %v5478, %v5566
      %v5568 = vpop.f32.mrf.mxu0
      %v5569 = vadd.f32 %v5480, %v5568
      %5570 = vdwg.mxu0
      %5571 = vmatpush.bf16.msra.mxu0 %v5272
      %5572 = vmatpush.bf16.msra.mxu0 %v5271
      %5573 = vmatpush.bf16.msra.mxu0 %v5270
      %5574 = vmatpush.bf16.msra.mxu0 %v5269
      %5575 = vmatpush.bf16.msra.mxu0 %v5268
      %5576 = vmatpush.bf16.msra.mxu0 %v5267
      %5577 = vmatpush.bf16.msra.mxu0 %v5266
      %5578 = vmatpush.bf16.msra.mxu0 %v5265
      %5579 = vmatmul.bf16.gmra.mxu0 %v4693
      %v5580 = vpop.f32.mrf.mxu0
      %v5581 = vadd.f32 %v5492, %v5580
      %v5582 = vpop.f32.mrf.mxu0
      %v5583 = vadd.f32 %v5494, %v5582
      %5584 = vmatmul.bf16.gmra.mxu0 %v4696
      %v5585 = vpop.f32.mrf.mxu0
      %v5586 = vadd.f32 %v5497, %v5585
      %v5587 = vpop.f32.mrf.mxu0
      %v5588 = vadd.f32 %v5499, %v5587
      %5589 = vmatmul.bf16.gmra.mxu0 %v4699
      %v5590 = vpop.f32.mrf.mxu0
      %v5591 = vadd.f32 %v5502, %v5590
      %v5592 = vpop.f32.mrf.mxu0
      %v5593 = vadd.f32 %v5504, %v5592
      %5594 = vmatmul.bf16.gmra.mxu0 %v4702
      %v5595 = vpop.f32.mrf.mxu0
      %v5596 = vadd.f32 %v5507, %v5595
      %v5597 = vpop.f32.mrf.mxu0
      %v5598 = vadd.f32 %v5509, %v5597
      %5599 = vmatmul.bf16.gmra.mxu0 %v4705
      %v5600 = vpop.f32.mrf.mxu0
      %v5601 = vadd.f32 %v5512, %v5600
      %v5602 = vpop.f32.mrf.mxu0
      %v5603 = vadd.f32 %v5514, %v5602
      %5604 = vmatmul.bf16.gmra.mxu0 %v4708
      %v5605 = vpop.f32.mrf.mxu0
      %v5606 = vadd.f32 %v5517, %v5605
      %v5607 = vpop.f32.mrf.mxu0
      %v5608 = vadd.f32 %v5519, %v5607
      %5609 = vmatmul.bf16.gmra.mxu0 %v4711
      %v5610 = vpop.f32.mrf.mxu0
      %v5611 = vadd.f32 %v5522, %v5610
      %v5612 = vpop.f32.mrf.mxu0
      %v5613 = vadd.f32 %v5524, %v5612
      %5614 = vmatmul.bf16.gmra.mxu0 %v4714
      %v5615 = vpop.f32.mrf.mxu0
      %v5616 = vadd.f32 %v5527, %v5615
      %v5617 = vpop.f32.mrf.mxu0
      %v5618 = vadd.f32 %v5529, %v5617
      %5619 = vmatmul.bf16.gmra.mxu0 %v4717
      %v5620 = vpop.f32.mrf.mxu0
      %v5621 = vadd.f32 %v5532, %v5620
      %v5622 = vpop.f32.mrf.mxu0
      %v5623 = vadd.f32 %v5534, %v5622
      %5624 = vmatmul.bf16.gmra.mxu0 %v4720
      %v5625 = vpop.f32.mrf.mxu0
      %v5626 = vadd.f32 %v5537, %v5625
      %v5627 = vpop.f32.mrf.mxu0
      %v5628 = vadd.f32 %v5539, %v5627
      %5629 = vmatmul.bf16.gmra.mxu0 %v4723
      %v5630 = vpop.f32.mrf.mxu0
      %v5631 = vadd.f32 %v5542, %v5630
      %v5632 = vpop.f32.mrf.mxu0
      %v5633 = vadd.f32 %v5544, %v5632
      %5634 = vmatmul.bf16.gmra.mxu0 %v4726
      %v5635 = vpop.f32.mrf.mxu0
      %v5636 = vadd.f32 %v5547, %v5635
      %v5637 = vpop.f32.mrf.mxu0
      %v5638 = vadd.f32 %v5549, %v5637
      %5639 = vmatmul.bf16.gmra.mxu0 %v4729
      %v5640 = vpop.f32.mrf.mxu0
      %v5641 = vadd.f32 %v5552, %v5640
      %v5642 = vpop.f32.mrf.mxu0
      %v5643 = vadd.f32 %v5554, %v5642
      %5644 = vmatmul.bf16.gmra.mxu0 %v4732
      %v5645 = vpop.f32.mrf.mxu0
      %v5646 = vadd.f32 %v5557, %v5645
      %v5647 = vpop.f32.mrf.mxu0
      %v5648 = vadd.f32 %v5559, %v5647
      %5649 = vmatmul.bf16.gmra.mxu0 %v4735
      %v5650 = vpop.f32.mrf.mxu0
      %v5651 = vadd.f32 %v5562, %v5650
      %v5652 = vpop.f32.mrf.mxu0
      %v5653 = vadd.f32 %v5564, %v5652
      %5654 = vmatmul.bf16.gmra.mxu0 %v4738
      %v5655 = vpop.f32.mrf.mxu0
      %v5656 = vadd.f32 %v5567, %v5655
      %v5657 = vpop.f32.mrf.mxu0
      %v5658 = vadd.f32 %v5569, %v5657
      %5659 = vdwg.mxu0
      %5660 = vmatpush.bf16.msra.mxu0 %v5280
      %5661 = vmatpush.bf16.msra.mxu0 %v5279
      %5662 = vmatpush.bf16.msra.mxu0 %v5278
      %5663 = vmatpush.bf16.msra.mxu0 %v5277
      %5664 = vmatpush.bf16.msra.mxu0 %v5276
      %5665 = vmatpush.bf16.msra.mxu0 %v5275
      %5666 = vmatpush.bf16.msra.mxu0 %v5274
      %5667 = vmatpush.bf16.msra.mxu0 %v5273
      %5668 = vmatmul.bf16.gmra.mxu0 %v4356
      %v5669 = vpop.f32.mrf.mxu0
      %v5670 = vadd.f32 %v5581, %v5669
      %v5671 = vpop.f32.mrf.mxu0
      %v5672 = vadd.f32 %v5583, %v5671
      %5673 = vmatmul.bf16.gmra.mxu0 %v4357
      %v5674 = vpop.f32.mrf.mxu0
      %v5675 = vadd.f32 %v5586, %v5674
      %v5676 = vpop.f32.mrf.mxu0
      %v5677 = vadd.f32 %v5588, %v5676
      %5678 = vmatmul.bf16.gmra.mxu0 %v4358
      %v5679 = vpop.f32.mrf.mxu0
      %v5680 = vadd.f32 %v5591, %v5679
      %v5681 = vpop.f32.mrf.mxu0
      %v5682 = vadd.f32 %v5593, %v5681
      %5683 = vmatmul.bf16.gmra.mxu0 %v4359
      %v5684 = vpop.f32.mrf.mxu0
      %v5685 = vadd.f32 %v5596, %v5684
      %v5686 = vpop.f32.mrf.mxu0
      %v5687 = vadd.f32 %v5598, %v5686
      %5688 = vmatmul.bf16.gmra.mxu0 %v4360
      %v5689 = vpop.f32.mrf.mxu0
      %v5690 = vadd.f32 %v5601, %v5689
      %v5691 = vpop.f32.mrf.mxu0
      %v5692 = vadd.f32 %v5603, %v5691
      %5693 = vmatmul.bf16.gmra.mxu0 %v4361
      %v5694 = vpop.f32.mrf.mxu0
      %v5695 = vadd.f32 %v5606, %v5694
      %v5696 = vpop.f32.mrf.mxu0
      %v5697 = vadd.f32 %v5608, %v5696
      %5698 = vmatmul.bf16.gmra.mxu0 %v4362
      %v5699 = vpop.f32.mrf.mxu0
      %v5700 = vadd.f32 %v5611, %v5699
      %v5701 = vpop.f32.mrf.mxu0
      %v5702 = vadd.f32 %v5613, %v5701
      %5703 = vmatmul.bf16.gmra.mxu0 %v4363
      %v5704 = vpop.f32.mrf.mxu0
      %v5705 = vadd.f32 %v5616, %v5704
      %v5706 = vpop.f32.mrf.mxu0
      %v5707 = vadd.f32 %v5618, %v5706
      %5708 = vmatmul.bf16.gmra.mxu0 %v4364
      %v5709 = vpop.f32.mrf.mxu0
      %v5710 = vadd.f32 %v5621, %v5709
      %v5711 = vpop.f32.mrf.mxu0
      %v5712 = vadd.f32 %v5623, %v5711
      %5713 = vmatmul.bf16.gmra.mxu0 %v4365
      %v5714 = vpop.f32.mrf.mxu0
      %v5715 = vadd.f32 %v5626, %v5714
      %v5716 = vpop.f32.mrf.mxu0
      %v5717 = vadd.f32 %v5628, %v5716
      %5718 = vmatmul.bf16.gmra.mxu0 %v4366
      %v5719 = vpop.f32.mrf.mxu0
      %v5720 = vadd.f32 %v5631, %v5719
      %v5721 = vpop.f32.mrf.mxu0
      %v5722 = vadd.f32 %v5633, %v5721
      %5723 = vmatmul.bf16.gmra.mxu0 %v4367
      %v5724 = vpop.f32.mrf.mxu0
      %v5725 = vadd.f32 %v5636, %v5724
      %v5726 = vpop.f32.mrf.mxu0
      %v5727 = vadd.f32 %v5638, %v5726
      %5728 = vmatmul.bf16.gmra.mxu0 %v4368
      %v5729 = vpop.f32.mrf.mxu0
      %v5730 = vadd.f32 %v5641, %v5729
      %v5731 = vpop.f32.mrf.mxu0
      %v5732 = vadd.f32 %v5643, %v5731
      %5733 = vmatmul.bf16.gmra.mxu0 %v4369
      %v5734 = vpop.f32.mrf.mxu0
      %v5735 = vadd.f32 %v5646, %v5734
      %v5736 = vpop.f32.mrf.mxu0
      %v5737 = vadd.f32 %v5648, %v5736
      %5738 = vmatmul.bf16.gmra.mxu0 %v4370
      %v5739 = vpop.f32.mrf.mxu0
      %v5740 = vadd.f32 %v5651, %v5739
      %v5741 = vpop.f32.mrf.mxu0
      %v5742 = vadd.f32 %v5653, %v5741
      %5743 = vmatmul.bf16.gmra.mxu0 %v4759
      %v5744 = vpop.f32.mrf.mxu0
      %v5745 = vadd.f32 %v5656, %v5744
      %v5746 = vpop.f32.mrf.mxu0
      %v5747 = vadd.f32 %v5658, %v5746
      %5748 = vdwg.mxu0
      %5749 = vmatpush.bf16.msra.mxu0 %v5288
      %5750 = vmatpush.bf16.msra.mxu0 %v5287
      %5751 = vmatpush.bf16.msra.mxu0 %v5286
      %5752 = vmatpush.bf16.msra.mxu0 %v5285
      %5753 = vmatpush.bf16.msra.mxu0 %v5284
      %5754 = vmatpush.bf16.msra.mxu0 %v5283
      %5755 = vmatpush.bf16.msra.mxu0 %v5282
      %5756 = vmatpush.bf16.msra.mxu0 %v5281
      %5757 = vmatmul.bf16.gmra.mxu0 %v4458
      %v5758 = vpop.f32.mrf.mxu0
      %v5759 = vadd.f32 %v5670, %v5758
      %v5760 = vpop.f32.mrf.mxu0
      %v5761 = vadd.f32 %v5672, %v5760
      %5762 = vmatmul.bf16.gmra.mxu0 %v4470
      %v5763 = vpop.f32.mrf.mxu0
      %v5764 = vadd.f32 %v5675, %v5763
      %v5765 = vpop.f32.mrf.mxu0
      %v5766 = vadd.f32 %v5677, %v5765
      %5767 = vmatmul.bf16.gmra.mxu0 %v4482
      %v5768 = vpop.f32.mrf.mxu0
      %v5769 = vadd.f32 %v5680, %v5768
      %v5770 = vpop.f32.mrf.mxu0
      %v5771 = vadd.f32 %v5682, %v5770
      %5772 = vmatmul.bf16.gmra.mxu0 %v4494
      %v5773 = vpop.f32.mrf.mxu0
      %v5774 = vadd.f32 %v5685, %v5773
      %v5775 = vpop.f32.mrf.mxu0
      %v5776 = vadd.f32 %v5687, %v5775
      %5777 = vmatmul.bf16.gmra.mxu0 %v4506
      %v5778 = vpop.f32.mrf.mxu0
      %v5779 = vadd.f32 %v5690, %v5778
      %v5780 = vpop.f32.mrf.mxu0
      %v5781 = vadd.f32 %v5692, %v5780
      %5782 = vmatmul.bf16.gmra.mxu0 %v4518
      %v5783 = vpop.f32.mrf.mxu0
      %v5784 = vadd.f32 %v5695, %v5783
      %v5785 = vpop.f32.mrf.mxu0
      %v5786 = vadd.f32 %v5697, %v5785
      %5787 = vmatmul.bf16.gmra.mxu0 %v4530
      %v5788 = vpop.f32.mrf.mxu0
      %v5789 = vadd.f32 %v5700, %v5788
      %v5790 = vpop.f32.mrf.mxu0
      %v5791 = vadd.f32 %v5702, %v5790
      %5792 = vmatmul.bf16.gmra.mxu0 %v4542
      %v5793 = vpop.f32.mrf.mxu0
      %v5794 = vadd.f32 %v5705, %v5793
      %v5795 = vpop.f32.mrf.mxu0
      %v5796 = vadd.f32 %v5707, %v5795
      %5797 = vmatmul.bf16.gmra.mxu0 %v4554
      %v5798 = vpop.f32.mrf.mxu0
      %v5799 = vadd.f32 %v5710, %v5798
      %v5800 = vpop.f32.mrf.mxu0
      %v5801 = vadd.f32 %v5712, %v5800
      %5802 = vmatmul.bf16.gmra.mxu0 %v4566
      %v5803 = vpop.f32.mrf.mxu0
      %v5804 = vadd.f32 %v5715, %v5803
      %v5805 = vpop.f32.mrf.mxu0
      %v5806 = vadd.f32 %v5717, %v5805
      %5807 = vmatmul.bf16.gmra.mxu0 %v4578
      %v5808 = vpop.f32.mrf.mxu0
      %v5809 = vadd.f32 %v5720, %v5808
      %v5810 = vpop.f32.mrf.mxu0
      %v5811 = vadd.f32 %v5722, %v5810
      %5812 = vmatmul.bf16.gmra.mxu0 %v4590
      %v5813 = vpop.f32.mrf.mxu0
      %v5814 = vadd.f32 %v5725, %v5813
      %v5815 = vpop.f32.mrf.mxu0
      %v5816 = vadd.f32 %v5727, %v5815
      %5817 = vmatmul.bf16.gmra.mxu0 %v4602
      %v5818 = vpop.f32.mrf.mxu0
      %v5819 = vadd.f32 %v5730, %v5818
      %v5820 = vpop.f32.mrf.mxu0
      %v5821 = vadd.f32 %v5732, %v5820
      %5822 = vmatmul.bf16.gmra.mxu0 %v4614
      %v5823 = vpop.f32.mrf.mxu0
      %v5824 = vadd.f32 %v5735, %v5823
      %v5825 = vpop.f32.mrf.mxu0
      %v5826 = vadd.f32 %v5737, %v5825
      %5827 = vmatmul.bf16.gmra.mxu0 %v4626
      %v5828 = vpop.f32.mrf.mxu0
      %v5829 = vadd.f32 %v5740, %v5828
      %v5830 = vpop.f32.mrf.mxu0
      %v5831 = vadd.f32 %v5742, %v5830
      %5832 = vmatmul.bf16.gmra.mxu0 %v4775
      %v5833 = vpop.f32.mrf.mxu0
      %v5834 = vadd.f32 %v5745, %v5833
      %v5835 = vpop.f32.mrf.mxu0
      %v5836 = vadd.f32 %v5747, %v5835
      %5837 = vdwg.mxu0
      %5838 = vmatpush.bf16.msra.mxu0 %v5296
      %5839 = vmatpush.bf16.msra.mxu0 %v5295
      %5840 = vmatpush.bf16.msra.mxu0 %v5294
      %5841 = vmatpush.bf16.msra.mxu0 %v5293
      %5842 = vmatpush.bf16.msra.mxu0 %v5292
      %5843 = vmatpush.bf16.msra.mxu0 %v5291
      %5844 = vmatpush.bf16.msra.mxu0 %v5290
      %5845 = vmatpush.bf16.msra.mxu0 %v5289
      %5846 = vmatmul.bf16.gmra.mxu0 %v4696
      %v5847 = vpop.f32.mrf.mxu0
      %v5848 = vadd.f32 %v5759, %v5847
      %v5849 = vpop.f32.mrf.mxu0
      %v5850 = vadd.f32 %v5761, %v5849
      %5851 = vmatmul.bf16.gmra.mxu0 %v4699
      %v5852 = vpop.f32.mrf.mxu0
      %v5853 = vadd.f32 %v5764, %v5852
      %v5854 = vpop.f32.mrf.mxu0
      %v5855 = vadd.f32 %v5766, %v5854
      %5856 = vmatmul.bf16.gmra.mxu0 %v4702
      %v5857 = vpop.f32.mrf.mxu0
      %v5858 = vadd.f32 %v5769, %v5857
      %v5859 = vpop.f32.mrf.mxu0
      %v5860 = vadd.f32 %v5771, %v5859
      %5861 = vmatmul.bf16.gmra.mxu0 %v4705
      %v5862 = vpop.f32.mrf.mxu0
      %v5863 = vadd.f32 %v5774, %v5862
      %v5864 = vpop.f32.mrf.mxu0
      %v5865 = vadd.f32 %v5776, %v5864
      %5866 = vmatmul.bf16.gmra.mxu0 %v4708
      %v5867 = vpop.f32.mrf.mxu0
      %v5868 = vadd.f32 %v5779, %v5867
      %v5869 = vpop.f32.mrf.mxu0
      %v5870 = vadd.f32 %v5781, %v5869
      %5871 = vmatmul.bf16.gmra.mxu0 %v4711
      %v5872 = vpop.f32.mrf.mxu0
      %v5873 = vadd.f32 %v5784, %v5872
      %v5874 = vpop.f32.mrf.mxu0
      %v5875 = vadd.f32 %v5786, %v5874
      %5876 = vmatmul.bf16.gmra.mxu0 %v4714
      %v5877 = vpop.f32.mrf.mxu0
      %v5878 = vadd.f32 %v5789, %v5877
      %v5879 = vpop.f32.mrf.mxu0
      %v5880 = vadd.f32 %v5791, %v5879
      %5881 = vmatmul.bf16.gmra.mxu0 %v4717
      %v5882 = vpop.f32.mrf.mxu0
      %v5883 = vadd.f32 %v5794, %v5882
      %v5884 = vpop.f32.mrf.mxu0
      %v5885 = vadd.f32 %v5796, %v5884
      %5886 = vmatmul.bf16.gmra.mxu0 %v4720
      %v5887 = vpop.f32.mrf.mxu0
      %v5888 = vadd.f32 %v5799, %v5887
      %v5889 = vpop.f32.mrf.mxu0
      %v5890 = vadd.f32 %v5801, %v5889
      %5891 = vmatmul.bf16.gmra.mxu0 %v4723
      %v5892 = vpop.f32.mrf.mxu0
      %v5893 = vadd.f32 %v5804, %v5892
      %v5894 = vpop.f32.mrf.mxu0
      %v5895 = vadd.f32 %v5806, %v5894
      %5896 = vmatmul.bf16.gmra.mxu0 %v4726
      %v5897 = vpop.f32.mrf.mxu0
      %v5898 = vadd.f32 %v5809, %v5897
      %v5899 = vpop.f32.mrf.mxu0
      %v5900 = vadd.f32 %v5811, %v5899
      %5901 = vmatmul.bf16.gmra.mxu0 %v4729
      %v5902 = vpop.f32.mrf.mxu0
      %v5903 = vadd.f32 %v5814, %v5902
      %v5904 = vpop.f32.mrf.mxu0
      %v5905 = vadd.f32 %v5816, %v5904
      %5906 = vmatmul.bf16.gmra.mxu0 %v4732
      %v5907 = vpop.f32.mrf.mxu0
      %v5908 = vadd.f32 %v5819, %v5907
      %v5909 = vpop.f32.mrf.mxu0
      %v5910 = vadd.f32 %v5821, %v5909
      %5911 = vmatmul.bf16.gmra.mxu0 %v4735
      %v5912 = vpop.f32.mrf.mxu0
      %v5913 = vadd.f32 %v5824, %v5912
      %v5914 = vpop.f32.mrf.mxu0
      %v5915 = vadd.f32 %v5826, %v5914
      %5916 = vmatmul.bf16.gmra.mxu0 %v4738
      %v5917 = vpop.f32.mrf.mxu0
      %v5918 = vadd.f32 %v5829, %v5917
      %v5919 = vpop.f32.mrf.mxu0
      %v5920 = vadd.f32 %v5831, %v5919
      %5921 = vmatmul.bf16.gmra.mxu0 %v4782
      %v5922 = vpop.f32.mrf.mxu0
      %v5923 = vadd.f32 %v5834, %v5922
      %v5924 = vpop.f32.mrf.mxu0
      %v5925 = vadd.f32 %v5836, %v5924
      %5926 = vdwg.mxu0
      %5927 = vmatpush.bf16.msra.mxu0 %v5304
      %5928 = vmatpush.bf16.msra.mxu0 %v5303
      %5929 = vmatpush.bf16.msra.mxu0 %v5302
      %5930 = vmatpush.bf16.msra.mxu0 %v5301
      %5931 = vmatpush.bf16.msra.mxu0 %v5300
      %5932 = vmatpush.bf16.msra.mxu0 %v5299
      %5933 = vmatpush.bf16.msra.mxu0 %v5298
      %5934 = vmatpush.bf16.msra.mxu0 %v5297
      %5935 = vmatmul.bf16.gmra.mxu0 %v4357
      %v5936 = vpop.f32.mrf.mxu0
      %v5937 = vadd.f32 %v5848, %v5936
      %v5938 = vpop.f32.mrf.mxu0
      %v5939 = vadd.f32 %v5850, %v5938
      %5940 = vmatmul.bf16.gmra.mxu0 %v4358
      %v5941 = vpop.f32.mrf.mxu0
      %v5942 = vadd.f32 %v5853, %v5941
      %v5943 = vpop.f32.mrf.mxu0
      %v5944 = vadd.f32 %v5855, %v5943
      %5945 = vmatmul.bf16.gmra.mxu0 %v4359
      %v5946 = vpop.f32.mrf.mxu0
      %v5947 = vadd.f32 %v5858, %v5946
      %v5948 = vpop.f32.mrf.mxu0
      %v5949 = vadd.f32 %v5860, %v5948
      %5950 = vmatmul.bf16.gmra.mxu0 %v4360
      %v5951 = vpop.f32.mrf.mxu0
      %v5952 = vadd.f32 %v5863, %v5951
      %v5953 = vpop.f32.mrf.mxu0
      %v5954 = vadd.f32 %v5865, %v5953
      %5955 = vmatmul.bf16.gmra.mxu0 %v4361
      %v5956 = vpop.f32.mrf.mxu0
      %v5957 = vadd.f32 %v5868, %v5956
      %v5958 = vpop.f32.mrf.mxu0
      %v5959 = vadd.f32 %v5870, %v5958
      %5960 = vmatmul.bf16.gmra.mxu0 %v4362
      %v5961 = vpop.f32.mrf.mxu0
      %v5962 = vadd.f32 %v5873, %v5961
      %v5963 = vpop.f32.mrf.mxu0
      %v5964 = vadd.f32 %v5875, %v5963
      %5965 = vmatmul.bf16.gmra.mxu0 %v4363
      %v5966 = vpop.f32.mrf.mxu0
      %v5967 = vadd.f32 %v5878, %v5966
      %v5968 = vpop.f32.mrf.mxu0
      %v5969 = vadd.f32 %v5880, %v5968
      %5970 = vmatmul.bf16.gmra.mxu0 %v4364
      %v5971 = vpop.f32.mrf.mxu0
      %v5972 = vadd.f32 %v5883, %v5971
      %v5973 = vpop.f32.mrf.mxu0
      %v5974 = vadd.f32 %v5885, %v5973
      %5975 = vmatmul.bf16.gmra.mxu0 %v4365
      %v5976 = vpop.f32.mrf.mxu0
      %v5977 = vadd.f32 %v5888, %v5976
      %v5978 = vpop.f32.mrf.mxu0
      %v5979 = vadd.f32 %v5890, %v5978
      %5980 = vmatmul.bf16.gmra.mxu0 %v4366
      %v5981 = vpop.f32.mrf.mxu0
      %v5982 = vadd.f32 %v5893, %v5981
      %v5983 = vpop.f32.mrf.mxu0
      %v5984 = vadd.f32 %v5895, %v5983
      %5985 = vmatmul.bf16.gmra.mxu0 %v4367
      %v5986 = vpop.f32.mrf.mxu0
      %v5987 = vadd.f32 %v5898, %v5986
      %v5988 = vpop.f32.mrf.mxu0
      %v5989 = vadd.f32 %v5900, %v5988
      %5990 = vmatmul.bf16.gmra.mxu0 %v4368
      %v5991 = vpop.f32.mrf.mxu0
      %v5992 = vadd.f32 %v5903, %v5991
      %v5993 = vpop.f32.mrf.mxu0
      %v5994 = vadd.f32 %v5905, %v5993
      %5995 = vmatmul.bf16.gmra.mxu0 %v4369
      %v5996 = vpop.f32.mrf.mxu0
      %v5997 = vadd.f32 %v5908, %v5996
      %v5998 = vpop.f32.mrf.mxu0
      %v5999 = vadd.f32 %v5910, %v5998
      %6000 = vmatmul.bf16.gmra.mxu0 %v4370
      %v6001 = vpop.f32.mrf.mxu0
      %v6002 = vadd.f32 %v5913, %v6001
      %v6003 = vpop.f32.mrf.mxu0
      %v6004 = vadd.f32 %v5915, %v6003
      %6005 = vmatmul.bf16.gmra.mxu0 %v4759
      %v6006 = vpop.f32.mrf.mxu0
      %v6007 = vadd.f32 %v5918, %v6006
      %v6008 = vpop.f32.mrf.mxu0
      %v6009 = vadd.f32 %v5920, %v6008
      %6010 = vmatmul.bf16.gmra.mxu0 %v4788
      %v6011 = vpop.f32.mrf.mxu0
      %v6012 = vadd.f32 %v5923, %v6011
      %v6013 = vpop.f32.mrf.mxu0
      %v6014 = vadd.f32 %v5925, %v6013
      %6015 = vdwg.mxu0
      %6016 = vmatpush.bf16.msra.mxu0 %v5312
      %6017 = vmatpush.bf16.msra.mxu0 %v5311
      %6018 = vmatpush.bf16.msra.mxu0 %v5310
      %6019 = vmatpush.bf16.msra.mxu0 %v5309
      %6020 = vmatpush.bf16.msra.mxu0 %v5308
      %6021 = vmatpush.bf16.msra.mxu0 %v5307
      %6022 = vmatpush.bf16.msra.mxu0 %v5306
      %6023 = vmatpush.bf16.msra.mxu0 %v5305
      %6024 = vmatmul.bf16.gmra.mxu0 %v4470
      %v6025 = vpop.f32.mrf.mxu0
      %v6026 = vadd.f32 %v5937, %v6025
      %v6027 = vpop.f32.mrf.mxu0
      %v6028 = vadd.f32 %v5939, %v6027
      %6029 = vmatmul.bf16.gmra.mxu0 %v4482
      %v6030 = vpop.f32.mrf.mxu0
      %v6031 = vadd.f32 %v5942, %v6030
      %v6032 = vpop.f32.mrf.mxu0
      %v6033 = vadd.f32 %v5944, %v6032
      %6034 = vmatmul.bf16.gmra.mxu0 %v4494
      %v6035 = vpop.f32.mrf.mxu0
      %v6036 = vadd.f32 %v5947, %v6035
      %v6037 = vpop.f32.mrf.mxu0
      %v6038 = vadd.f32 %v5949, %v6037
      %6039 = vmatmul.bf16.gmra.mxu0 %v4506
      %v6040 = vpop.f32.mrf.mxu0
      %v6041 = vadd.f32 %v5952, %v6040
      %v6042 = vpop.f32.mrf.mxu0
      %v6043 = vadd.f32 %v5954, %v6042
      %6044 = vmatmul.bf16.gmra.mxu0 %v4518
      %v6045 = vpop.f32.mrf.mxu0
      %v6046 = vadd.f32 %v5957, %v6045
      %v6047 = vpop.f32.mrf.mxu0
      %v6048 = vadd.f32 %v5959, %v6047
      %6049 = vmatmul.bf16.gmra.mxu0 %v4530
      %v6050 = vpop.f32.mrf.mxu0
      %v6051 = vadd.f32 %v5962, %v6050
      %v6052 = vpop.f32.mrf.mxu0
      %v6053 = vadd.f32 %v5964, %v6052
      %6054 = vmatmul.bf16.gmra.mxu0 %v4542
      %v6055 = vpop.f32.mrf.mxu0
      %v6056 = vadd.f32 %v5967, %v6055
      %v6057 = vpop.f32.mrf.mxu0
      %v6058 = vadd.f32 %v5969, %v6057
      %6059 = vmatmul.bf16.gmra.mxu0 %v4554
      %v6060 = vpop.f32.mrf.mxu0
      %v6061 = vadd.f32 %v5972, %v6060
      %v6062 = vpop.f32.mrf.mxu0
      %v6063 = vadd.f32 %v5974, %v6062
      %6064 = vmatmul.bf16.gmra.mxu0 %v4566
      %v6065 = vpop.f32.mrf.mxu0
      %v6066 = vadd.f32 %v5977, %v6065
      %v6067 = vpop.f32.mrf.mxu0
      %v6068 = vadd.f32 %v5979, %v6067
      %6069 = vmatmul.bf16.gmra.mxu0 %v4578
      %v6070 = vpop.f32.mrf.mxu0
      %v6071 = vadd.f32 %v5982, %v6070
      %v6072 = vpop.f32.mrf.mxu0
      %v6073 = vadd.f32 %v5984, %v6072
      %6074 = vmatmul.bf16.gmra.mxu0 %v4590
      %v6075 = vpop.f32.mrf.mxu0
      %v6076 = vadd.f32 %v5987, %v6075
      %v6077 = vpop.f32.mrf.mxu0
      %v6078 = vadd.f32 %v5989, %v6077
      %6079 = vmatmul.bf16.gmra.mxu0 %v4602
      %v6080 = vpop.f32.mrf.mxu0
      %v6081 = vadd.f32 %v5992, %v6080
      %v6082 = vpop.f32.mrf.mxu0
      %v6083 = vadd.f32 %v5994, %v6082
      %6084 = vmatmul.bf16.gmra.mxu0 %v4614
      %v6085 = vpop.f32.mrf.mxu0
      %v6086 = vadd.f32 %v5997, %v6085
      %v6087 = vpop.f32.mrf.mxu0
      %v6088 = vadd.f32 %v5999, %v6087
      %6089 = vmatmul.bf16.gmra.mxu0 %v4626
      %v6090 = vpop.f32.mrf.mxu0
      %v6091 = vadd.f32 %v6002, %v6090
      %v6092 = vpop.f32.mrf.mxu0
      %v6093 = vadd.f32 %v6004, %v6092
      %6094 = vmatmul.bf16.gmra.mxu0 %v4775
      %v6095 = vpop.f32.mrf.mxu0
      %v6096 = vadd.f32 %v6007, %v6095
      %v6097 = vpop.f32.mrf.mxu0
      %v6098 = vadd.f32 %v6009, %v6097
      %6099 = vmatmul.bf16.gmra.mxu0 %v4804
      %v6100 = vpop.f32.mrf.mxu0
      %v6101 = vadd.f32 %v6012, %v6100
      %v6102 = vpop.f32.mrf.mxu0
      %v6103 = vadd.f32 %v6014, %v6102
      %6104 = vdwg.mxu0
      %6105 = vmatpush.bf16.msra.mxu0 %v5320
      %6106 = vmatpush.bf16.msra.mxu0 %v5319
      %6107 = vmatpush.bf16.msra.mxu0 %v5318
      %6108 = vmatpush.bf16.msra.mxu0 %v5317
      %6109 = vmatpush.bf16.msra.mxu0 %v5316
      %6110 = vmatpush.bf16.msra.mxu0 %v5315
      %6111 = vmatpush.bf16.msra.mxu0 %v5314
      %6112 = vmatpush.bf16.msra.mxu0 %v5313
      %6113 = vmatmul.bf16.gmra.mxu0 %v4699
      %v6114 = vpop.f32.mrf.mxu0
      %v6115 = vadd.f32 %v6026, %v6114
      %v6116 = vpop.f32.mrf.mxu0
      %v6117 = vadd.f32 %v6028, %v6116
      %6118 = vmatmul.bf16.gmra.mxu0 %v4702
      %v6119 = vpop.f32.mrf.mxu0
      %v6120 = vadd.f32 %v6031, %v6119
      %v6121 = vpop.f32.mrf.mxu0
      %v6122 = vadd.f32 %v6033, %v6121
      %6123 = vmatmul.bf16.gmra.mxu0 %v4705
      %v6124 = vpop.f32.mrf.mxu0
      %v6125 = vadd.f32 %v6036, %v6124
      %v6126 = vpop.f32.mrf.mxu0
      %v6127 = vadd.f32 %v6038, %v6126
      %6128 = vmatmul.bf16.gmra.mxu0 %v4708
      %v6129 = vpop.f32.mrf.mxu0
      %v6130 = vadd.f32 %v6041, %v6129
      %v6131 = vpop.f32.mrf.mxu0
      %v6132 = vadd.f32 %v6043, %v6131
      %6133 = vmatmul.bf16.gmra.mxu0 %v4711
      %v6134 = vpop.f32.mrf.mxu0
      %v6135 = vadd.f32 %v6046, %v6134
      %v6136 = vpop.f32.mrf.mxu0
      %v6137 = vadd.f32 %v6048, %v6136
      %6138 = vmatmul.bf16.gmra.mxu0 %v4714
      %v6139 = vpop.f32.mrf.mxu0
      %v6140 = vadd.f32 %v6051, %v6139
      %v6141 = vpop.f32.mrf.mxu0
      %v6142 = vadd.f32 %v6053, %v6141
      %6143 = vmatmul.bf16.gmra.mxu0 %v4717
      %v6144 = vpop.f32.mrf.mxu0
      %v6145 = vadd.f32 %v6056, %v6144
      %v6146 = vpop.f32.mrf.mxu0
      %v6147 = vadd.f32 %v6058, %v6146
      %6148 = vmatmul.bf16.gmra.mxu0 %v4720
      %v6149 = vpop.f32.mrf.mxu0
      %v6150 = vadd.f32 %v6061, %v6149
      %v6151 = vpop.f32.mrf.mxu0
      %v6152 = vadd.f32 %v6063, %v6151
      %6153 = vmatmul.bf16.gmra.mxu0 %v4723
      %v6154 = vpop.f32.mrf.mxu0
      %v6155 = vadd.f32 %v6066, %v6154
      %v6156 = vpop.f32.mrf.mxu0
      %v6157 = vadd.f32 %v6068, %v6156
      %6158 = vmatmul.bf16.gmra.mxu0 %v4726
      %v6159 = vpop.f32.mrf.mxu0
      %v6160 = vadd.f32 %v6071, %v6159
      %v6161 = vpop.f32.mrf.mxu0
      %v6162 = vadd.f32 %v6073, %v6161
      %6163 = vmatmul.bf16.gmra.mxu0 %v4729
      %v6164 = vpop.f32.mrf.mxu0
      %v6165 = vadd.f32 %v6076, %v6164
      %v6166 = vpop.f32.mrf.mxu0
      %v6167 = vadd.f32 %v6078, %v6166
      %6168 = vmatmul.bf16.gmra.mxu0 %v4732
      %v6169 = vpop.f32.mrf.mxu0
      %v6170 = vadd.f32 %v6081, %v6169
      %v6171 = vpop.f32.mrf.mxu0
      %v6172 = vadd.f32 %v6083, %v6171
      %6173 = vmatmul.bf16.gmra.mxu0 %v4735
      %v6174 = vpop.f32.mrf.mxu0
      %v6175 = vadd.f32 %v6086, %v6174
      %v6176 = vpop.f32.mrf.mxu0
      %v6177 = vadd.f32 %v6088, %v6176
      %6178 = vmatmul.bf16.gmra.mxu0 %v4738
      %v6179 = vpop.f32.mrf.mxu0
      %v6180 = vadd.f32 %v6091, %v6179
      %v6181 = vpop.f32.mrf.mxu0
      %v6182 = vadd.f32 %v6093, %v6181
      %6183 = vmatmul.bf16.gmra.mxu0 %v4782
      %v6184 = vpop.f32.mrf.mxu0
      %v6185 = vadd.f32 %v6096, %v6184
      %v6186 = vpop.f32.mrf.mxu0
      %v6187 = vadd.f32 %v6098, %v6186
      %6188 = vmatmul.bf16.gmra.mxu0 %v4811
      %v6189 = vpop.f32.mrf.mxu0
      %v6190 = vadd.f32 %v6101, %v6189
      %v6191 = vpop.f32.mrf.mxu0
      %v6192 = vadd.f32 %v6103, %v6191
      %6193 = vdwg.mxu0
      %v6194 = vmax.f32 %v6115, 0.0
      %v6195 = vmax.f32 %v6117, 0.0
      %v6196 = vmax.f32 %v6120, 0.0
      %v6197 = vmax.f32 %v6122, 0.0
      %v6198 = vmax.f32 %v6125, 0.0
      %v6199 = vmax.f32 %v6127, 0.0
      %v6200 = vmax.f32 %v6130, 0.0
      %v6201 = vmax.f32 %v6132, 0.0
      %v6202 = vmax.f32 %v6135, 0.0
      %v6203 = vmax.f32 %v6137, 0.0
      %v6204 = vmax.f32 %v6140, 0.0
      %v6205 = vmax.f32 %v6142, 0.0
      %v6206 = vmax.f32 %v6145, 0.0
      %v6207 = vmax.f32 %v6147, 0.0
      %v6208 = vmax.f32 %v6150, 0.0
      %v6209 = vmax.f32 %v6152, 0.0
      %v6210 = vmax.f32 %v6155, 0.0
      %v6211 = vmax.f32 %v6157, 0.0
      %v6212 = vmax.f32 %v6160, 0.0
      %v6213 = vmax.f32 %v6162, 0.0
      %v6214 = vmax.f32 %v6165, 0.0
      %v6215 = vmax.f32 %v6167, 0.0
      %v6216 = vmax.f32 %v6170, 0.0
      %v6217 = vmax.f32 %v6172, 0.0
      %v6218 = vmax.f32 %v6175, 0.0
      %v6219 = vmax.f32 %v6177, 0.0
      %v6220 = vmax.f32 %v6180, 0.0
      %v6221 = vmax.f32 %v6182, 0.0
      %v6222 = vmax.f32 %v6185, 0.0
      %v6223 = vmax.f32 %v6187, 0.0
      %v6224 = vmax.f32 %v6190, 0.0
      %v6225 = vmax.f32 %v6192, 0.0
      %6226 = vst [vmem:[%s298] sm:$0xff] %v6194
      %6227 = vst [vmem:[%s298 + $0x8] sm:$0xff] %v6195
      %6228 = vst [vmem:[%s298 + $0x10] sm:$0xff] %v6196
      %6229 = vst [vmem:[%s298 + $0x18] sm:$0xff] %v6197
      %6230 = vst [vmem:[%s298 + $0x20] sm:$0xff] %v6198
      %6231 = vst [vmem:[%s298 + $0x28] sm:$0xff] %v6199
      %6232 = vst [vmem:[%s298 + $0x30] sm:$0xff] %v6200
      %6233 = vst [vmem:[%s298 + $0x38] sm:$0xff] %v6201
      %6234 = vst [vmem:[%s298 + $0x40] sm:$0xff] %v6202
      %6235 = vst [vmem:[%s298 + $0x48] sm:$0xff] %v6203
      %6236 = vst [vmem:[%s298 + $0x50] sm:$0xff] %v6204
      %6237 = vst [vmem:[%s298 + $0x58] sm:$0xff] %v6205
      %6238 = vst [vmem:[%s298 + $0x60] sm:$0xff] %v6206
      %6239 = vst [vmem:[%s298 + $0x68] sm:$0xff] %v6207
      %6240 = vst [vmem:[%s298 + $0x70] sm:$0xff] %v6208
      %6241 = vst [vmem:[%s298 + $0x78] sm:$0xff] %v6209
      %6242 = vst [vmem:[%s298 + $0x80] sm:$0xff] %v6210
      %6243 = vst [vmem:[%s298 + $0x88] sm:$0xff] %v6211
      %6244 = vst [vmem:[%s298 + $0x90] sm:$0xff] %v6212
      %6245 = vst [vmem:[%s298 + $0x98] sm:$0xff] %v6213
      %6246 = vst [vmem:[%s298 + $0xa0] sm:$0xff] %v6214
      %6247 = vst [vmem:[%s298 + $0xa8] sm:$0xff] %v6215
      %6248 = vst [vmem:[%s298 + $0xb0] sm:$0xff] %v6216
      %6249 = vst [vmem:[%s298 + $0xb8] sm:$0xff] %v6217
      %6250 = vst [vmem:[%s298 + $0xc0] sm:$0xff] %v6218
      %6251 = vst [vmem:[%s298 + $0xc8] sm:$0xff] %v6219
      %6252 = vst [vmem:[%s298 + $0xd0] sm:$0xff] %v6220
      %6253 = vst [vmem:[%s298 + $0xd8] sm:$0xff] %v6221
      %6254 = vst [vmem:[%s298 + $0xe0] sm:$0xff] %v6222
      %6255 = vst [vmem:[%s298 + $0xe8] sm:$0xff] %v6223
      %6256 = vst [vmem:[%s298 + $0xf0] sm:$0xff] %v6224
      %6257 = vst [vmem:[%s298 + $0xf8] sm:$0xff] %v6225
      %p6258 = scmp.lt.s32.totalorder %s18, 1
      %s6259 = scalar_select %p6258, %s18, 1
      %s6260 = smul.addr %s6259, 32
      %s6261 = smul.addr %s6260, 8
      %s6262 = scalar_lea.vmem %s7, %s6261
      // Predicated region
      $region49: #{decoder_block_forward.1} parent=47 // pred_check
        %p6263 = pneg %p193
      $region50: #{decoder_block_forward.1} parent=47 // pred_check_branch
        %6265 = sbr.rel (%p6263) target = $region52
      $region51: #{decoder_block_forward.1} parent=47 // pred_region
        _
      $region52: #{decoder_block_forward.1} parent=47 // pred_fallthru
        _
    $region48: #{decoder_block_forward.1} parent=5 // pred_fallthru
      _
    %p6266 = scmp.le.s32.totalorder 2, %s13
    // Predicated region
    $region53: #{decoder_block_forward.1} parent=5 // pred_check
      %p6267 = pneg %p6266
    $region54: #{decoder_block_forward.1} parent=5 // pred_check_branch
      %6269 = sbr.rel (%p6267) target = $region56
    $region55: #{decoder_block_forward.1} parent=5 // pred_region
      %s6270 = ssub.s32 %s13, 2
      // Predicated region
      $region57: #{decoder_block_forward.1} parent=55 // pred_check
        %p6271 = pneg %p199
      $region58: #{decoder_block_forward.1} parent=55 // pred_check_branch
        %6273 = sbr.rel (%p6271) target = $region60
      $region59: #{decoder_block_forward.1} parent=55 // pred_region
        %p6274 = scmp.lt.s32.totalorder %s19, 1
        %s6275 = scalar_select %p6274, %s19, 1
        %s6276 = smul.addr %s6275, 32
        %s6277 = smul.addr %s6276, 8
        %s6278 = scalar_lea.vmem %s7, %s6277
      $region60: #{decoder_block_forward.1} parent=55 // pred_fallthru
        _
    $region56: #{decoder_block_forward.1} parent=5 // pred_fallthru
      _
  $region6: #{decoder_block_forward.1} parent=0 // loop_footer
    %s17 = sadd.s32 1, %s13
  $region7: #{decoder_block_forward.1} parent=0 // loop_footer_branch
    %12 = sbr.rel target = $region3
  $region8: #{decoder_block_forward.1} parent=0 // loop_exit
    _

</llo_original>
